<compile_context>
chip_gen: v6e
topology: v6e:2x2x1
jax: 0.10.0
libtpu: 0.0.40
codegen_flags: <defaults>
</compile_context>

<pallas_src>
import functools

import jax
import jax.numpy as jnp
from jax.experimental import pallas as pl
from jax.experimental.pallas import tpu as pltpu


# --------------------------------------------------------------------------- #
# Row-tiled linear: y = x @ W + b  (hoisted GRU input projections)
# --------------------------------------------------------------------------- #
def matmul_bias_kernel(x_ref, w_ref, b_ref, o_ref):
    o_ref[...] = (jnp.dot(x_ref[...], w_ref[...],
                          preferred_element_type=jnp.float32) + b_ref[...])


def _linear_rows(x, w, b, row_tile):
    rows, k = x.shape
    n = w.shape[1]
    return pl.pallas_call(
        matmul_bias_kernel,
        out_shape=jax.ShapeDtypeStruct((rows, n), jnp.float32),
        grid=(rows // row_tile,),
        in_specs=[
            pl.BlockSpec((row_tile, k), lambda i: (i, 0)),
            pl.BlockSpec((k, n), lambda i: (0, 0)),
            pl.BlockSpec((1, n), lambda i: (0, 0)),
        ],
        out_specs=pl.BlockSpec((row_tile, n), lambda i: (i, 0)),
        compiler_params=pltpu.CompilerParams(dimension_semantics=("parallel",)),
    )(x, w, b)


# --------------------------------------------------------------------------- #
# Encoder GRU (PytorchSeq2VecWrapper semantics) + fused VAE head.
# Grid over time-chunks; hidden state carried in VMEM scratch; at the last
# chunk compute mu/logvar (one (H,2Z) matmul), reparameterize, z2h and KL.
# --------------------------------------------------------------------------- #
def gru_encoder_vae_kernel(xproj_ref, mask_ref, wh_ref, bh_ref,
                           w_head_ref, b_head_ref, eps_ref, w_z2h_ref, b_z2h_ref,
                           h0_ref, kl_ref, h_scr):
    i = pl.program_id(0)

    @pl.when(i == 0)
    def _():
        h_scr[...] = jnp.zeros_like(h_scr)

    t_chunk, bsz, three_h = xproj_ref.shape
    h_dim = three_h // 3
    wh = wh_ref[...]                                        # (H, 3H) bf16, hoisted
    bh = jnp.broadcast_to(bh_ref[...], (bsz, three_h))      # hoisted broadcast

    h = h_scr[...]
    for t in range(t_chunk):                                # unrolled chunk body
        xp = xproj_ref[t]                                   # (B, 3H) = x@Wi + bi
        m = mask_ref[t]                                     # (B, 1)
        hp = jnp.dot(h.astype(jnp.bfloat16), wh,
                     preferred_element_type=jnp.float32) + bh
        r = jax.nn.sigmoid(xp[:, :h_dim] + hp[:, :h_dim])
        z = jax.nn.sigmoid(xp[:, h_dim:2 * h_dim] + hp[:, h_dim:2 * h_dim])
        n = jnp.tanh(xp[:, 2 * h_dim:] + r * hp[:, 2 * h_dim:])
        h_new = (1.0 - z) * n + z * h
        # packed-sequence semantics: hidden frozen past each row's length
        h = jnp.where(m > 0.0, h_new, h)
    h_scr[...] = h

    # ---- VAE head fused on the last chunk (h_enc already resident in VMEM) ----
    @pl.when(i == pl.num_programs(0) - 1)
    def _():
        h_enc = h_scr[...]
        z_dim = eps_ref.shape[1]
        head = (jnp.dot(h_enc, w_head_ref[...],
                        preferred_element_type=jnp.float32) + b_head_ref[...])
        mu = head[:, :z_dim]
        logvar = head[:, z_dim:]
        z_s = mu + jnp.exp(0.5 * logvar) * eps_ref[...]     # reparameterization
        h0_ref[...] = (jnp.dot(z_s, w_z2h_ref[...],
                               preferred_element_type=jnp.float32) + b_z2h_ref[...])
        kl = 0.5 * jnp.sum(jnp.exp(logvar) + mu * mu - 1.0 - logvar,
                           axis=1, keepdims=True)           # (B, 1)
        kl_ref[0, 0] = jnp.mean(kl)


# --------------------------------------------------------------------------- #
# Decoder GRU (PytorchSeq2SeqWrapper semantics): init hidden h0, per-step
# outputs, zero-padded past each row's length. Grid over time-chunks.
# --------------------------------------------------------------------------- #
def gru_decoder_kernel(xproj_ref, mask_ref, h0_ref, wh_ref, bh_ref,
                       out_ref, h_scr):
    i = pl.program_id(0)

    @pl.when(i == 0)
    def _():
        h_scr[...] = h0_ref[...]

    t_chunk, bsz, three_h = xproj_ref.shape
    h_dim = three_h // 3
    wh = wh_ref[...]
    bh = jnp.broadcast_to(bh_ref[...], (bsz, three_h))

    h = h_scr[...]
    for t in range(t_chunk):
        xp = xproj_ref[t]
        m = mask_ref[t]
        hp = jnp.dot(h.astype(jnp.bfloat16), wh,
                     preferred_element_type=jnp.float32) + bh
        r = jax.nn.sigmoid(xp[:, :h_dim] + hp[:, :h_dim])
        z = jax.nn.sigmoid(xp[:, h_dim:2 * h_dim] + hp[:, h_dim:2 * h_dim])
        n = jnp.tanh(xp[:, 2 * h_dim:] + r * hp[:, 2 * h_dim:])
        h_new = (1.0 - z) * n + z * h
        h = jnp.where(m > 0.0, h_new, h)
        # Seq2SeqWrapper zero-pads restored output beyond sequence length
        out_ref[t] = h * m
    h_scr[...] = h


# --------------------------------------------------------------------------- #
# word_classifier + sequence_cross_entropy_with_logits (batch_average=False)
# * mask.sum(1), summed over (t, b); row-tiled grid, int targets, SMEM accum.
# Note: allennlp's per_batch_sum/(mask_sum+1e-13)*mask_sum == per_batch_sum.
# --------------------------------------------------------------------------- #
def classifier_ce_kernel(h_ref, tgt_ref, mask_ref, w_ref, b_ref, nll_ref):
    i = pl.program_id(0)

    @pl.when(i == 0)
    def _():
        nll_ref[0, 0] = 0.0

    logits = (jnp.dot(h_ref[...].astype(jnp.bfloat16), w_ref[...],
                      preferred_element_type=jnp.float32) + b_ref[...])   # (R, V)
    rows, vocab = logits.shape
    max_l = jnp.max(logits, axis=-1, keepdims=True)
    lse = jnp.log(jnp.sum(jnp.exp(logits - max_l), axis=-1, keepdims=True)) + max_l
    col = jax.lax.broadcasted_iota(jnp.int32, (rows, vocab), 1)
    tgt_logit = jnp.sum(jnp.where(col == tgt_ref[...], logits, 0.0),
                        axis=-1, keepdims=True)                            # (R, 1)
    nll = lse - tgt_logit                                                  # (R, 1)
    nll_ref[0, 0] += jnp.sum(nll * mask_ref[...])


# --------------------------------------------------------------------------- #
# Parameters (deterministic synthetic init, fused-gate layout; gate order r,z,n)
# --------------------------------------------------------------------------- #
def make_params(key, vocab, emb_dim, h_enc, z_dim, h_dec):
    ks = jax.random.split(key, 16)
    s = 0.1
    bf = jnp.bfloat16

    def n(k, shape, dtype=jnp.float32):
        return (jax.random.normal(k, shape, jnp.float32) * s).astype(dtype)

    return dict(
        emb=n(ks[0], (vocab, emb_dim), bf),
        # encoder GRU: Wi (E, 3H), Wh (H, 3H), biases (1, 3H)
        enc_wi=n(ks[1], (emb_dim, 3 * h_enc), bf),
        enc_wh=n(ks[2], (h_enc, 3 * h_enc), bf),
        enc_bi=n(ks[3], (1, 3 * h_enc)),
        enc_bh=n(ks[4], (1, 3 * h_enc)),
        # VAE head: [h2mu | h2var] fused as one (H_enc, 2*Z) matmul
        w_head=n(ks[5], (h_enc, 2 * z_dim)),
        b_head=n(ks[6], (1, 2 * z_dim)),
        w_z2h=n(ks[7], (z_dim, h_dec)),
        b_z2h=n(ks[8], (1, h_dec)),
        # decoder GRU
        dec_wi=n(ks[9], (emb_dim, 3 * h_dec), bf),
        dec_wh=n(ks[10], (h_dec, 3 * h_dec), bf),
        dec_bi=n(ks[11], (1, 3 * h_dec)),
        dec_bh=n(ks[12], (1, 3 * h_dec)),
        # classifier
        w_cls=n(ks[13], (h_dec, vocab), bf),
        b_cls=jnp.zeros((1, vocab), jnp.float32),
    )


# --------------------------------------------------------------------------- #
# Forward wrapper (glue: embedding gather, transposes/reshapes, eps sampling)
# --------------------------------------------------------------------------- #
def rnnvae_forward(params, x, x_dropout, mask, eps,
                   *, t_chunk=4, proj_row_tile=64, ce_row_tile=32):
    B, T = x.shape
    E = params["emb"].shape[1]
    H_enc = params["enc_wh"].shape[0]
    H_dec = params["dec_wh"].shape[0]
    Z = eps.shape[1]
    V = params["w_cls"].shape[1]

    t_chunk = min(t_chunk, T)
    rows = T * B
    proj_row_tile = min(proj_row_tile, rows)
    ce_row_tile = min(ce_row_tile, rows)
    assert T % t_chunk == 0 and rows % proj_row_tile == 0 and rows % ce_row_tile == 0

    mask_f = mask.astype(jnp.float32)
    mask_tm = jnp.transpose(mask_f, (1, 0))[:, :, None]                   # (T, B, 1)

    # embedding gather + time-major flatten (layout plumbing stays in XLA)
    x_emb = jnp.transpose(jnp.take(params["emb"], x, axis=0), (1, 0, 2)).reshape(rows, E)
    xd_emb = jnp.transpose(jnp.take(params["emb"], x_dropout, axis=0), (1, 0, 2)).reshape(rows, E)

    # hoisted GRU input projections: one big row-tiled matmul each (x @ Wi + bi)
    xproj_enc = _linear_rows(x_emb, params["enc_wi"], params["enc_bi"],
                             proj_row_tile).reshape(T, B, 3 * H_enc)
    xproj_dec = _linear_rows(xd_emb, params["dec_wi"], params["dec_bi"],
                             proj_row_tile).reshape(T, B, 3 * H_dec)

    # ---- q(x): encoder GRU over time-chunks + fused VAE head (h0, KL) ----
    h0, kl = pl.pallas_call(
        gru_encoder_vae_kernel,
        out_shape=(jax.ShapeDtypeStruct((B, H_dec), jnp.float32),
                   jax.ShapeDtypeStruct((1, 1), jnp.float32)),
        grid=(T // t_chunk,),
        in_specs=[
            pl.BlockSpec((t_chunk, B, 3 * H_enc), lambda i: (i, 0, 0)),
            pl.BlockSpec((t_chunk, B, 1), lambda i: (i, 0, 0)),
            pl.BlockSpec((H_enc, 3 * H_enc), lambda i: (0, 0)),
            pl.BlockSpec((1, 3 * H_enc), lambda i: (0, 0)),
            pl.BlockSpec((H_enc, 2 * Z), lambda i: (0, 0)),
            pl.BlockSpec((1, 2 * Z), lambda i: (0, 0)),
            pl.BlockSpec((B, Z), lambda i: (0, 0)),
            pl.BlockSpec((Z, H_dec), lambda i: (0, 0)),
            pl.BlockSpec((1, H_dec), lambda i: (0, 0)),
        ],
        out_specs=(
            pl.BlockSpec((B, H_dec), lambda i: (0, 0)),
            pl.BlockSpec((1, 1), lambda i: (0, 0), memory_space=pltpu.MemorySpace.SMEM),
        ),
        scratch_shapes=[pltpu.VMEM((B, H_enc), jnp.float32)],
        compiler_params=pltpu.CompilerParams(dimension_semantics=("arbitrary",)),
    )(xproj_enc, mask_tm, params["enc_wh"], params["enc_bh"],
      params["w_head"], params["b_head"], eps, params["w_z2h"], params["b_z2h"])

    # ---- p(.): decoder GRU over x_dropout projections ----
    dec_h = pl.pallas_call(
        gru_decoder_kernel,
        out_shape=jax.ShapeDtypeStruct((T, B, H_dec), jnp.float32),
        grid=(T // t_chunk,),
        in_specs=[
            pl.BlockSpec((t_chunk, B, 3 * H_dec), lambda i: (i, 0, 0)),
            pl.BlockSpec((t_chunk, B, 1), lambda i: (i, 0, 0)),
            pl.BlockSpec((B, H_dec), lambda i: (0, 0)),
            pl.BlockSpec((H_dec, 3 * H_dec), lambda i: (0, 0)),
            pl.BlockSpec((1, 3 * H_dec), lambda i: (0, 0)),
        ],
        out_specs=pl.BlockSpec((t_chunk, B, H_dec), lambda i: (i, 0, 0)),
        scratch_shapes=[pltpu.VMEM((B, H_dec), jnp.float32)],
        compiler_params=pltpu.CompilerParams(dimension_semantics=("arbitrary",)),
    )(xproj_dec, mask_tm, h0, params["dec_wh"], params["dec_bh"])

    # ---- classifier + masked cross entropy (row-tiled, int targets) ----
    dec_h_flat = dec_h.reshape(rows, H_dec)
    tgt_flat = jnp.transpose(x, (1, 0)).reshape(rows, 1).astype(jnp.int32)
    mask_flat = jnp.transpose(mask_f, (1, 0)).reshape(rows, 1)

    nll_sum = pl.pallas_call(
        classifier_ce_kernel,
        out_shape=jax.ShapeDtypeStruct((1, 1), jnp.float32),
        grid=(rows // ce_row_tile,),
        in_specs=[
            pl.BlockSpec((ce_row_tile, H_dec), lambda i: (i, 0)),
            pl.BlockSpec((ce_row_tile, 1), lambda i: (i, 0)),
            pl.BlockSpec((ce_row_tile, 1), lambda i: (i, 0)),
            pl.BlockSpec((H_dec, V), lambda i: (0, 0)),
            pl.BlockSpec((1, V), lambda i: (0, 0)),
        ],
        out_specs=pl.BlockSpec((1, 1), lambda i: (0, 0),
                               memory_space=pltpu.MemorySpace.SMEM),
        compiler_params=pltpu.CompilerParams(dimension_semantics=("arbitrary",)),
    )(dec_h_flat, tgt_flat, mask_flat, params["w_cls"], params["b_cls"])

    recon_loss = nll_sum[0, 0] / B     # mean over batch of sum_t(nll * mask)
    kl_loss = kl[0, 0]
    return recon_loss, kl_loss


if __name__ == "__main__":
    # hardware-aligned small shapes: B mult of 8, hidden/gate/vocab mult of 128
    B, T = 8, 8
    vocab_size = 256
    emb_dim = 128          # == encoder_input_size
    h_enc = 128            # encoder_hidden_size (num_layers = 1)
    z_dim = 64
    h_dec = 128            # decoder_hidden_size (num_layers = 1)

    key = jax.random.PRNGKey(0)
    kp, kx, kxd, keps = jax.random.split(key, 4)
    params = make_params(kp, vocab_size, emb_dim, h_enc, z_dim, h_dec)

    x = jax.random.randint(kx, (B, T), 0, vocab_size, dtype=jnp.int32)
    x_dropout = jax.random.randint(kxd, (B, T), 0, vocab_size, dtype=jnp.int32)
    lengths = jnp.array([8, 5, 7, 3, 8, 6, 4, 8], jnp.int32)
    mask = (jnp.arange(T)[None, :] < lengths[:, None]).astype(jnp.float32)
    eps = jax.random.normal(keps, (B, z_dim), jnp.float32)   # reparameterization noise

    fwd = jax.jit(functools.partial(rnnvae_forward, params))
    recon_loss, kl_loss = fwd(x, x_dropout, mask, eps)
    jax.block_until_ready((recon_loss, kl_loss))
    print("KERNEL_OK")
</pallas_src>

<mosaic_0001>
module attributes {stable_mosaic.version = 11 : i64} {
  func.func @matmul_bias_kernel(%arg0: i32, %arg1: memref<64x128xbf16, #tpu.memory_space<vmem>>, %arg2: memref<128x384xbf16, #tpu.memory_space<vmem>>, %arg3: memref<1x384xf32, #tpu.memory_space<vmem>>, %arg4: memref<64x384xf32, #tpu.memory_space<vmem>>) attributes {dimension_semantics = [#tpu.dimension_semantics<parallel>], iteration_bounds = array<i64: 1>, scalar_prefetch = 0 : i64, scratch_operands = 0 : i64, tpu.core_type = #tpu.core_type<tc>, window_params = [{transform_indices = @transform_0, window_bounds = array<i64: 64, 128>}, {pipeline_mode = #tpu.pipeline_mode<synchronous>, transform_indices = @transform_1, window_bounds = array<i64: 128, 384>}, {pipeline_mode = #tpu.pipeline_mode<synchronous>, transform_indices = @transform_2, window_bounds = array<i64: 1, 384>}, {transform_indices = @transform_3, window_bounds = array<i64: 64, 384>}]} {
    %c0 = arith.constant 0 : index
    %c0_0 = arith.constant 0 : index
    %0 = vector.load %arg1[%c0, %c0_0] : memref<64x128xbf16, #tpu.memory_space<vmem>>, vector<64x128xbf16>
    %c0_1 = arith.constant 0 : index
    %c0_2 = arith.constant 0 : index
    %1 = vector.load %arg2[%c0_1, %c0_2] : memref<128x384xbf16, #tpu.memory_space<vmem>>, vector<128x384xbf16>
    %cst = arith.constant dense<0.000000e+00> : vector<64x384xf32>
    %2 = tpu.matmul %0, %1, %cst {dimension_numbers = #tpu.dot_dimension_numbers<[1], [0], [0], [1], [0, 0, 1, 1], [], []>} : vector<64x128xbf16>, vector<128x384xbf16>, vector<64x384xf32> -> vector<64x384xf32>
    %c0_3 = arith.constant 0 : index
    %c0_4 = arith.constant 0 : index
    %3 = vector.load %arg3[%c0_3, %c0_4] : memref<1x384xf32, #tpu.memory_space<vmem>>, vector<1x384xf32>
    %4 = vector.broadcast %3 : vector<1x384xf32> to vector<64x384xf32>
    %5 = arith.addf %2, %4 : vector<64x384xf32>
    %c0_5 = arith.constant 0 : index
    %c0_6 = arith.constant 0 : index
    %6 = vector.load %arg4[%c0_5, %c0_6] : memref<64x384xf32, #tpu.memory_space<vmem>>, vector<64x384xf32>
    tpu.vector_store %arg4[%c0_5, %c0_6], %5 {strides = array<i32>} : memref<64x384xf32, #tpu.memory_space<vmem>>, vector<64x384xf32>,
    return
  }
  func.func @transform_0(%arg0: i32) -> (i32, i32) {
    %c0_i32 = arith.constant 0 : i32
    %c0_i32_0 = arith.constant 0 : i32
    return %arg0, %c0_i32 : i32, i32
  }
  func.func @transform_1(%arg0: i32) -> (i32, i32) {
    %c0_i32 = arith.constant 0 : i32
    %c0_i32_0 = arith.constant 0 : i32
    %c0_i32_1 = arith.constant 0 : i32
    return %c0_i32, %c0_i32_0 : i32, i32
  }
  func.func @transform_2(%arg0: i32) -> (i32, i32) {
    %c0_i32 = arith.constant 0 : i32
    %c0_i32_0 = arith.constant 0 : i32
    %c0_i32_1 = arith.constant 0 : i32
    return %c0_i32, %c0_i32_0 : i32, i32
  }
  func.func @transform_3(%arg0: i32) -> (i32, i32) {
    %c0_i32 = arith.constant 0 : i32
    %c0_i32_0 = arith.constant 0 : i32
    return %arg0, %c0_i32 : i32, i32
  }
}

module attributes {stable_mosaic.version = 11 : i64} {
  func.func @gru_decoder_kernel(%arg0: i32, %arg1: memref<4x8x384xf32, #tpu.memory_space<vmem>>, %arg2: memref<4x8x1xf32, #tpu.memory_space<vmem>>, %arg3: memref<8x128xf32, #tpu.memory_space<vmem>>, %arg4: memref<128x384xbf16, #tpu.memory_space<vmem>>, %arg5: memref<1x384xf32, #tpu.memory_space<vmem>>, %arg6: memref<4x8x128xf32, #tpu.memory_space<vmem>>, %arg7: memref<8x128xf32, #tpu.memory_space<vmem>>) attributes {dimension_semantics = [#tpu.dimension_semantics<arbitrary>], iteration_bounds = array<i64: 2>, scalar_prefetch = 0 : i64, scratch_operands = 1 : i64, tpu.core_type = #tpu.core_type<tc>, window_params = [{transform_indices = @transform_0, window_bounds = array<i64: 4, 8, 384>}, {transform_indices = @transform_1, window_bounds = array<i64: 4, 8, 1>}, {pipeline_mode = #tpu.pipeline_mode<synchronous>, transform_indices = @transform_2, window_bounds = array<i64: 8, 128>}, {pipeline_mode = #tpu.pipeline_mode<synchronous>, transform_indices = @transform_3, window_bounds = array<i64: 128, 384>}, {pipeline_mode = #tpu.pipeline_mode<synchronous>, transform_indices = @transform_4, window_bounds = array<i64: 1, 384>}, {transform_indices = @transform_5, window_bounds = array<i64: 4, 8, 128>}]} {
    %c0_i32 = arith.constant 0 : i32
    %0 = arith.cmpi eq, %arg0, %c0_i32 : i32
    %1 = arith.extui %0 : i1 to i32
    %c0_i32_0 = arith.constant 0 : i32
    %2 = arith.cmpi ne, %1, %c0_i32_0 : i32
    scf.if %2 {
      %c0_60 = arith.constant 0 : index
      %c0_61 = arith.constant 0 : index
      %181 = vector.load %arg3[%c0_60, %c0_61] : memref<8x128xf32, #tpu.memory_space<vmem>>, vector<8x128xf32>
      %c0_62 = arith.constant 0 : index
      %c0_63 = arith.constant 0 : index
      %182 = vector.load %arg7[%c0_62, %c0_63] : memref<8x128xf32, #tpu.memory_space<vmem>>, vector<8x128xf32>
      tpu.vector_store %arg7[%c0_62, %c0_63], %181 {strides = array<i32>} : memref<8x128xf32, #tpu.memory_space<vmem>>, vector<8x128xf32>,
    } else {
    }
    %c0 = arith.constant 0 : index
    %c0_1 = arith.constant 0 : index
    %3 = vector.load %arg4[%c0, %c0_1] : memref<128x384xbf16, #tpu.memory_space<vmem>>, vector<128x384xbf16>
    %c0_2 = arith.constant 0 : index
    %c0_3 = arith.constant 0 : index
    %4 = vector.load %arg5[%c0_2, %c0_3] : memref<1x384xf32, #tpu.memory_space<vmem>>, vector<1x384xf32>
    %5 = vector.shape_cast %4 : vector<1x384xf32> to vector<1x384xf32>
    %6 = vector.broadcast %5 : vector<1x384xf32> to vector<8x384xf32>
    %c0_4 = arith.constant 0 : index
    %c0_5 = arith.constant 0 : index
    %7 = vector.load %arg7[%c0_4, %c0_5] : memref<8x128xf32, #tpu.memory_space<vmem>>, vector<8x128xf32>
    %c0_6 = arith.constant 0 : index
    %c0_7 = arith.constant 0 : index
    %c0_8 = arith.constant 0 : index
    %8 = vector.load %arg1[%c0_6, %c0_7, %c0_8] : memref<4x8x384xf32, #tpu.memory_space<vmem>>, vector<1x8x384xf32>
    %9 = vector.shape_cast %8 : vector<1x8x384xf32> to vector<8x384xf32>
    %c0_9 = arith.constant 0 : index
    %c0_10 = arith.constant 0 : index
    %c0_11 = arith.constant 0 : index
    %10 = vector.load %arg2[%c0_9, %c0_10, %c0_11] : memref<4x8x1xf32, #tpu.memory_space<vmem>>, vector<1x8x1xf32>
    %11 = vector.shape_cast %10 : vector<1x8x1xf32> to vector<8x1xf32>
    %12 = arith.truncf %7 : vector<8x128xf32> to vector<8x128xbf16>
    %cst = arith.constant dense<0.000000e+00> : vector<8x384xf32>
    %13 = tpu.matmul %12, %3, %cst {dimension_numbers = #tpu.dot_dimension_numbers<[1], [0], [0], [1], [0, 0, 1, 1], [], []>} : vector<8x128xbf16>, vector<128x384xbf16>, vector<8x384xf32> -> vector<8x384xf32>
    %14 = arith.addf %13, %6 : vector<8x384xf32>
    %15 = vector.extract_strided_slice %9 {offsets = [0, 0], sizes = [8, 128], strides = [1, 1]} : vector<8x384xf32> to vector<8x128xf32>
    %16 = vector.extract_strided_slice %14 {offsets = [0, 0], sizes = [8, 128], strides = [1, 1]} : vector<8x384xf32> to vector<8x128xf32>
    %17 = arith.addf %15, %16 : vector<8x128xf32>
    %18 = arith.negf %17 : vector<8x128xf32>
    %19 = math.exp %18 : vector<8x128xf32>
    %cst_12 = arith.constant 1.000000e+00 : f32
    %20 = vector.broadcast %cst_12 : f32 to vector<8x128xf32>
    %21 = arith.addf %20, %19 : vector<8x128xf32>
    %22 = arith.divf %20, %21 : vector<8x128xf32>
    %23 = vector.extract_strided_slice %9 {offsets = [0, 128], sizes = [8, 128], strides = [1, 1]} : vector<8x384xf32> to vector<8x128xf32>
    %24 = vector.extract_strided_slice %14 {offsets = [0, 128], sizes = [8, 128], strides = [1, 1]} : vector<8x384xf32> to vector<8x128xf32>
    %25 = arith.addf %23, %24 : vector<8x128xf32>
    %26 = arith.negf %25 : vector<8x128xf32>
    %27 = math.exp %26 : vector<8x128xf32>
    %cst_13 = arith.constant 1.000000e+00 : f32
    %28 = vector.broadcast %cst_13 : f32 to vector<8x128xf32>
    %29 = arith.addf %28, %27 : vector<8x128xf32>
    %30 = arith.divf %28, %29 : vector<8x128xf32>
    %31 = vector.extract_strided_slice %9 {offsets = [0, 256], sizes = [8, 128], strides = [1, 1]} : vector<8x384xf32> to vector<8x128xf32>
    %32 = vector.extract_strided_slice %14 {offsets = [0, 256], sizes = [8, 128], strides = [1, 1]} : vector<8x384xf32> to vector<8x128xf32>
    %33 = arith.mulf %22, %32 : vector<8x128xf32>
    %34 = arith.addf %31, %33 : vector<8x128xf32>
    %35 = math.tanh %34 : vector<8x128xf32>
    %cst_14 = arith.constant 1.000000e+00 : f32
    %36 = vector.broadcast %cst_14 : f32 to vector<8x128xf32>
    %37 = arith.subf %36, %30 : vector<8x128xf32>
    %38 = arith.mulf %37, %35 : vector<8x128xf32>
    %39 = arith.mulf %30, %7 : vector<8x128xf32>
    %40 = arith.addf %38, %39 : vector<8x128xf32>
    %cst_15 = arith.constant 0.000000e+00 : f32
    %41 = vector.broadcast %cst_15 : f32 to vector<8x1xf32>
    %42 = arith.cmpf ogt, %11, %41 : vector<8x1xf32>
    %43 = vector.shape_cast %42 : vector<8x1xi1> to vector<8x1xi1>
    %44 = vector.broadcast %43 : vector<8x1xi1> to vector<8x128xi1>
    %45 = arith.select %44, %40, %7 : vector<8x128xi1>, vector<8x128xf32>
    %46 = vector.broadcast %11 : vector<8x1xf32> to vector<8x128xf32>
    %47 = arith.mulf %45, %46 : vector<8x128xf32>
    %c0_16 = arith.constant 0 : index
    %c0_17 = arith.constant 0 : index
    %c0_18 = arith.constant 0 : index
    %48 = vector.load %arg6[%c0_16, %c0_17, %c0_18] : memref<4x8x128xf32, #tpu.memory_space<vmem>>, vector<1x8x128xf32>
    %49 = vector.shape_cast %48 : vector<1x8x128xf32> to vector<8x128xf32>
    %50 = vector.shape_cast %47 : vector<8x128xf32> to vector<1x8x128xf32>
    tpu.vector_store %arg6[%c0_16, %c0_17, %c0_18], %50 {strides = array<i32>} : memref<4x8x128xf32, #tpu.memory_space<vmem>>, vector<1x8x128xf32>,
    %c1 = arith.constant 1 : index
    %c0_19 = arith.constant 0 : index
    %c0_20 = arith.constant 0 : index
    %51 = vector.load %arg1[%c1, %c0_19, %c0_20] : memref<4x8x384xf32, #tpu.memory_space<vmem>>, vector<1x8x384xf32>
    %52 = vector.shape_cast %51 : vector<1x8x384xf32> to vector<8x384xf32>
    %c1_21 = arith.constant 1 : index
    %c0_22 = arith.constant 0 : index
    %c0_23 = arith.constant 0 : index
    %53 = vector.load %arg2[%c1_21, %c0_22, %c0_23] : memref<4x8x1xf32, #tpu.memory_space<vmem>>, vector<1x8x1xf32>
    %54 = vector.shape_cast %53 : vector<1x8x1xf32> to vector<8x1xf32>
    %55 = arith.truncf %45 : vector<8x128xf32> to vector<8x128xbf16>
    %cst_24 = arith.constant dense<0.000000e+00> : vector<8x384xf32>
    %56 = tpu.matmul %55, %3, %cst_24 {dimension_numbers = #tpu.dot_dimension_numbers<[1], [0], [0], [1], [0, 0, 1, 1], [], []>} : vector<8x128xbf16>, vector<128x384xbf16>, vector<8x384xf32> -> vector<8x384xf32>
    %57 = arith.addf %56, %6 : vector<8x384xf32>
    %58 = vector.extract_strided_slice %52 {offsets = [0, 0], sizes = [8, 128], strides = [1, 1]} : vector<8x384xf32> to vector<8x128xf32>
    %59 = vector.extract_strided_slice %57 {offsets = [0, 0], sizes = [8, 128], strides = [1, 1]} : vector<8x384xf32> to vector<8x128xf32>
    %60 = arith.addf %58, %59 : vector<8x128xf32>
    %61 = arith.negf %60 : vector<8x128xf32>
    %62 = math.exp %61 : vector<8x128xf32>
    %cst_25 = arith.constant 1.000000e+00 : f32
    %63 = vector.broadcast %cst_25 : f32 to vector<8x128xf32>
    %64 = arith.addf %63, %62 : vector<8x128xf32>
    %65 = arith.divf %63, %64 : vector<8x128xf32>
    %66 = vector.extract_strided_slice %52 {offsets = [0, 128], sizes = [8, 128], strides = [1, 1]} : vector<8x384xf32> to vector<8x128xf32>
    %67 = vector.extract_strided_slice %57 {offsets = [0, 128], sizes = [8, 128], strides = [1, 1]} : vector<8x384xf32> to vector<8x128xf32>
    %68 = arith.addf %66, %67 : vector<8x128xf32>
    %69 = arith.negf %68 : vector<8x128xf32>
    %70 = math.exp %69 : vector<8x128xf32>
    %cst_26 = arith.constant 1.000000e+00 : f32
    %71 = vector.broadcast %cst_26 : f32 to vector<8x128xf32>
    %72 = arith.addf %71, %70 : vector<8x128xf32>
    %73 = arith.divf %71, %72 : vector<8x128xf32>
    %74 = vector.extract_strided_slice %52 {offsets = [0, 256], sizes = [8, 128], strides = [1, 1]} : vector<8x384xf32> to vector<8x128xf32>
    %75 = vector.extract_strided_slice %57 {offsets = [0, 256], sizes = [8, 128], strides = [1, 1]} : vector<8x384xf32> to vector<8x128xf32>
    %76 = arith.mulf %65, %75 : vector<8x128xf32>
    %77 = arith.addf %74, %76 : vector<8x128xf32>
    %78 = math.tanh %77 : vector<8x128xf32>
    %cst_27 = arith.constant 1.000000e+00 : f32
    %79 = vector.broadcast %cst_27 : f32 to vector<8x128xf32>
    %80 = arith.subf %79, %73 : vector<8x128xf32>
    %81 = arith.mulf %80, %78 : vector<8x128xf32>
    %82 = arith.mulf %73, %45 : vector<8x128xf32>
    %83 = arith.addf %81, %82 : vector<8x128xf32>
    %cst_28 = arith.constant 0.000000e+00 : f32
    %84 = vector.broadcast %cst_28 : f32 to vector<8x1xf32>
    %85 = arith.cmpf ogt, %54, %84 : vector<8x1xf32>
    %86 = vector.shape_cast %85 : vector<8x1xi1> to vector<8x1xi1>
    %87 = vector.broadcast %86 : vector<8x1xi1> to vector<8x128xi1>
    %88 = arith.select %87, %83, %45 : vector<8x128xi1>, vector<8x128xf32>
    %89 = vector.broadcast %54 : vector<8x1xf32> to vector<8x128xf32>
    %90 = arith.mulf %88, %89 : vector<8x128xf32>
    %c1_29 = arith.constant 1 : index
    %c0_30 = arith.constant 0 : index
    %c0_31 = arith.constant 0 : index
    %91 = vector.load %arg6[%c1_29, %c0_30, %c0_31] : memref<4x8x128xf32, #tpu.memory_space<vmem>>, vector<1x8x128xf32>
    %92 = vector.shape_cast %91 : vector<1x8x128xf32> to vector<8x128xf32>
    %93 = vector.shape_cast %90 : vector<8x128xf32> to vector<1x8x128xf32>
    tpu.vector_store %arg6[%c1_29, %c0_30, %c0_31], %93 {strides = array<i32>} : memref<4x8x128xf32, #tpu.memory_space<vmem>>, vector<1x8x128xf32>,
    %c2 = arith.constant 2 : index
    %c0_32 = arith.constant 0 : index
    %c0_33 = arith.constant 0 : index
    %94 = vector.load %arg1[%c2, %c0_32, %c0_33] : memref<4x8x384xf32, #tpu.memory_space<vmem>>, vector<1x8x384xf32>
    %95 = vector.shape_cast %94 : vector<1x8x384xf32> to vector<8x384xf32>
    %c2_34 = arith.constant 2 : index
    %c0_35 = arith.constant 0 : index
    %c0_36 = arith.constant 0 : index
    %96 = vector.load %arg2[%c2_34, %c0_35, %c0_36] : memref<4x8x1xf32, #tpu.memory_space<vmem>>, vector<1x8x1xf32>
    %97 = vector.shape_cast %96 : vector<1x8x1xf32> to vector<8x1xf32>
    %98 = arith.truncf %88 : vector<8x128xf32> to vector<8x128xbf16>
    %cst_37 = arith.constant dense<0.000000e+00> : vector<8x384xf32>
    %99 = tpu.matmul %98, %3, %cst_37 {dimension_numbers = #tpu.dot_dimension_numbers<[1], [0], [0], [1], [0, 0, 1, 1], [], []>} : vector<8x128xbf16>, vector<128x384xbf16>, vector<8x384xf32> -> vector<8x384xf32>
    %100 = arith.addf %99, %6 : vector<8x384xf32>
    %101 = vector.extract_strided_slice %95 {offsets = [0, 0], sizes = [8, 128], strides = [1, 1]} : vector<8x384xf32> to vector<8x128xf32>
    %102 = vector.extract_strided_slice %100 {offsets = [0, 0], sizes = [8, 128], strides = [1, 1]} : vector<8x384xf32> to vector<8x128xf32>
    %103 = arith.addf %101, %102 : vector<8x128xf32>
    %104 = arith.negf %103 : vector<8x128xf32>
    %105 = math.exp %104 : vector<8x128xf32>
    %cst_38 = arith.constant 1.000000e+00 : f32
    %106 = vector.broadcast %cst_38 : f32 to vector<8x128xf32>
    %107 = arith.addf %106, %105 : vector<8x128xf32>
    %108 = arith.divf %106, %107 : vector<8x128xf32>
    %109 = vector.extract_strided_slice %95 {offsets = [0, 128], sizes = [8, 128], strides = [1, 1]} : vector<8x384xf32> to vector<8x128xf32>
    %110 = vector.extract_strided_slice %100 {offsets = [0, 128], sizes = [8, 128], strides = [1, 1]} : vector<8x384xf32> to vector<8x128xf32>
    %111 = arith.addf %109, %110 : vector<8x128xf32>
    %112 = arith.negf %111 : vector<8x128xf32>
    %113 = math.exp %112 : vector<8x128xf32>
    %cst_39 = arith.constant 1.000000e+00 : f32
    %114 = vector.broadcast %cst_39 : f32 to vector<8x128xf32>
    %115 = arith.addf %114, %113 : vector<8x128xf32>
    %116 = arith.divf %114, %115 : vector<8x128xf32>
    %117 = vector.extract_strided_slice %95 {offsets = [0, 256], sizes = [8, 128], strides = [1, 1]} : vector<8x384xf32> to vector<8x128xf32>
    %118 = vector.extract_strided_slice %100 {offsets = [0, 256], sizes = [8, 128], strides = [1, 1]} : vector<8x384xf32> to vector<8x128xf32>
    %119 = arith.mulf %108, %118 : vector<8x128xf32>
    %120 = arith.addf %117, %119 : vector<8x128xf32>
    %121 = math.tanh %120 : vector<8x128xf32>
    %cst_40 = arith.constant 1.000000e+00 : f32
    %122 = vector.broadcast %cst_40 : f32 to vector<8x128xf32>
    %123 = arith.subf %122, %116 : vector<8x128xf32>
    %124 = arith.mulf %123, %121 : vector<8x128xf32>
    %125 = arith.mulf %116, %88 : vector<8x128xf32>
    %126 = arith.addf %124, %125 : vector<8x128xf32>
    %cst_41 = arith.constant 0.000000e+00 : f32
    %127 = vector.broadcast %cst_41 : f32 to vector<8x1xf32>
    %128 = arith.cmpf ogt, %97, %127 : vector<8x1xf32>
    %129 = vector.shape_cast %128 : vector<8x1xi1> to vector<8x1xi1>
    %130 = vector.broadcast %129 : vector<8x1xi1> to vector<8x128xi1>
    %131 = arith.select %130, %126, %88 : vector<8x128xi1>, vector<8x128xf32>
    %132 = vector.broadcast %97 : vector<8x1xf32> to vector<8x128xf32>
    %133 = arith.mulf %131, %132 : vector<8x128xf32>
    %c2_42 = arith.constant 2 : index
    %c0_43 = arith.constant 0 : index
    %c0_44 = arith.constant 0 : index
    %134 = vector.load %arg6[%c2_42, %c0_43, %c0_44] : memref<4x8x128xf32, #tpu.memory_space<vmem>>, vector<1x8x128xf32>
    %135 = vector.shape_cast %134 : vector<1x8x128xf32> to vector<8x128xf32>
    %136 = vector.shape_cast %133 : vector<8x128xf32> to vector<1x8x128xf32>
    tpu.vector_store %arg6[%c2_42, %c0_43, %c0_44], %136 {strides = array<i32>} : memref<4x8x128xf32, #tpu.memory_space<vmem>>, vector<1x8x128xf32>,
    %c3 = arith.constant 3 : index
    %c0_45 = arith.constant 0 : index
    %c0_46 = arith.constant 0 : index
    %137 = vector.load %arg1[%c3, %c0_45, %c0_46] : memref<4x8x384xf32, #tpu.memory_space<vmem>>, vector<1x8x384xf32>
    %138 = vector.shape_cast %137 : vector<1x8x384xf32> to vector<8x384xf32>
    %c3_47 = arith.constant 3 : index
    %c0_48 = arith.constant 0 : index
    %c0_49 = arith.constant 0 : index
    %139 = vector.load %arg2[%c3_47, %c0_48, %c0_49] : memref<4x8x1xf32, #tpu.memory_space<vmem>>, vector<1x8x1xf32>
    %140 = vector.shape_cast %139 : vector<1x8x1xf32> to vector<8x1xf32>
    %141 = arith.truncf %131 : vector<8x128xf32> to vector<8x128xbf16>
    %cst_50 = arith.constant dense<0.000000e+00> : vector<8x384xf32>
    %142 = tpu.matmul %141, %3, %cst_50 {dimension_numbers = #tpu.dot_dimension_numbers<[1], [0], [0], [1], [0, 0, 1, 1], [], []>} : vector<8x128xbf16>, vector<128x384xbf16>, vector<8x384xf32> -> vector<8x384xf32>
    %143 = arith.addf %142, %6 : vector<8x384xf32>
    %144 = vector.extract_strided_slice %138 {offsets = [0, 0], sizes = [8, 128], strides = [1, 1]} : vector<8x384xf32> to vector<8x128xf32>
    %145 = vector.extract_strided_slice %143 {offsets = [0, 0], sizes = [8, 128], strides = [1, 1]} : vector<8x384xf32> to vector<8x128xf32>
    %146 = arith.addf %144, %145 : vector<8x128xf32>
    %147 = arith.negf %146 : vector<8x128xf32>
    %148 = math.exp %147 : vector<8x128xf32>
    %cst_51 = arith.constant 1.000000e+00 : f32
    %149 = vector.broadcast %cst_51 : f32 to vector<8x128xf32>
    %150 = arith.addf %149, %148 : vector<8x128xf32>
    %151 = arith.divf %149, %150 : vector<8x128xf32>
    %152 = vector.extract_strided_slice %138 {offsets = [0, 128], sizes = [8, 128], strides = [1, 1]} : vector<8x384xf32> to vector<8x128xf32>
    %153 = vector.extract_strided_slice %143 {offsets = [0, 128], sizes = [8, 128], strides = [1, 1]} : vector<8x384xf32> to vector<8x128xf32>
    %154 = arith.addf %152, %153 : vector<8x128xf32>
    %155 = arith.negf %154 : vector<8x128xf32>
    %156 = math.exp %155 : vector<8x128xf32>
    %cst_52 = arith.constant 1.000000e+00 : f32
    %157 = vector.broadcast %cst_52 : f32 to vector<8x128xf32>
    %158 = arith.addf %157, %156 : vector<8x128xf32>
    %159 = arith.divf %157, %158 : vector<8x128xf32>
    %160 = vector.extract_strided_slice %138 {offsets = [0, 256], sizes = [8, 128], strides = [1, 1]} : vector<8x384xf32> to vector<8x128xf32>
    %161 = vector.extract_strided_slice %143 {offsets = [0, 256], sizes = [8, 128], strides = [1, 1]} : vector<8x384xf32> to vector<8x128xf32>
    %162 = arith.mulf %151, %161 : vector<8x128xf32>
    %163 = arith.addf %160, %162 : vector<8x128xf32>
    %164 = math.tanh %163 : vector<8x128xf32>
    %cst_53 = arith.constant 1.000000e+00 : f32
    %165 = vector.broadcast %cst_53 : f32 to vector<8x128xf32>
    %166 = arith.subf %165, %159 : vector<8x128xf32>
    %167 = arith.mulf %166, %164 : vector<8x128xf32>
    %168 = arith.mulf %159, %131 : vector<8x128xf32>
    %169 = arith.addf %167, %168 : vector<8x128xf32>
    %cst_54 = arith.constant 0.000000e+00 : f32
    %170 = vector.broadcast %cst_54 : f32 to vector<8x1xf32>
    %171 = arith.cmpf ogt, %140, %170 : vector<8x1xf32>
    %172 = vector.shape_cast %171 : vector<8x1xi1> to vector<8x1xi1>
    %173 = vector.broadcast %172 : vector<8x1xi1> to vector<8x128xi1>
    %174 = arith.select %173, %169, %131 : vector<8x128xi1>, vector<8x128xf32>
    %175 = vector.broadcast %140 : vector<8x1xf32> to vector<8x128xf32>
    %176 = arith.mulf %174, %175 : vector<8x128xf32>
    %c3_55 = arith.constant 3 : index
    %c0_56 = arith.constant 0 : index
    %c0_57 = arith.constant 0 : index
    %177 = vector.load %arg6[%c3_55, %c0_56, %c0_57] : memref<4x8x128xf32, #tpu.memory_space<vmem>>, vector<1x8x128xf32>
    %178 = vector.shape_cast %177 : vector<1x8x128xf32> to vector<8x128xf32>
    %179 = vector.shape_cast %176 : vector<8x128xf32> to vector<1x8x128xf32>
    tpu.vector_store %arg6[%c3_55, %c0_56, %c0_57], %179 {strides = array<i32>} : memref<4x8x128xf32, #tpu.memory_space<vmem>>, vector<1x8x128xf32>,
    %c0_58 = arith.constant 0 : index
    %c0_59 = arith.constant 0 : index
    %180 = vector.load %arg7[%c0_58, %c0_59] : memref<8x128xf32, #tpu.memory_space<vmem>>, vector<8x128xf32>
    tpu.vector_store %arg7[%c0_58, %c0_59], %174 {strides = array<i32>} : memref<8x128xf32, #tpu.memory_space<vmem>>, vector<8x128xf32>,
    return
  }
  func.func @transform_0(%arg0: i32) -> (i32, i32, i32) {
    %c0_i32 = arith.constant 0 : i32
    %c0_i32_0 = arith.constant 0 : i32
    %c0_i32_1 = arith.constant 0 : i32
    return %arg0, %c0_i32, %c0_i32_0 : i32, i32, i32
  }
  func.func @transform_1(%arg0: i32) -> (i32, i32, i32) {
    %c0_i32 = arith.constant 0 : i32
    %c0_i32_0 = arith.constant 0 : i32
    %c0_i32_1 = arith.constant 0 : i32
    return %arg0, %c0_i32, %c0_i32_0 : i32, i32, i32
  }
  func.func @transform_2(%arg0: i32) -> (i32, i32) {
    %c0_i32 = arith.constant 0 : i32
    %c0_i32_0 = arith.constant 0 : i32
    %c0_i32_1 = arith.constant 0 : i32
    return %c0_i32, %c0_i32_0 : i32, i32
  }
  func.func @transform_3(%arg0: i32) -> (i32, i32) {
    %c0_i32 = arith.constant 0 : i32
    %c0_i32_0 = arith.constant 0 : i32
    %c0_i32_1 = arith.constant 0 : i32
    return %c0_i32, %c0_i32_0 : i32, i32
  }
  func.func @transform_4(%arg0: i32) -> (i32, i32) {
    %c0_i32 = arith.constant 0 : i32
    %c0_i32_0 = arith.constant 0 : i32
    %c0_i32_1 = arith.constant 0 : i32
    return %c0_i32, %c0_i32_0 : i32, i32
  }
  func.func @transform_5(%arg0: i32) -> (i32, i32, i32) {
    %c0_i32 = arith.constant 0 : i32
    %c0_i32_0 = arith.constant 0 : i32
    %c0_i32_1 = arith.constant 0 : i32
    return %arg0, %c0_i32, %c0_i32_0 : i32, i32, i32
  }
}

module attributes {stable_mosaic.version = 11 : i64} {
  func.func @gru_encoder_vae_kernel(%arg0: i32, %arg1: memref<4x8x384xf32, #tpu.memory_space<vmem>>, %arg2: memref<4x8x1xf32, #tpu.memory_space<vmem>>, %arg3: memref<128x384xbf16, #tpu.memory_space<vmem>>, %arg4: memref<1x384xf32, #tpu.memory_space<vmem>>, %arg5: memref<128x128xf32, #tpu.memory_space<vmem>>, %arg6: memref<1x128xf32, #tpu.memory_space<vmem>>, %arg7: memref<8x64xf32, #tpu.memory_space<vmem>>, %arg8: memref<64x128xf32, #tpu.memory_space<vmem>>, %arg9: memref<1x128xf32, #tpu.memory_space<vmem>>, %arg10: memref<8x128xf32, #tpu.memory_space<vmem>>, %arg11: memref<1x1xf32, #tpu.memory_space<smem>>, %arg12: memref<8x128xf32, #tpu.memory_space<vmem>>) attributes {dimension_semantics = [#tpu.dimension_semantics<arbitrary>], iteration_bounds = array<i64: 2>, scalar_prefetch = 0 : i64, scratch_operands = 1 : i64, tpu.core_type = #tpu.core_type<tc>, window_params = [{transform_indices = @transform_0, window_bounds = array<i64: 4, 8, 384>}, {transform_indices = @transform_1, window_bounds = array<i64: 4, 8, 1>}, {pipeline_mode = #tpu.pipeline_mode<synchronous>, transform_indices = @transform_2, window_bounds = array<i64: 128, 384>}, {pipeline_mode = #tpu.pipeline_mode<synchronous>, transform_indices = @transform_3, window_bounds = array<i64: 1, 384>}, {pipeline_mode = #tpu.pipeline_mode<synchronous>, transform_indices = @transform_4, window_bounds = array<i64: 128, 128>}, {pipeline_mode = #tpu.pipeline_mode<synchronous>, transform_indices = @transform_5, window_bounds = array<i64: 1, 128>}, {pipeline_mode = #tpu.pipeline_mode<synchronous>, transform_indices = @transform_6, window_bounds = array<i64: 8, 64>}, {pipeline_mode = #tpu.pipeline_mode<synchronous>, transform_indices = @transform_7, window_bounds = array<i64: 64, 128>}, {pipeline_mode = #tpu.pipeline_mode<synchronous>, transform_indices = @transform_8, window_bounds = array<i64: 1, 128>}, {pipeline_mode = #tpu.pipeline_mode<synchronous>, transform_indices = @transform_9, window_bounds = array<i64: 8, 128>}, {transform_indices = @transform_10, window_bounds = array<i64: 1, 1>}]} {
    %c0_i32 = arith.constant 0 : i32
    %0 = arith.cmpi eq, %arg0, %c0_i32 : i32
    %1 = arith.extui %0 : i1 to i32
    %c0_i32_0 = arith.constant 0 : i32
    %2 = arith.cmpi ne, %1, %c0_i32_0 : i32
    scf.if %2 {
      %cst_49 = arith.constant 0.000000e+00 : f32
      %164 = vector.broadcast %cst_49 : f32 to vector<8x128xf32>
      %c0_50 = arith.constant 0 : index
      %c0_51 = arith.constant 0 : index
      %165 = vector.load %arg12[%c0_50, %c0_51] : memref<8x128xf32, #tpu.memory_space<vmem>>, vector<8x128xf32>
      tpu.vector_store %arg12[%c0_50, %c0_51], %164 {strides = array<i32>} : memref<8x128xf32, #tpu.memory_space<vmem>>, vector<8x128xf32>,
    } else {
    }
    %c0 = arith.constant 0 : index
    %c0_1 = arith.constant 0 : index
    %3 = vector.load %arg3[%c0, %c0_1] : memref<128x384xbf16, #tpu.memory_space<vmem>>, vector<128x384xbf16>
    %c0_2 = arith.constant 0 : index
    %c0_3 = arith.constant 0 : index
    %4 = vector.load %arg4[%c0_2, %c0_3] : memref<1x384xf32, #tpu.memory_space<vmem>>, vector<1x384xf32>
    %5 = vector.shape_cast %4 : vector<1x384xf32> to vector<1x384xf32>
    %6 = vector.broadcast %5 : vector<1x384xf32> to vector<8x384xf32>
    %c0_4 = arith.constant 0 : index
    %c0_5 = arith.constant 0 : index
    %7 = vector.load %arg12[%c0_4, %c0_5] : memref<8x128xf32, #tpu.memory_space<vmem>>, vector<8x128xf32>
    %c0_6 = arith.constant 0 : index
    %c0_7 = arith.constant 0 : index
    %c0_8 = arith.constant 0 : index
    %8 = vector.load %arg1[%c0_6, %c0_7, %c0_8] : memref<4x8x384xf32, #tpu.memory_space<vmem>>, vector<1x8x384xf32>
    %9 = vector.shape_cast %8 : vector<1x8x384xf32> to vector<8x384xf32>
    %c0_9 = arith.constant 0 : index
    %c0_10 = arith.constant 0 : index
    %c0_11 = arith.constant 0 : index
    %10 = vector.load %arg2[%c0_9, %c0_10, %c0_11] : memref<4x8x1xf32, #tpu.memory_space<vmem>>, vector<1x8x1xf32>
    %11 = vector.shape_cast %10 : vector<1x8x1xf32> to vector<8x1xf32>
    %12 = arith.truncf %7 : vector<8x128xf32> to vector<8x128xbf16>
    %cst = arith.constant dense<0.000000e+00> : vector<8x384xf32>
    %13 = tpu.matmul %12, %3, %cst {dimension_numbers = #tpu.dot_dimension_numbers<[1], [0], [0], [1], [0, 0, 1, 1], [], []>} : vector<8x128xbf16>, vector<128x384xbf16>, vector<8x384xf32> -> vector<8x384xf32>
    %14 = arith.addf %13, %6 : vector<8x384xf32>
    %15 = vector.extract_strided_slice %9 {offsets = [0, 0], sizes = [8, 128], strides = [1, 1]} : vector<8x384xf32> to vector<8x128xf32>
    %16 = vector.extract_strided_slice %14 {offsets = [0, 0], sizes = [8, 128], strides = [1, 1]} : vector<8x384xf32> to vector<8x128xf32>
    %17 = arith.addf %15, %16 : vector<8x128xf32>
    %18 = arith.negf %17 : vector<8x128xf32>
    %19 = math.exp %18 : vector<8x128xf32>
    %cst_12 = arith.constant 1.000000e+00 : f32
    %20 = vector.broadcast %cst_12 : f32 to vector<8x128xf32>
    %21 = arith.addf %20, %19 : vector<8x128xf32>
    %22 = arith.divf %20, %21 : vector<8x128xf32>
    %23 = vector.extract_strided_slice %9 {offsets = [0, 128], sizes = [8, 128], strides = [1, 1]} : vector<8x384xf32> to vector<8x128xf32>
    %24 = vector.extract_strided_slice %14 {offsets = [0, 128], sizes = [8, 128], strides = [1, 1]} : vector<8x384xf32> to vector<8x128xf32>
    %25 = arith.addf %23, %24 : vector<8x128xf32>
    %26 = arith.negf %25 : vector<8x128xf32>
    %27 = math.exp %26 : vector<8x128xf32>
    %cst_13 = arith.constant 1.000000e+00 : f32
    %28 = vector.broadcast %cst_13 : f32 to vector<8x128xf32>
    %29 = arith.addf %28, %27 : vector<8x128xf32>
    %30 = arith.divf %28, %29 : vector<8x128xf32>
    %31 = vector.extract_strided_slice %9 {offsets = [0, 256], sizes = [8, 128], strides = [1, 1]} : vector<8x384xf32> to vector<8x128xf32>
    %32 = vector.extract_strided_slice %14 {offsets = [0, 256], sizes = [8, 128], strides = [1, 1]} : vector<8x384xf32> to vector<8x128xf32>
    %33 = arith.mulf %22, %32 : vector<8x128xf32>
    %34 = arith.addf %31, %33 : vector<8x128xf32>
    %35 = math.tanh %34 : vector<8x128xf32>
    %cst_14 = arith.constant 1.000000e+00 : f32
    %36 = vector.broadcast %cst_14 : f32 to vector<8x128xf32>
    %37 = arith.subf %36, %30 : vector<8x128xf32>
    %38 = arith.mulf %37, %35 : vector<8x128xf32>
    %39 = arith.mulf %30, %7 : vector<8x128xf32>
    %40 = arith.addf %38, %39 : vector<8x128xf32>
    %cst_15 = arith.constant 0.000000e+00 : f32
    %41 = vector.broadcast %cst_15 : f32 to vector<8x1xf32>
    %42 = arith.cmpf ogt, %11, %41 : vector<8x1xf32>
    %43 = vector.shape_cast %42 : vector<8x1xi1> to vector<8x1xi1>
    %44 = vector.broadcast %43 : vector<8x1xi1> to vector<8x128xi1>
    %45 = arith.select %44, %40, %7 : vector<8x128xi1>, vector<8x128xf32>
    %c1 = arith.constant 1 : index
    %c0_16 = arith.constant 0 : index
    %c0_17 = arith.constant 0 : index
    %46 = vector.load %arg1[%c1, %c0_16, %c0_17] : memref<4x8x384xf32, #tpu.memory_space<vmem>>, vector<1x8x384xf32>
    %47 = vector.shape_cast %46 : vector<1x8x384xf32> to vector<8x384xf32>
    %c1_18 = arith.constant 1 : index
    %c0_19 = arith.constant 0 : index
    %c0_20 = arith.constant 0 : index
    %48 = vector.load %arg2[%c1_18, %c0_19, %c0_20] : memref<4x8x1xf32, #tpu.memory_space<vmem>>, vector<1x8x1xf32>
    %49 = vector.shape_cast %48 : vector<1x8x1xf32> to vector<8x1xf32>
    %50 = arith.truncf %45 : vector<8x128xf32> to vector<8x128xbf16>
    %cst_21 = arith.constant dense<0.000000e+00> : vector<8x384xf32>
    %51 = tpu.matmul %50, %3, %cst_21 {dimension_numbers = #tpu.dot_dimension_numbers<[1], [0], [0], [1], [0, 0, 1, 1], [], []>} : vector<8x128xbf16>, vector<128x384xbf16>, vector<8x384xf32> -> vector<8x384xf32>
    %52 = arith.addf %51, %6 : vector<8x384xf32>
    %53 = vector.extract_strided_slice %47 {offsets = [0, 0], sizes = [8, 128], strides = [1, 1]} : vector<8x384xf32> to vector<8x128xf32>
    %54 = vector.extract_strided_slice %52 {offsets = [0, 0], sizes = [8, 128], strides = [1, 1]} : vector<8x384xf32> to vector<8x128xf32>
    %55 = arith.addf %53, %54 : vector<8x128xf32>
    %56 = arith.negf %55 : vector<8x128xf32>
    %57 = math.exp %56 : vector<8x128xf32>
    %cst_22 = arith.constant 1.000000e+00 : f32
    %58 = vector.broadcast %cst_22 : f32 to vector<8x128xf32>
    %59 = arith.addf %58, %57 : vector<8x128xf32>
    %60 = arith.divf %58, %59 : vector<8x128xf32>
    %61 = vector.extract_strided_slice %47 {offsets = [0, 128], sizes = [8, 128], strides = [1, 1]} : vector<8x384xf32> to vector<8x128xf32>
    %62 = vector.extract_strided_slice %52 {offsets = [0, 128], sizes = [8, 128], strides = [1, 1]} : vector<8x384xf32> to vector<8x128xf32>
    %63 = arith.addf %61, %62 : vector<8x128xf32>
    %64 = arith.negf %63 : vector<8x128xf32>
    %65 = math.exp %64 : vector<8x128xf32>
    %cst_23 = arith.constant 1.000000e+00 : f32
    %66 = vector.broadcast %cst_23 : f32 to vector<8x128xf32>
    %67 = arith.addf %66, %65 : vector<8x128xf32>
    %68 = arith.divf %66, %67 : vector<8x128xf32>
    %69 = vector.extract_strided_slice %47 {offsets = [0, 256], sizes = [8, 128], strides = [1, 1]} : vector<8x384xf32> to vector<8x128xf32>
    %70 = vector.extract_strided_slice %52 {offsets = [0, 256], sizes = [8, 128], strides = [1, 1]} : vector<8x384xf32> to vector<8x128xf32>
    %71 = arith.mulf %60, %70 : vector<8x128xf32>
    %72 = arith.addf %69, %71 : vector<8x128xf32>
    %73 = math.tanh %72 : vector<8x128xf32>
    %cst_24 = arith.constant 1.000000e+00 : f32
    %74 = vector.broadcast %cst_24 : f32 to vector<8x128xf32>
    %75 = arith.subf %74, %68 : vector<8x128xf32>
    %76 = arith.mulf %75, %73 : vector<8x128xf32>
    %77 = arith.mulf %68, %45 : vector<8x128xf32>
    %78 = arith.addf %76, %77 : vector<8x128xf32>
    %cst_25 = arith.constant 0.000000e+00 : f32
    %79 = vector.broadcast %cst_25 : f32 to vector<8x1xf32>
    %80 = arith.cmpf ogt, %49, %79 : vector<8x1xf32>
    %81 = vector.shape_cast %80 : vector<8x1xi1> to vector<8x1xi1>
    %82 = vector.broadcast %81 : vector<8x1xi1> to vector<8x128xi1>
    %83 = arith.select %82, %78, %45 : vector<8x128xi1>, vector<8x128xf32>
    %c2 = arith.constant 2 : index
    %c0_26 = arith.constant 0 : index
    %c0_27 = arith.constant 0 : index
    %84 = vector.load %arg1[%c2, %c0_26, %c0_27] : memref<4x8x384xf32, #tpu.memory_space<vmem>>, vector<1x8x384xf32>
    %85 = vector.shape_cast %84 : vector<1x8x384xf32> to vector<8x384xf32>
    %c2_28 = arith.constant 2 : index
    %c0_29 = arith.constant 0 : index
    %c0_30 = arith.constant 0 : index
    %86 = vector.load %arg2[%c2_28, %c0_29, %c0_30] : memref<4x8x1xf32, #tpu.memory_space<vmem>>, vector<1x8x1xf32>
    %87 = vector.shape_cast %86 : vector<1x8x1xf32> to vector<8x1xf32>
    %88 = arith.truncf %83 : vector<8x128xf32> to vector<8x128xbf16>
    %cst_31 = arith.constant dense<0.000000e+00> : vector<8x384xf32>
    %89 = tpu.matmul %88, %3, %cst_31 {dimension_numbers = #tpu.dot_dimension_numbers<[1], [0], [0], [1], [0, 0, 1, 1], [], []>} : vector<8x128xbf16>, vector<128x384xbf16>, vector<8x384xf32> -> vector<8x384xf32>
    %90 = arith.addf %89, %6 : vector<8x384xf32>
    %91 = vector.extract_strided_slice %85 {offsets = [0, 0], sizes = [8, 128], strides = [1, 1]} : vector<8x384xf32> to vector<8x128xf32>
    %92 = vector.extract_strided_slice %90 {offsets = [0, 0], sizes = [8, 128], strides = [1, 1]} : vector<8x384xf32> to vector<8x128xf32>
    %93 = arith.addf %91, %92 : vector<8x128xf32>
    %94 = arith.negf %93 : vector<8x128xf32>
    %95 = math.exp %94 : vector<8x128xf32>
    %cst_32 = arith.constant 1.000000e+00 : f32
    %96 = vector.broadcast %cst_32 : f32 to vector<8x128xf32>
    %97 = arith.addf %96, %95 : vector<8x128xf32>
    %98 = arith.divf %96, %97 : vector<8x128xf32>
    %99 = vector.extract_strided_slice %85 {offsets = [0, 128], sizes = [8, 128], strides = [1, 1]} : vector<8x384xf32> to vector<8x128xf32>
    %100 = vector.extract_strided_slice %90 {offsets = [0, 128], sizes = [8, 128], strides = [1, 1]} : vector<8x384xf32> to vector<8x128xf32>
    %101 = arith.addf %99, %100 : vector<8x128xf32>
    %102 = arith.negf %101 : vector<8x128xf32>
    %103 = math.exp %102 : vector<8x128xf32>
    %cst_33 = arith.constant 1.000000e+00 : f32
    %104 = vector.broadcast %cst_33 : f32 to vector<8x128xf32>
    %105 = arith.addf %104, %103 : vector<8x128xf32>
    %106 = arith.divf %104, %105 : vector<8x128xf32>
    %107 = vector.extract_strided_slice %85 {offsets = [0, 256], sizes = [8, 128], strides = [1, 1]} : vector<8x384xf32> to vector<8x128xf32>
    %108 = vector.extract_strided_slice %90 {offsets = [0, 256], sizes = [8, 128], strides = [1, 1]} : vector<8x384xf32> to vector<8x128xf32>
    %109 = arith.mulf %98, %108 : vector<8x128xf32>
    %110 = arith.addf %107, %109 : vector<8x128xf32>
    %111 = math.tanh %110 : vector<8x128xf32>
    %cst_34 = arith.constant 1.000000e+00 : f32
    %112 = vector.broadcast %cst_34 : f32 to vector<8x128xf32>
    %113 = arith.subf %112, %106 : vector<8x128xf32>
    %114 = arith.mulf %113, %111 : vector<8x128xf32>
    %115 = arith.mulf %106, %83 : vector<8x128xf32>
    %116 = arith.addf %114, %115 : vector<8x128xf32>
    %cst_35 = arith.constant 0.000000e+00 : f32
    %117 = vector.broadcast %cst_35 : f32 to vector<8x1xf32>
    %118 = arith.cmpf ogt, %87, %117 : vector<8x1xf32>
    %119 = vector.shape_cast %118 : vector<8x1xi1> to vector<8x1xi1>
    %120 = vector.broadcast %119 : vector<8x1xi1> to vector<8x128xi1>
    %121 = arith.select %120, %116, %83 : vector<8x128xi1>, vector<8x128xf32>
    %c3 = arith.constant 3 : index
    %c0_36 = arith.constant 0 : index
    %c0_37 = arith.constant 0 : index
    %122 = vector.load %arg1[%c3, %c0_36, %c0_37] : memref<4x8x384xf32, #tpu.memory_space<vmem>>, vector<1x8x384xf32>
    %123 = vector.shape_cast %122 : vector<1x8x384xf32> to vector<8x384xf32>
    %c3_38 = arith.constant 3 : index
    %c0_39 = arith.constant 0 : index
    %c0_40 = arith.constant 0 : index
    %124 = vector.load %arg2[%c3_38, %c0_39, %c0_40] : memref<4x8x1xf32, #tpu.memory_space<vmem>>, vector<1x8x1xf32>
    %125 = vector.shape_cast %124 : vector<1x8x1xf32> to vector<8x1xf32>
    %126 = arith.truncf %121 : vector<8x128xf32> to vector<8x128xbf16>
    %cst_41 = arith.constant dense<0.000000e+00> : vector<8x384xf32>
    %127 = tpu.matmul %126, %3, %cst_41 {dimension_numbers = #tpu.dot_dimension_numbers<[1], [0], [0], [1], [0, 0, 1, 1], [], []>} : vector<8x128xbf16>, vector<128x384xbf16>, vector<8x384xf32> -> vector<8x384xf32>
    %128 = arith.addf %127, %6 : vector<8x384xf32>
    %129 = vector.extract_strided_slice %123 {offsets = [0, 0], sizes = [8, 128], strides = [1, 1]} : vector<8x384xf32> to vector<8x128xf32>
    %130 = vector.extract_strided_slice %128 {offsets = [0, 0], sizes = [8, 128], strides = [1, 1]} : vector<8x384xf32> to vector<8x128xf32>
    %131 = arith.addf %129, %130 : vector<8x128xf32>
    %132 = arith.negf %131 : vector<8x128xf32>
    %133 = math.exp %132 : vector<8x128xf32>
    %cst_42 = arith.constant 1.000000e+00 : f32
    %134 = vector.broadcast %cst_42 : f32 to vector<8x128xf32>
    %135 = arith.addf %134, %133 : vector<8x128xf32>
    %136 = arith.divf %134, %135 : vector<8x128xf32>
    %137 = vector.extract_strided_slice %123 {offsets = [0, 128], sizes = [8, 128], strides = [1, 1]} : vector<8x384xf32> to vector<8x128xf32>
    %138 = vector.extract_strided_slice %128 {offsets = [0, 128], sizes = [8, 128], strides = [1, 1]} : vector<8x384xf32> to vector<8x128xf32>
    %139 = arith.addf %137, %138 : vector<8x128xf32>
    %140 = arith.negf %139 : vector<8x128xf32>
    %141 = math.exp %140 : vector<8x128xf32>
    %cst_43 = arith.constant 1.000000e+00 : f32
    %142 = vector.broadcast %cst_43 : f32 to vector<8x128xf32>
    %143 = arith.addf %142, %141 : vector<8x128xf32>
    %144 = arith.divf %142, %143 : vector<8x128xf32>
    %145 = vector.extract_strided_slice %123 {offsets = [0, 256], sizes = [8, 128], strides = [1, 1]} : vector<8x384xf32> to vector<8x128xf32>
    %146 = vector.extract_strided_slice %128 {offsets = [0, 256], sizes = [8, 128], strides = [1, 1]} : vector<8x384xf32> to vector<8x128xf32>
    %147 = arith.mulf %136, %146 : vector<8x128xf32>
    %148 = arith.addf %145, %147 : vector<8x128xf32>
    %149 = math.tanh %148 : vector<8x128xf32>
    %cst_44 = arith.constant 1.000000e+00 : f32
    %150 = vector.broadcast %cst_44 : f32 to vector<8x128xf32>
    %151 = arith.subf %150, %144 : vector<8x128xf32>
    %152 = arith.mulf %151, %149 : vector<8x128xf32>
    %153 = arith.mulf %144, %121 : vector<8x128xf32>
    %154 = arith.addf %152, %153 : vector<8x128xf32>
    %cst_45 = arith.constant 0.000000e+00 : f32
    %155 = vector.broadcast %cst_45 : f32 to vector<8x1xf32>
    %156 = arith.cmpf ogt, %125, %155 : vector<8x1xf32>
    %157 = vector.shape_cast %156 : vector<8x1xi1> to vector<8x1xi1>
    %158 = vector.broadcast %157 : vector<8x1xi1> to vector<8x128xi1>
    %159 = arith.select %158, %154, %121 : vector<8x128xi1>, vector<8x128xf32>
    %c0_46 = arith.constant 0 : index
    %c0_47 = arith.constant 0 : index
    %160 = vector.load %arg12[%c0_46, %c0_47] : memref<8x128xf32, #tpu.memory_space<vmem>>, vector<8x128xf32>
    tpu.vector_store %arg12[%c0_46, %c0_47], %159 {strides = array<i32>} : memref<8x128xf32, #tpu.memory_space<vmem>>, vector<8x128xf32>,
    %c1_i32 = arith.constant 1 : i32
    %161 = arith.cmpi eq, %arg0, %c1_i32 : i32
    %162 = arith.extui %161 : i1 to i32
    %c0_i32_48 = arith.constant 0 : i32
    %163 = arith.cmpi ne, %162, %c0_i32_48 : i32
    scf.if %163 {
      %c0_49 = arith.constant 0 : index
      %c0_50 = arith.constant 0 : index
      %164 = vector.load %arg12[%c0_49, %c0_50] : memref<8x128xf32, #tpu.memory_space<vmem>>, vector<8x128xf32>
      %c0_51 = arith.constant 0 : index
      %c0_52 = arith.constant 0 : index
      %165 = vector.load %arg5[%c0_51, %c0_52] : memref<128x128xf32, #tpu.memory_space<vmem>>, vector<128x128xf32>
      %cst_53 = arith.constant dense<0.000000e+00> : vector<8x128xf32>
      %166 = tpu.matmul %164, %165, %cst_53 {dimension_numbers = #tpu.dot_dimension_numbers<[1], [0], [0], [1], [0, 0, 1, 1], [], []>} : vector<8x128xf32>, vector<128x128xf32>, vector<8x128xf32> -> vector<8x128xf32>
      %c0_54 = arith.constant 0 : index
      %c0_55 = arith.constant 0 : index
      %167 = vector.load %arg6[%c0_54, %c0_55] : memref<1x128xf32, #tpu.memory_space<vmem>>, vector<1x128xf32>
      %168 = vector.broadcast %167 : vector<1x128xf32> to vector<8x128xf32>
      %169 = arith.addf %166, %168 : vector<8x128xf32>
      %170 = vector.extract_strided_slice %169 {offsets = [0, 0], sizes = [8, 64], strides = [1, 1]} : vector<8x128xf32> to vector<8x64xf32>
      %171 = vector.extract_strided_slice %169 {offsets = [0, 64], sizes = [8, 64], strides = [1, 1]} : vector<8x128xf32> to vector<8x64xf32>
      %cst_56 = arith.constant 5.000000e-01 : f32
      %172 = vector.broadcast %cst_56 : f32 to vector<8x64xf32>
      %173 = arith.mulf %172, %171 : vector<8x64xf32>
      %174 = math.exp %173 : vector<8x64xf32>
      %c0_57 = arith.constant 0 : index
      %c0_58 = arith.constant 0 : index
      %175 = vector.load %arg7[%c0_57, %c0_58] : memref<8x64xf32, #tpu.memory_space<vmem>>, vector<8x64xf32>
      %176 = arith.mulf %174, %175 : vector<8x64xf32>
      %177 = arith.addf %170, %176 : vector<8x64xf32>
      %c0_59 = arith.constant 0 : index
      %c0_60 = arith.constant 0 : index
      %178 = vector.load %arg8[%c0_59, %c0_60] : memref<64x128xf32, #tpu.memory_space<vmem>>, vector<64x128xf32>
      %cst_61 = arith.constant dense<0.000000e+00> : vector<8x128xf32>
      %179 = tpu.matmul %177, %178, %cst_61 {dimension_numbers = #tpu.dot_dimension_numbers<[1], [0], [0], [1], [0, 0, 1, 1], [], []>} : vector<8x64xf32>, vector<64x128xf32>, vector<8x128xf32> -> vector<8x128xf32>
      %c0_62 = arith.constant 0 : index
      %c0_63 = arith.constant 0 : index
      %180 = vector.load %arg9[%c0_62, %c0_63] : memref<1x128xf32, #tpu.memory_space<vmem>>, vector<1x128xf32>
      %181 = vector.broadcast %180 : vector<1x128xf32> to vector<8x128xf32>
      %182 = arith.addf %179, %181 : vector<8x128xf32>
      %c0_64 = arith.constant 0 : index
      %c0_65 = arith.constant 0 : index
      %183 = vector.load %arg10[%c0_64, %c0_65] : memref<8x128xf32, #tpu.memory_space<vmem>>, vector<8x128xf32>
      tpu.vector_store %arg10[%c0_64, %c0_65], %182 {strides = array<i32>} : memref<8x128xf32, #tpu.memory_space<vmem>>, vector<8x128xf32>,
      %184 = math.exp %171 : vector<8x64xf32>
      %185 = arith.mulf %170, %170 : vector<8x64xf32>
      %186 = arith.addf %184, %185 : vector<8x64xf32>
      %cst_66 = arith.constant 1.000000e+00 : f32
      %187 = vector.broadcast %cst_66 : f32 to vector<8x64xf32>
      %188 = arith.subf %186, %187 : vector<8x64xf32>
      %189 = arith.subf %188, %171 : vector<8x64xf32>
      %cst_67 = arith.constant dense<0.000000e+00> : vector<8xf32>
      %190 = vector.multi_reduction <add>, %189, %cst_67 [1] : vector<8x64xf32> to vector<8xf32>
      %191 = vector.shape_cast %190 : vector<8xf32> to vector<8x1xf32>
      %cst_68 = arith.constant 5.000000e-01 : f32
      %192 = vector.broadcast %cst_68 : f32 to vector<8x1xf32>
      %193 = arith.mulf %192, %191 : vector<8x1xf32>
      %194 = vector.shape_cast %193 : vector<8x1xf32> to vector<1x8x1xf32>
      %cst_69 = arith.constant dense<0.000000e+00> : vector<1xf32>
      %195 = vector.multi_reduction <add>, %194, %cst_69 [1, 2] : vector<1x8x1xf32> to vector<1xf32>
      %196 = vector.shape_cast %195 : vector<1xf32> to vector<1x1x1xf32>
      %197 = vector.extract %196[0, 0, 0] : f32 from vector<1x1x1xf32>
      %cst_70 = arith.constant 8.000000e+00 : f32
      %198 = arith.divf %197, %cst_70 : f32
      %c0_71 = arith.constant 0 : index
      %c0_72 = arith.constant 0 : index
      %199 = memref.load %arg11[%c0_71, %c0_72] : memref<1x1xf32, #tpu.memory_space<smem>>
      memref.store %198, %arg11[%c0_71, %c0_72] : memref<1x1xf32, #tpu.memory_space<smem>>
    } else {
    }
    return
  }
  func.func @transform_0(%arg0: i32) -> (i32, i32, i32) {
    %c0_i32 = arith.constant 0 : i32
    %c0_i32_0 = arith.constant 0 : i32
    %c0_i32_1 = arith.constant 0 : i32
    return %arg0, %c0_i32, %c0_i32_0 : i32, i32, i32
  }
  func.func @transform_1(%arg0: i32) -> (i32, i32, i32) {
    %c0_i32 = arith.constant 0 : i32
    %c0_i32_0 = arith.constant 0 : i32
    %c0_i32_1 = arith.constant 0 : i32
    return %arg0, %c0_i32, %c0_i32_0 : i32, i32, i32
  }
  func.func @transform_2(%arg0: i32) -> (i32, i32) {
    %c0_i32 = arith.constant 0 : i32
    %c0_i32_0 = arith.constant 0 : i32
    %c0_i32_1 = arith.constant 0 : i32
    return %c0_i32, %c0_i32_0 : i32, i32
  }
  func.func @transform_3(%arg0: i32) -> (i32, i32) {
    %c0_i32 = arith.constant 0 : i32
    %c0_i32_0 = arith.constant 0 : i32
    %c0_i32_1 = arith.constant 0 : i32
    return %c0_i32, %c0_i32_0 : i32, i32
  }
  func.func @transform_4(%arg0: i32) -> (i32, i32) {
    %c0_i32 = arith.constant 0 : i32
    %c0_i32_0 = arith.constant 0 : i32
    %c0_i32_1 = arith.constant 0 : i32
    return %c0_i32, %c0_i32_0 : i32, i32
  }
  func.func @transform_5(%arg0: i32) -> (i32, i32) {
    %c0_i32 = arith.constant 0 : i32
    %c0_i32_0 = arith.constant 0 : i32
    %c0_i32_1 = arith.constant 0 : i32
    return %c0_i32, %c0_i32_0 : i32, i32
  }
  func.func @transform_6(%arg0: i32) -> (i32, i32) {
    %c0_i32 = arith.constant 0 : i32
    %c0_i32_0 = arith.constant 0 : i32
    %c0_i32_1 = arith.constant 0 : i32
    return %c0_i32, %c0_i32_0 : i32, i32
  }
  func.func @transform_7(%arg0: i32) -> (i32, i32) {
    %c0_i32 = arith.constant 0 : i32
    %c0_i32_0 = arith.constant 0 : i32
    %c0_i32_1 = arith.constant 0 : i32
    return %c0_i32, %c0_i32_0 : i32, i32
  }
  func.func @transform_8(%arg0: i32) -> (i32, i32) {
    %c0_i32 = arith.constant 0 : i32
    %c0_i32_0 = arith.constant 0 : i32
    %c0_i32_1 = arith.constant 0 : i32
    return %c0_i32, %c0_i32_0 : i32, i32
  }
  func.func @transform_9(%arg0: i32) -> (i32, i32) {
    %c0_i32 = arith.constant 0 : i32
    %c0_i32_0 = arith.constant 0 : i32
    %c0_i32_1 = arith.constant 0 : i32
    return %c0_i32, %c0_i32_0 : i32, i32
  }
  func.func @transform_10(%arg0: i32) -> (i32, i32) {
    %c0_i32 = arith.constant 0 : i32
    %c0_i32_0 = arith.constant 0 : i32
    %c0_i32_1 = arith.constant 0 : i32
    return %c0_i32, %c0_i32_0 : i32, i32
  }
}

module attributes {stable_mosaic.version = 11 : i64} {
  func.func @classifier_ce_kernel(%arg0: i32, %arg1: memref<32x128xf32, #tpu.memory_space<vmem>>, %arg2: memref<32x1xi32, #tpu.memory_space<vmem>>, %arg3: memref<32x1xf32, #tpu.memory_space<vmem>>, %arg4: memref<128x256xbf16, #tpu.memory_space<vmem>>, %arg5: memref<1x256xf32, #tpu.memory_space<vmem>>, %arg6: memref<1x1xf32, #tpu.memory_space<smem>>) attributes {dimension_semantics = [#tpu.dimension_semantics<arbitrary>], iteration_bounds = array<i64: 2>, scalar_prefetch = 0 : i64, scratch_operands = 0 : i64, tpu.core_type = #tpu.core_type<tc>, window_params = [{transform_indices = @transform_0, window_bounds = array<i64: 32, 128>}, {transform_indices = @transform_1, window_bounds = array<i64: 32, 1>}, {transform_indices = @transform_2, window_bounds = array<i64: 32, 1>}, {pipeline_mode = #tpu.pipeline_mode<synchronous>, transform_indices = @transform_3, window_bounds = array<i64: 128, 256>}, {pipeline_mode = #tpu.pipeline_mode<synchronous>, transform_indices = @transform_4, window_bounds = array<i64: 1, 256>}, {transform_indices = @transform_5, window_bounds = array<i64: 1, 1>}]} {
    %c0_i32 = arith.constant 0 : i32
    %0 = arith.cmpi eq, %arg0, %c0_i32 : i32
    %1 = arith.extui %0 : i1 to i32
    %c0_i32_0 = arith.constant 0 : i32
    %2 = arith.cmpi ne, %1, %c0_i32_0 : i32
    scf.if %2 {
      %cst_19 = arith.constant 0.000000e+00 : f32
      %c0_20 = arith.constant 0 : index
      %c0_21 = arith.constant 0 : index
      %37 = memref.load %arg6[%c0_20, %c0_21] : memref<1x1xf32, #tpu.memory_space<smem>>
      memref.store %cst_19, %arg6[%c0_20, %c0_21] : memref<1x1xf32, #tpu.memory_space<smem>>
    } else {
    }
    %c0 = arith.constant 0 : index
    %c0_1 = arith.constant 0 : index
    %3 = vector.load %arg1[%c0, %c0_1] : memref<32x128xf32, #tpu.memory_space<vmem>>, vector<32x128xf32>
    %4 = arith.truncf %3 : vector<32x128xf32> to vector<32x128xbf16>
    %c0_2 = arith.constant 0 : index
    %c0_3 = arith.constant 0 : index
    %5 = vector.load %arg4[%c0_2, %c0_3] : memref<128x256xbf16, #tpu.memory_space<vmem>>, vector<128x256xbf16>
    %cst = arith.constant dense<0.000000e+00> : vector<32x256xf32>
    %6 = tpu.matmul %4, %5, %cst {dimension_numbers = #tpu.dot_dimension_numbers<[1], [0], [0], [1], [0, 0, 1, 1], [], []>} : vector<32x128xbf16>, vector<128x256xbf16>, vector<32x256xf32> -> vector<32x256xf32>
    %c0_4 = arith.constant 0 : index
    %c0_5 = arith.constant 0 : index
    %7 = vector.load %arg5[%c0_4, %c0_5] : memref<1x256xf32, #tpu.memory_space<vmem>>, vector<1x256xf32>
    %8 = vector.broadcast %7 : vector<1x256xf32> to vector<32x256xf32>
    %9 = arith.addf %6, %8 : vector<32x256xf32>
    %cst_6 = arith.constant dense<0xFF800000> : vector<32xf32>
    %10 = vector.multi_reduction <maximumf>, %9, %cst_6 [1] : vector<32x256xf32> to vector<32xf32>
    %11 = vector.shape_cast %10 : vector<32xf32> to vector<32x1xf32>
    %12 = vector.broadcast %11 : vector<32x1xf32> to vector<32x256xf32>
    %13 = arith.subf %9, %12 : vector<32x256xf32>
    %14 = math.exp %13 : vector<32x256xf32>
    %cst_7 = arith.constant dense<0.000000e+00> : vector<32xf32>
    %15 = vector.multi_reduction <add>, %14, %cst_7 [1] : vector<32x256xf32> to vector<32xf32>
    %16 = vector.shape_cast %15 : vector<32xf32> to vector<32x1xf32>
    %17 = math.log %16 : vector<32x1xf32>
    %18 = arith.addf %17, %11 : vector<32x1xf32>
    %19 = tpu.iota {dimensions = array<i32: 1>} : vector<32x256xi32>
    %c0_8 = arith.constant 0 : index
    %c0_9 = arith.constant 0 : index
    %20 = vector.load %arg2[%c0_8, %c0_9] : memref<32x1xi32, #tpu.memory_space<vmem>>, vector<32x1xi32>
    %21 = vector.broadcast %20 : vector<32x1xi32> to vector<32x256xi32>
    %22 = arith.cmpi eq, %19, %21 : vector<32x256xi32>
    %cst_10 = arith.constant 0.000000e+00 : f32
    %23 = vector.broadcast %cst_10 : f32 to vector<32x256xf32>
    %24 = arith.select %22, %9, %23 : vector<32x256xi1>, vector<32x256xf32>
    %cst_11 = arith.constant dense<0.000000e+00> : vector<32xf32>
    %25 = vector.multi_reduction <add>, %24, %cst_11 [1] : vector<32x256xf32> to vector<32xf32>
    %26 = vector.shape_cast %25 : vector<32xf32> to vector<32x1xf32>
    %27 = arith.subf %18, %26 : vector<32x1xf32>
    %c0_12 = arith.constant 0 : index
    %c0_13 = arith.constant 0 : index
    %28 = memref.load %arg6[%c0_12, %c0_13] : memref<1x1xf32, #tpu.memory_space<smem>>
    %c0_14 = arith.constant 0 : index
    %c0_15 = arith.constant 0 : index
    %29 = vector.load %arg3[%c0_14, %c0_15] : memref<32x1xf32, #tpu.memory_space<vmem>>, vector<32x1xf32>
    %30 = arith.mulf %27, %29 : vector<32x1xf32>
    %31 = vector.shape_cast %30 : vector<32x1xf32> to vector<1x32x1xf32>
    %cst_16 = arith.constant dense<0.000000e+00> : vector<1xf32>
    %32 = vector.multi_reduction <add>, %31, %cst_16 [1, 2] : vector<1x32x1xf32> to vector<1xf32>
    %33 = vector.shape_cast %32 : vector<1xf32> to vector<1x1x1xf32>
    %34 = vector.extract %33[0, 0, 0] : f32 from vector<1x1x1xf32>
    %35 = arith.addf %28, %34 : f32
    %c0_17 = arith.constant 0 : index
    %c0_18 = arith.constant 0 : index
    %36 = memref.load %arg6[%c0_17, %c0_18] : memref<1x1xf32, #tpu.memory_space<smem>>
    memref.store %35, %arg6[%c0_17, %c0_18] : memref<1x1xf32, #tpu.memory_space<smem>>
    return
  }
  func.func @transform_0(%arg0: i32) -> (i32, i32) {
    %c0_i32 = arith.constant 0 : i32
    %c0_i32_0 = arith.constant 0 : i32
    return %arg0, %c0_i32 : i32, i32
  }
  func.func @transform_1(%arg0: i32) -> (i32, i32) {
    %c0_i32 = arith.constant 0 : i32
    %c0_i32_0 = arith.constant 0 : i32
    return %arg0, %c0_i32 : i32, i32
  }
  func.func @transform_2(%arg0: i32) -> (i32, i32) {
    %c0_i32 = arith.constant 0 : i32
    %c0_i32_0 = arith.constant 0 : i32
    return %arg0, %c0_i32 : i32, i32
  }
  func.func @transform_3(%arg0: i32) -> (i32, i32) {
    %c0_i32 = arith.constant 0 : i32
    %c0_i32_0 = arith.constant 0 : i32
    %c0_i32_1 = arith.constant 0 : i32
    return %c0_i32, %c0_i32_0 : i32, i32
  }
  func.func @transform_4(%arg0: i32) -> (i32, i32) {
    %c0_i32 = arith.constant 0 : i32
    %c0_i32_0 = arith.constant 0 : i32
    %c0_i32_1 = arith.constant 0 : i32
    return %c0_i32, %c0_i32_0 : i32, i32
  }
  func.func @transform_5(%arg0: i32) -> (i32, i32) {
    %c0_i32 = arith.constant 0 : i32
    %c0_i32_0 = arith.constant 0 : i32
    %c0_i32_1 = arith.constant 0 : i32
    return %c0_i32, %c0_i32_0 : i32, i32
  }
}

</mosaic_0001>

<llo_original>
// kernel: rnnvae_forward.5
$region0: #{rnnvae_forward.5}
  #allocation0 [shape = 'u32[]', space=smem, size = 0x4, offset = 0x4, fixed_abs, tag = 'smem constant byte address 0x4 - core index']
  #allocation1 [shape = 'u32[144,128]{1,0:T(1,128)}', space=vmem, size = 0x12000, scoped, tag = 'internal scratch']
  %s0 = inlined_call_operand.vmem [shape: bf16[64,128], index: 0, kind: input, shape index: {}]
  %s1 = inlined_call_operand.vmem [shape: bf16[128,384], index: 1, kind: input, shape index: {}]
  %s2 = inlined_call_operand.vmem [shape: f32[1,384], index: 2, kind: input, shape index: {}]
  %s3 = inlined_call_operand.vmem [shape: f32[64,384], index: 3, kind: output, shape index: {}]
  %s4 = sld [smem:[#allocation0]]
  $region22: #{rnnvae_forward.5} parent=0
    _
  %s6 = ssub.s32 1, %s4
  %s7 = scalar_select 0, %s6, %s4
  // Predicated region
  $region2: #{rnnvae_forward.5} parent=0 // pred_check
    _
  $region3: #{rnnvae_forward.5} parent=0 // pred_check_branch
    %9 = sbr.rel (0) target = $region5
  $region4: #{rnnvae_forward.5} parent=0 // pred_region
    _
  $region5: #{rnnvae_forward.5} parent=0 // pred_fallthru
    _
  // Predicated region
  $region6: #{rnnvae_forward.5} parent=0 // pred_check
    _
  $region7: #{rnnvae_forward.5} parent=0 // pred_check_branch
    %11 = sbr.rel (0) target = $region9
  $region8: #{rnnvae_forward.5} parent=0 // pred_region
    _
  $region9: #{rnnvae_forward.5} parent=0 // pred_fallthru
    _
  // Predicated region
  $region10: #{rnnvae_forward.5} parent=0 // pred_check
    _
  $region11: #{rnnvae_forward.5} parent=0 // pred_check_branch
    %13 = sbr.rel (0) target = $region13
  $region12: #{rnnvae_forward.5} parent=0 // pred_region
    _
  $region13: #{rnnvae_forward.5} parent=0 // pred_fallthru
    _
  %v15 = vld [vmem:[%s0] sm:$0xf]
  %v16 = vld [vmem:[%s0 + $0x4] sm:$0xf]
  %v17 = vld [vmem:[%s0 + $0x8] sm:$0xf]
  %v18 = vld [vmem:[%s0 + $0xc] sm:$0xf]
  %v19 = vld [vmem:[%s0 + $0x10] sm:$0xf]
  %v20 = vld [vmem:[%s0 + $0x14] sm:$0xf]
  %v21 = vld [vmem:[%s0 + $0x18] sm:$0xf]
  %v22 = vld [vmem:[%s0 + $0x1c] sm:$0xf]
  %v23 = vld [vmem:[%s1] sm:$0xff]
  %v24 = vld [vmem:[%s1 + $0x8] sm:$0xf]
  %v25 = vld [vmem:[%s1 + $0xc] sm:$0xff]
  %v26 = vld [vmem:[%s1 + $0x14] sm:$0xf]
  %v27 = vld [vmem:[%s1 + $0x18] sm:$0xff]
  %v28 = vld [vmem:[%s1 + $0x20] sm:$0xf]
  %v29 = vld [vmem:[%s1 + $0x24] sm:$0xff]
  %v30 = vld [vmem:[%s1 + $0x2c] sm:$0xf]
  %v31 = vld [vmem:[%s1 + $0x30] sm:$0xff]
  %v32 = vld [vmem:[%s1 + $0x38] sm:$0xf]
  %v33 = vld [vmem:[%s1 + $0x3c] sm:$0xff]
  %v34 = vld [vmem:[%s1 + $0x44] sm:$0xf]
  %v35 = vld [vmem:[%s1 + $0x48] sm:$0xff]
  %v36 = vld [vmem:[%s1 + $0x50] sm:$0xf]
  %v37 = vld [vmem:[%s1 + $0x54] sm:$0xff]
  %v38 = vld [vmem:[%s1 + $0x5c] sm:$0xf]
  %v39 = vld [vmem:[%s1 + $0x60] sm:$0xff]
  %v40 = vld [vmem:[%s1 + $0x68] sm:$0xf]
  %v41 = vld [vmem:[%s1 + $0x6c] sm:$0xff]
  %v42 = vld [vmem:[%s1 + $0x74] sm:$0xf]
  %v43 = vld [vmem:[%s1 + $0x78] sm:$0xff]
  %v44 = vld [vmem:[%s1 + $0x80] sm:$0xf]
  %v45 = vld [vmem:[%s1 + $0x84] sm:$0xff]
  %v46 = vld [vmem:[%s1 + $0x8c] sm:$0xf]
  %v47 = vld [vmem:[%s1 + $0x90] sm:$0xff]
  %v48 = vld [vmem:[%s1 + $0x98] sm:$0xf]
  %v49 = vld [vmem:[%s1 + $0x9c] sm:$0xff]
  %v50 = vld [vmem:[%s1 + $0xa4] sm:$0xf]
  %v51 = vld [vmem:[%s1 + $0xa8] sm:$0xff]
  %v52 = vld [vmem:[%s1 + $0xb0] sm:$0xf]
  %v53 = vld [vmem:[%s1 + $0xb4] sm:$0xff]
  %v54 = vld [vmem:[%s1 + $0xbc] sm:$0xf]
  %v55 = vld [vmem:[%s2] sm:$0x7]
  %v57 = vlaneseq
  %v58 = vshrl.u32 %v57, 7
  %v59 = vsub.s32 0, %v58
  %v60 = vrot.slane %v55, %v59
  %v61 = vlaneseq
  %v62 = vshrl.u32 %v61, 7
  %v63 = vsub.s32 1, %v62
  %v64 = vrot.slane %v55, %v63
  %v65 = vlaneseq
  %v66 = vshrl.u32 %v65, 7
  %v67 = vsub.s32 2, %v66
  %v68 = vrot.slane %v55, %v67
  %v80 = vunpack.c.l.b16 %v15
  %v81 = vunpack.c.l.b16 %v16
  %v82 = vunpack.c.l.b16 %v17
  %v83 = vunpack.c.l.b16 %v18
  %v84 = vunpack.c.l.b16 %v19
  %v85 = vunpack.c.l.b16 %v20
  %v86 = vunpack.c.l.b16 %v21
  %v87 = vunpack.c.l.b16 %v22
  %v88 = vpack.c.b16 %v81, %v80
  %v89 = vpack.c.b16 %v83, %v82
  %v90 = vpack.c.b16 %v85, %v84
  %v91 = vpack.c.b16 %v87, %v86
  %v128 = vunpack.c.l.b16 %v23
  %v129 = vunpack.c.h.b16 %v23
  %v130 = vunpack.c.l.b16 %v24
  %v131 = vunpack.c.l.b16 %v25
  %v132 = vunpack.c.h.b16 %v25
  %v133 = vunpack.c.l.b16 %v26
  %v134 = vunpack.c.l.b16 %v27
  %v135 = vunpack.c.h.b16 %v27
  %v136 = vunpack.c.l.b16 %v28
  %v137 = vunpack.c.l.b16 %v29
  %v138 = vunpack.c.h.b16 %v29
  %v139 = vunpack.c.l.b16 %v30
  %v140 = vunpack.c.l.b16 %v31
  %v141 = vunpack.c.h.b16 %v31
  %v142 = vunpack.c.l.b16 %v32
  %v143 = vunpack.c.l.b16 %v33
  %v144 = vunpack.c.h.b16 %v33
  %v145 = vunpack.c.l.b16 %v34
  %v146 = vunpack.c.l.b16 %v35
  %v147 = vunpack.c.h.b16 %v35
  %v148 = vunpack.c.l.b16 %v36
  %v149 = vunpack.c.l.b16 %v37
  %v150 = vunpack.c.h.b16 %v37
  %v151 = vunpack.c.l.b16 %v38
  %v152 = vunpack.c.l.b16 %v39
  %v153 = vunpack.c.h.b16 %v39
  %v154 = vunpack.c.l.b16 %v40
  %v155 = vunpack.c.l.b16 %v41
  %v156 = vunpack.c.h.b16 %v41
  %v157 = vunpack.c.l.b16 %v42
  %v158 = vunpack.c.l.b16 %v43
  %v159 = vunpack.c.h.b16 %v43
  %v160 = vunpack.c.l.b16 %v44
  %v161 = vunpack.c.l.b16 %v45
  %v162 = vunpack.c.h.b16 %v45
  %v163 = vunpack.c.l.b16 %v46
  %v164 = vunpack.c.l.b16 %v47
  %v165 = vunpack.c.h.b16 %v47
  %v166 = vunpack.c.l.b16 %v48
  %v167 = vunpack.c.l.b16 %v49
  %v168 = vunpack.c.h.b16 %v49
  %v169 = vunpack.c.l.b16 %v50
  %v170 = vunpack.c.l.b16 %v51
  %v171 = vunpack.c.h.b16 %v51
  %v172 = vunpack.c.l.b16 %v52
  %v173 = vunpack.c.l.b16 %v53
  %v174 = vunpack.c.h.b16 %v53
  %v175 = vunpack.c.l.b16 %v54
  %v176 = vpack.c.b16 %v131, %v128
  %v177 = vpack.c.b16 %v132, %v129
  %v178 = vpack.c.b16 %v133, %v130
  %v179 = vpack.c.b16 %v137, %v134
  %v180 = vpack.c.b16 %v138, %v135
  %v181 = vpack.c.b16 %v139, %v136
  %v182 = vpack.c.b16 %v143, %v140
  %v183 = vpack.c.b16 %v144, %v141
  %v184 = vpack.c.b16 %v145, %v142
  %v185 = vpack.c.b16 %v149, %v146
  %v186 = vpack.c.b16 %v150, %v147
  %v187 = vpack.c.b16 %v151, %v148
  %v188 = vpack.c.b16 %v155, %v152
  %v189 = vpack.c.b16 %v156, %v153
  %v190 = vpack.c.b16 %v157, %v154
  %v191 = vpack.c.b16 %v161, %v158
  %v192 = vpack.c.b16 %v162, %v159
  %v193 = vpack.c.b16 %v163, %v160
  %v194 = vpack.c.b16 %v167, %v164
  %v195 = vpack.c.b16 %v168, %v165
  %v196 = vpack.c.b16 %v169, %v166
  %v197 = vpack.c.b16 %v173, %v170
  %v198 = vpack.c.b16 %v174, %v171
  %v199 = vpack.c.b16 %v175, %v172
  %224 = vmatprep.subr.bf16.mxu0 %v198
  %225 = vmatpush1.bf16.msra.mxu0 %v197
  %226 = vmatprep.subr.bf16.mxu0 %v195
  %227 = vmatpush1.bf16.msra.mxu0 %v194
  %228 = vmatprep.subr.bf16.mxu0 %v192
  %229 = vmatpush1.bf16.msra.mxu0 %v191
  %230 = vmatprep.subr.bf16.mxu0 %v189
  %231 = vmatpush1.bf16.msra.mxu0 %v188
  %232 = vmatprep.subr.bf16.mxu0 %v186
  %233 = vmatpush1.bf16.msra.mxu0 %v185
  %234 = vmatprep.subr.bf16.mxu0 %v183
  %235 = vmatpush1.bf16.msra.mxu0 %v182
  %236 = vmatprep.subr.bf16.mxu0 %v180
  %237 = vmatpush1.bf16.msra.mxu0 %v179
  %238 = vmatprep.subr.bf16.mxu0 %v177
  %239 = vmatpush1.bf16.msra.mxu0 %v176
  %240 = vmatprep.subr.bf16.mxu0 0
  %241 = vmatpush2.bf16.msra.mxu0 0
  %242 = vmatprep.subr.bf16.mxu0 0
  %243 = vmatpush2.bf16.msra.mxu0 0
  %244 = vmatprep.subr.bf16.mxu0 0
  %245 = vmatpush2.bf16.msra.mxu0 0
  %246 = vmatprep.subr.bf16.mxu0 0
  %247 = vmatpush2.bf16.msra.mxu0 0
  %248 = vmatprep.subr.bf16.mxu0 0
  %249 = vmatpush2.bf16.msra.mxu0 0
  %250 = vmatprep.subr.bf16.mxu0 0
  %251 = vmatpush2.bf16.msra.mxu0 0
  %252 = vmatprep.subr.bf16.mxu0 0
  %253 = vmatpush2.bf16.msra.mxu0 0
  %254 = vmatprep.subr.bf16.mxu0 0
  %255 = vmatpush2.bf16.msra.mxu0 0
  %256 = vmatprep.mubr.bf16.mxu0 0
  %257 = vmatmul.mubr.bf16.gmra.mxu0 %v88
  %v258 = vpop.f32.mrf.mxu0
  %v259 = vadd.f32 %v60, %v258
  %v260 = vpop.f32.mrf.mxu0
  %v261 = vadd.f32 %v64, %v260
  %v262 = vpop.f32.mrf.mxu0
  %v263 = vadd.f32 %v60, %v262
  %v264 = vpop.f32.mrf.mxu0
  %v265 = vadd.f32 %v64, %v264
  %266 = vmatprep.mubr.bf16.mxu0 0
  %267 = vmatmul.mubr.bf16.gmra.mxu0 %v89
  %v268 = vpop.f32.mrf.mxu0
  %v269 = vadd.f32 %v60, %v268
  %v270 = vpop.f32.mrf.mxu0
  %v271 = vadd.f32 %v64, %v270
  %v272 = vpop.f32.mrf.mxu0
  %v273 = vadd.f32 %v60, %v272
  %v274 = vpop.f32.mrf.mxu0
  %v275 = vadd.f32 %v64, %v274
  %276 = vmatprep.mubr.bf16.mxu0 0
  %277 = vmatmul.mubr.bf16.gmra.mxu0 %v90
  %v278 = vpop.f32.mrf.mxu0
  %v279 = vadd.f32 %v60, %v278
  %v280 = vpop.f32.mrf.mxu0
  %v281 = vadd.f32 %v64, %v280
  %v282 = vpop.f32.mrf.mxu0
  %v283 = vadd.f32 %v60, %v282
  %v284 = vpop.f32.mrf.mxu0
  %v285 = vadd.f32 %v64, %v284
  %286 = vmatprep.mubr.bf16.mxu0 0
  %287 = vmatmul.mubr.bf16.gmra.mxu0 %v91
  %v288 = vpop.f32.mrf.mxu0
  %v289 = vadd.f32 %v60, %v288
  %v290 = vpop.f32.mrf.mxu0
  %v291 = vadd.f32 %v64, %v290
  %v292 = vpop.f32.mrf.mxu0
  %v293 = vadd.f32 %v60, %v292
  %v294 = vpop.f32.mrf.mxu0
  %v295 = vadd.f32 %v64, %v294
  %296 = vdwg.mxu0
  %297 = vmatprep.subr.bf16.mxu0 0
  %298 = vmatpush1.bf16.msra.mxu0 %v199
  %299 = vmatprep.subr.bf16.mxu0 0
  %300 = vmatpush1.bf16.msra.mxu0 %v196
  %301 = vmatprep.subr.bf16.mxu0 0
  %302 = vmatpush1.bf16.msra.mxu0 %v193
  %303 = vmatprep.subr.bf16.mxu0 0
  %304 = vmatpush1.bf16.msra.mxu0 %v190
  %305 = vmatprep.subr.bf16.mxu0 0
  %306 = vmatpush1.bf16.msra.mxu0 %v187
  %307 = vmatprep.subr.bf16.mxu0 0
  %308 = vmatpush1.bf16.msra.mxu0 %v184
  %309 = vmatprep.subr.bf16.mxu0 0
  %310 = vmatpush1.bf16.msra.mxu0 %v181
  %311 = vmatprep.subr.bf16.mxu0 0
  %312 = vmatpush1.bf16.msra.mxu0 %v178
  %313 = vmatprep.subr.bf16.mxu0 0
  %314 = vmatpush2.bf16.msra.mxu0 0
  %315 = vmatprep.subr.bf16.mxu0 0
  %316 = vmatpush2.bf16.msra.mxu0 0
  %317 = vmatprep.subr.bf16.mxu0 0
  %318 = vmatpush2.bf16.msra.mxu0 0
  %319 = vmatprep.subr.bf16.mxu0 0
  %320 = vmatpush2.bf16.msra.mxu0 0
  %321 = vmatprep.subr.bf16.mxu0 0
  %322 = vmatpush2.bf16.msra.mxu0 0
  %323 = vmatprep.subr.bf16.mxu0 0
  %324 = vmatpush2.bf16.msra.mxu0 0
  %325 = vmatprep.subr.bf16.mxu0 0
  %326 = vmatpush2.bf16.msra.mxu0 0
  %327 = vmatprep.subr.bf16.mxu0 0
  %328 = vmatpush2.bf16.msra.mxu0 0
  %329 = vmatprep.mubr.bf16.mxu0 0
  %330 = vmatmul.mubr.bf16.gmra.mxu0 %v88
  %v331 = vpop.f32.mrf.mxu0
  %v332 = vadd.f32 %v68, %v331
  %v333 = vpop.f32.mrf.mxu0
  %v334 = vpop.f32.mrf.mxu0
  %v335 = vadd.f32 %v68, %v334
  %v336 = vpop.f32.mrf.mxu0
  %337 = vmatprep.mubr.bf16.mxu0 0
  %338 = vmatmul.mubr.bf16.gmra.mxu0 %v89
  %v339 = vpop.f32.mrf.mxu0
  %v340 = vadd.f32 %v68, %v339
  %v341 = vpop.f32.mrf.mxu0
  %v342 = vpop.f32.mrf.mxu0
  %v343 = vadd.f32 %v68, %v342
  %v344 = vpop.f32.mrf.mxu0
  %345 = vmatprep.mubr.bf16.mxu0 0
  %346 = vmatmul.mubr.bf16.gmra.mxu0 %v90
  %v347 = vpop.f32.mrf.mxu0
  %v348 = vadd.f32 %v68, %v347
  %v349 = vpop.f32.mrf.mxu0
  %v350 = vpop.f32.mrf.mxu0
  %v351 = vadd.f32 %v68, %v350
  %v352 = vpop.f32.mrf.mxu0
  %353 = vmatprep.mubr.bf16.mxu0 0
  %354 = vmatmul.mubr.bf16.gmra.mxu0 %v91
  %v355 = vpop.f32.mrf.mxu0
  %v356 = vadd.f32 %v68, %v355
  %v357 = vpop.f32.mrf.mxu0
  %v358 = vpop.f32.mrf.mxu0
  %v359 = vadd.f32 %v68, %v358
  %v360 = vpop.f32.mrf.mxu0
  %361 = vdwg.mxu0
  %362 = vst [vmem:[%s3] sm:$0xff] %v259
  %363 = vst [vmem:[%s3 + $0x8] sm:$0xff] %v261
  %364 = vst [vmem:[%s3 + $0x10] sm:$0xff] %v332
  %365 = vst [vmem:[%s3 + $0x18] sm:$0xff] %v263
  %366 = vst [vmem:[%s3 + $0x20] sm:$0xff] %v265
  %367 = vst [vmem:[%s3 + $0x28] sm:$0xff] %v335
  %368 = vst [vmem:[%s3 + $0x30] sm:$0xff] %v269
  %369 = vst [vmem:[%s3 + $0x38] sm:$0xff] %v271
  %370 = vst [vmem:[%s3 + $0x40] sm:$0xff] %v340
  %371 = vst [vmem:[%s3 + $0x48] sm:$0xff] %v273
  %372 = vst [vmem:[%s3 + $0x50] sm:$0xff] %v275
  %373 = vst [vmem:[%s3 + $0x58] sm:$0xff] %v343
  %374 = vst [vmem:[%s3 + $0x60] sm:$0xff] %v279
  %375 = vst [vmem:[%s3 + $0x68] sm:$0xff] %v281
  %376 = vst [vmem:[%s3 + $0x70] sm:$0xff] %v348
  %377 = vst [vmem:[%s3 + $0x78] sm:$0xff] %v283
  %378 = vst [vmem:[%s3 + $0x80] sm:$0xff] %v285
  %379 = vst [vmem:[%s3 + $0x88] sm:$0xff] %v351
  %380 = vst [vmem:[%s3 + $0x90] sm:$0xff] %v289
  %381 = vst [vmem:[%s3 + $0x98] sm:$0xff] %v291
  %382 = vst [vmem:[%s3 + $0xa0] sm:$0xff] %v356
  %383 = vst [vmem:[%s3 + $0xa8] sm:$0xff] %v293
  %384 = vst [vmem:[%s3 + $0xb0] sm:$0xff] %v295
  %385 = vst [vmem:[%s3 + $0xb8] sm:$0xff] %v359
  // Predicated region
  $region14: #{rnnvae_forward.5} parent=0 // pred_check
    _
  $region15: #{rnnvae_forward.5} parent=0 // pred_check_branch
    %387 = sbr.rel (0) target = $region17
  $region16: #{rnnvae_forward.5} parent=0 // pred_region
    _
  $region17: #{rnnvae_forward.5} parent=0 // pred_fallthru
    _
  // Predicated region
  $region18: #{rnnvae_forward.5} parent=0 // pred_check
    _
  $region19: #{rnnvae_forward.5} parent=0 // pred_check_branch
    %389 = sbr.rel (0) target = $region21
  $region20: #{rnnvae_forward.5} parent=0 // pred_region
    _
  $region21: #{rnnvae_forward.5} parent=0 // pred_fallthru
    _

// kernel: rnnvae_forward.8
$region0: #{rnnvae_forward.8}
  #allocation0 [shape = 'u32[]', space=smem, size = 0x4, offset = 0x4, fixed_abs, tag = 'smem constant byte address 0x4 - core index']
  #allocation1 [shape = 'u32[144,128]{1,0:T(1,128)}', space=vmem, size = 0x12000, scoped, tag = 'internal scratch']
  #allocation2 [shape = 'f32[8,128]{1,0:T(8,128)}', space=vmem, size = 0x1000, scoped, tag = 'scratch operand']
  %s0 = inlined_call_operand.vmem [shape: f32[8,8,384], index: 0, kind: input, shape index: {}]
  %s1 = inlined_call_operand.vmem [shape: f32[8,8,1], index: 1, kind: input, shape index: {}]
  %s2 = inlined_call_operand.vmem [shape: f32[8,128], index: 2, kind: input, shape index: {}]
  %s3 = inlined_call_operand.vmem [shape: bf16[128,384], index: 3, kind: input, shape index: {}]
  %s4 = inlined_call_operand.vmem [shape: f32[1,384], index: 4, kind: input, shape index: {}]
  %s5 = inlined_call_operand.vmem [shape: f32[8,8,128], index: 5, kind: output, shape index: {}]
  %s6 = sld [smem:[#allocation0]]
  $region57: #{rnnvae_forward.8} parent=0
    _
  %s8 = ssub.s32 1, %s6
  %s9 = scalar_select 0, %s8, %s6
  loop: start=0, step=1, limit=4
  $region2: #{rnnvae_forward.8} parent=0 // loop_pre_header
    _
  $region3: #{rnnvae_forward.8} parent=0 // loop_header
    %s11 = sphi 0, %s15
    %p12 = scmp.ge.s32.totalorder %s11, 4
    %s21 = sphi 0, %s23
    %s24 = sphi 0, %s21
    %s25 = sphi 0, %s24
    %s41 = sphi 0, %s25
    %s47 = sphi 0, %s49
    %s50 = sphi 0, %s47
    %s51 = sphi 0, %s50
    %s67 = sphi 0, %s51
    %s71 = sphi 0, %s71
    %s73 = sphi 0, %s71
    %s74 = sphi 0, %s73
    %s88 = sphi 0, %s74
    %s92 = sphi 0, %s92
    %s94 = sphi 0, %s92
    %s95 = sphi 0, %s94
    %s109 = sphi 0, %s95
    %s113 = sphi 0, %s113
    %s115 = sphi 0, %s113
    %s116 = sphi 0, %s115
    %s130 = sphi 0, %s116
    %s136 = sphi 0, %s138
    %s139 = sphi 0, %s136
    %s140 = sphi 0, %s139
    %s156 = sphi 0, %s140
  $region4: #{rnnvae_forward.8} parent=0 // loop_header_branch
    %14 = sbr.rel (%p12) target = $region8
  $region5: #{rnnvae_forward.8} parent=0 // loop_body
    %s16 = ssub.s32 %s11, 1
    %s17 = ssub.s32 %s11, 2
    %s18 = sadd.s32 %s11, 1
    %s19 = ssub.s32 %s11, %s18
    %p20 = scmp.eq.s32.totalorder %s19, 0
    %s22 = sadd.s32 %s21, 1
    %s23 = scalar_select %p20, %s21, %s22
    %p26 = pneg %p20
    %p27 = scmp.eq.s32.totalorder %s11, 1
    %p28 = por %p26, %p27
    %p29 = scmp.ne.s32.totalorder %s21, %s24
    %p30 = scmp.eq.s32.totalorder %s11, 0
    %p31 = por %p29, %p30
    %p32 = scmp.ne.s32.totalorder %s21, %s24
    %p33 = scmp.eq.s32.totalorder %s16, 1
    %p34 = por %p32, %p33
    %p35 = scmp.ne.s32.totalorder %s24, %s25
    %p36 = scmp.eq.s32.totalorder %s16, 0
    %p37 = por %p35, %p36
    %p38 = scmp.ne.s32.totalorder %s24, %s25
    %p39 = scmp.eq.s32.totalorder %s17, 1
    %p40 = por %p38, %p39
    %p42 = scmp.ne.s32.totalorder %s25, %s41
    %p43 = scmp.eq.s32.totalorder %s17, 0
    %p44 = por %p42, %p43
    %s45 = ssub.s32 %s11, %s18
    %p46 = scmp.eq.s32.totalorder %s45, 0
    %s48 = sadd.s32 %s47, 1
    %s49 = scalar_select %p46, %s47, %s48
    %p52 = pneg %p46
    %p53 = scmp.eq.s32.totalorder %s11, 1
    %p54 = por %p52, %p53
    %p55 = scmp.ne.s32.totalorder %s47, %s50
    %p56 = scmp.eq.s32.totalorder %s11, 0
    %p57 = por %p55, %p56
    %p58 = scmp.ne.s32.totalorder %s47, %s50
    %p59 = scmp.eq.s32.totalorder %s16, 1
    %p60 = por %p58, %p59
    %p61 = scmp.ne.s32.totalorder %s50, %s51
    %p62 = scmp.eq.s32.totalorder %s16, 0
    %p63 = por %p61, %p62
    %p64 = scmp.ne.s32.totalorder %s50, %s51
    %p65 = scmp.eq.s32.totalorder %s17, 1
    %p66 = por %p64, %p65
    %p68 = scmp.ne.s32.totalorder %s51, %s67
    %p69 = scmp.eq.s32.totalorder %s17, 0
    %p70 = por %p68, %p69
    %s72 = sadd.s32 %s71, 1
    %p75 = scmp.eq.s32.totalorder %s11, 1
    %p76 = scmp.ne.s32.totalorder %s71, %s73
    %p77 = scmp.eq.s32.totalorder %s11, 0
    %p78 = por %p76, %p77
    %p79 = scmp.ne.s32.totalorder %s71, %s73
    %p80 = scmp.eq.s32.totalorder %s16, 1
    %p81 = por %p79, %p80
    %p82 = scmp.ne.s32.totalorder %s73, %s74
    %p83 = scmp.eq.s32.totalorder %s16, 0
    %p84 = por %p82, %p83
    %p85 = scmp.ne.s32.totalorder %s73, %s74
    %p86 = scmp.eq.s32.totalorder %s17, 1
    %p87 = por %p85, %p86
    %p89 = scmp.ne.s32.totalorder %s74, %s88
    %p90 = scmp.eq.s32.totalorder %s17, 0
    %p91 = por %p89, %p90
    %s93 = sadd.s32 %s92, 1
    %p96 = scmp.eq.s32.totalorder %s11, 1
    %p97 = scmp.ne.s32.totalorder %s92, %s94
    %p98 = scmp.eq.s32.totalorder %s11, 0
    %p99 = por %p97, %p98
    %p100 = scmp.ne.s32.totalorder %s92, %s94
    %p101 = scmp.eq.s32.totalorder %s16, 1
    %p102 = por %p100, %p101
    %p103 = scmp.ne.s32.totalorder %s94, %s95
    %p104 = scmp.eq.s32.totalorder %s16, 0
    %p105 = por %p103, %p104
    %p106 = scmp.ne.s32.totalorder %s94, %s95
    %p107 = scmp.eq.s32.totalorder %s17, 1
    %p108 = por %p106, %p107
    %p110 = scmp.ne.s32.totalorder %s95, %s109
    %p111 = scmp.eq.s32.totalorder %s17, 0
    %p112 = por %p110, %p111
    %s114 = sadd.s32 %s113, 1
    %p117 = scmp.eq.s32.totalorder %s11, 1
    %p118 = scmp.ne.s32.totalorder %s113, %s115
    %p119 = scmp.eq.s32.totalorder %s11, 0
    %p120 = por %p118, %p119
    %p121 = scmp.ne.s32.totalorder %s113, %s115
    %p122 = scmp.eq.s32.totalorder %s16, 1
    %p123 = por %p121, %p122
    %p124 = scmp.ne.s32.totalorder %s115, %s116
    %p125 = scmp.eq.s32.totalorder %s16, 0
    %p126 = por %p124, %p125
    %p127 = scmp.ne.s32.totalorder %s115, %s116
    %p128 = scmp.eq.s32.totalorder %s17, 1
    %p129 = por %p127, %p128
    %p131 = scmp.ne.s32.totalorder %s116, %s130
    %p132 = scmp.eq.s32.totalorder %s17, 0
    %p133 = por %p131, %p132
    %s134 = ssub.s32 %s11, %s18
    %p135 = scmp.eq.s32.totalorder %s134, 0
    %s137 = sadd.s32 %s136, 1
    %s138 = scalar_select %p135, %s136, %s137
    %p141 = pneg %p135
    %p142 = scmp.eq.s32.totalorder %s11, 1
    %p143 = por %p141, %p142
    %p144 = scmp.ne.s32.totalorder %s136, %s139
    %p145 = scmp.eq.s32.totalorder %s11, 0
    %p146 = por %p144, %p145
    %p147 = scmp.ne.s32.totalorder %s136, %s139
    %p148 = scmp.eq.s32.totalorder %s16, 1
    %p149 = por %p147, %p148
    %p150 = scmp.ne.s32.totalorder %s139, %s140
    %p151 = scmp.eq.s32.totalorder %s16, 0
    %p152 = por %p150, %p151
    %p153 = scmp.ne.s32.totalorder %s139, %s140
    %p154 = scmp.eq.s32.totalorder %s17, 1
    %p155 = por %p153, %p154
    %p157 = scmp.ne.s32.totalorder %s140, %s156
    %p158 = scmp.eq.s32.totalorder %s17, 0
    %p159 = por %p157, %p158
    %p160 = scmp.le.s32.totalorder 1, %s11
    %p161 = scmp.lt.s32.totalorder %s11, 3
    %p162 = pnand %p160, %p161
    %p163 = pneg %p162
    // Predicated region
    $region9: #{rnnvae_forward.8} parent=5 // pred_check
      _
    $region10: #{rnnvae_forward.8} parent=5 // pred_check_branch
      %165 = sbr.rel (%p162) target = $region12
    $region11: #{rnnvae_forward.8} parent=5 // pred_region
      %s166 = ssub.s32 %s11, 1
      // Predicated region
      $region13: #{rnnvae_forward.8} parent=11 // pred_check
        %p167 = pneg %p84
      $region14: #{rnnvae_forward.8} parent=11 // pred_check_branch
        %169 = sbr.rel (%p167) target = $region16
      $region15: #{rnnvae_forward.8} parent=11 // pred_region
        _
      $region16: #{rnnvae_forward.8} parent=11 // pred_fallthru
        _
      // Predicated region
      $region17: #{rnnvae_forward.8} parent=11 // pred_check
        %p170 = pneg %p105
      $region18: #{rnnvae_forward.8} parent=11 // pred_check_branch
        %172 = sbr.rel (%p170) target = $region20
      $region19: #{rnnvae_forward.8} parent=11 // pred_region
        _
      $region20: #{rnnvae_forward.8} parent=11 // pred_fallthru
        _
      // Predicated region
      $region21: #{rnnvae_forward.8} parent=11 // pred_check
        %p173 = pneg %p126
      $region22: #{rnnvae_forward.8} parent=11 // pred_check_branch
        %175 = sbr.rel (%p173) target = $region24
      $region23: #{rnnvae_forward.8} parent=11 // pred_region
        _
      $region24: #{rnnvae_forward.8} parent=11 // pred_fallthru
        _
    $region12: #{rnnvae_forward.8} parent=5 // pred_fallthru
      _
    %p176 = scmp.lt.s32.totalorder %s11, 2
    // Predicated region
    $region25: #{rnnvae_forward.8} parent=5 // pred_check
      %p177 = pneg %p176
    $region26: #{rnnvae_forward.8} parent=5 // pred_check_branch
      %179 = sbr.rel (%p177) target = $region28
    $region27: #{rnnvae_forward.8} parent=5 // pred_region
      // Predicated region
      $region29: #{rnnvae_forward.8} parent=27 // pred_check
        %p180 = pneg %p31
      $region30: #{rnnvae_forward.8} parent=27 // pred_check_branch
        %182 = sbr.rel (%p180) target = $region32
      $region31: #{rnnvae_forward.8} parent=27 // pred_region
        %s183 = smul.u32 4, %s11
        %p184 = scmp.lt.s32.totalorder %s183, 7
        %s185 = scalar_select %p184, %s183, 7
        %s186 = smul.addr %s185, 3
        %s187 = smul.addr %s186, 8
        %s188 = scalar_lea.vmem %s0, %s187
        %s189 = smul.u32 4, %s11
      $region32: #{rnnvae_forward.8} parent=27 // pred_fallthru
        _
      // Predicated region
      $region33: #{rnnvae_forward.8} parent=27 // pred_check
        %p190 = pneg %p57
      $region34: #{rnnvae_forward.8} parent=27 // pred_check_branch
        %192 = sbr.rel (%p190) target = $region36
      $region35: #{rnnvae_forward.8} parent=27 // pred_region
        %s193 = smul.u32 4, %s11
        %p194 = scmp.lt.s32.totalorder %s193, 7
        %s195 = scalar_select %p194, %s193, 7
        %s196 = smul.addr %s195, 8
        %s197 = scalar_lea.vmem %s1, %s196
        %s198 = smul.u32 4, %s11
      $region36: #{rnnvae_forward.8} parent=27 // pred_fallthru
        _
    $region28: #{rnnvae_forward.8} parent=5 // pred_fallthru
      _
    %p199 = scmp.le.s32.totalorder 1, %s11
    %p200 = scmp.lt.s32.totalorder %s11, 3
    %p201 = pnand %p199, %p200
    %p202 = pneg %p201
    // Predicated region
    $region37: #{rnnvae_forward.8} parent=5 // pred_check
      _
    $region38: #{rnnvae_forward.8} parent=5 // pred_check_branch
      %204 = sbr.rel (%p201) target = $region40
    $region39: #{rnnvae_forward.8} parent=5 // pred_region
      %s205 = ssub.s32 %s11, 1
      %s206 = smul.u32 4, %s16
      %p207 = scmp.lt.s32.totalorder %s206, 7
      %s208 = scalar_select %p207, %s206, 7
      %s209 = smul.addr %s208, 3
      %s210 = smul.addr %s209, 8
      %s211 = scalar_lea.vmem %s0, %s210
      %p212 = pneg %p37
      %p213 = pneg %p34
      %s214 = smul.u32 4, %s16
      %p215 = scmp.lt.s32.totalorder %s214, 7
      %s216 = scalar_select %p215, %s214, 7
      %s217 = smul.addr %s216, 8
      %s218 = scalar_lea.vmem %s1, %s217
      %p219 = pneg %p63
      %p220 = pneg %p60
      %p221 = pneg %p84
      %p222 = pneg %p81
      %p223 = pneg %p105
      %p224 = pneg %p102
      %p225 = pneg %p126
      %p226 = pneg %p123
      %p227 = pneg %p152
      %p228 = pneg %p149
      %s229 = smul.u32 4, %s16
      %p230 = scmp.lt.s32.totalorder %s229, 7
      %s231 = scalar_select %p230, %s229, 7
      %s232 = smul.addr %s231, 8
      %s233 = scalar_lea.vmem %s5, %s232
      %s234 = smul.u32 4, %s16
      %p235 = scmp.lt.s32.totalorder %s234, 7
      %s236 = scalar_select %p235, %s234, 7
      %s237 = smul.addr %s236, 3
      %s238 = smul.addr %s237, 8
      %s239 = scalar_lea.vmem %s0, %s238
      %s240 = smul.u32 4, %s16
      %s241 = smul.u32 4, %s16
      %p242 = scmp.lt.s32.totalorder %s241, 7
      %s243 = scalar_select %p242, %s241, 7
      %s244 = smul.addr %s243, 8
      %s245 = scalar_lea.vmem %s1, %s244
      %s246 = smul.u32 4, %s16
      %s247 = smul.u32 4, %s16
      %p248 = scmp.lt.s32.totalorder %s247, 7
      %s249 = scalar_select %p248, %s247, 7
      %s250 = smul.addr %s249, 8
      %s251 = scalar_lea.vmem %s5, %s250
      %s252 = smul.u32 4, %s16
      %p254 = scmp.eq.s32.totalorder %s16, 0
      // Predicated region
      $region41: #{rnnvae_forward.8} parent=39 // pred_check
        %p255 = pneg %p254
      $region42: #{rnnvae_forward.8} parent=39 // pred_check_branch
        %257 = sbr.rel (%p255) target = $region44
      $region43: #{rnnvae_forward.8} parent=39 // pred_region
        %v258 = vld [vmem:[%s2] sm:$0xff]
        %259 = vst [vmem:[#allocation2] sm:$0xff] %v258
      $region44: #{rnnvae_forward.8} parent=39 // pred_fallthru
        _
      %v260 = vld [vmem:[%s3] sm:$0xff]
      %v261 = vld [vmem:[%s3 + $0x8] sm:$0xf]
      %v262 = vld [vmem:[%s3 + $0xc] sm:$0xff]
      %v263 = vld [vmem:[%s3 + $0x14] sm:$0xf]
      %v264 = vld [vmem:[%s3 + $0x18] sm:$0xff]
      %v265 = vld [vmem:[%s3 + $0x20] sm:$0xf]
      %v266 = vld [vmem:[%s3 + $0x24] sm:$0xff]
      %v267 = vld [vmem:[%s3 + $0x2c] sm:$0xf]
      %v268 = vld [vmem:[%s3 + $0x30] sm:$0xff]
      %v269 = vld [vmem:[%s3 + $0x38] sm:$0xf]
      %v270 = vld [vmem:[%s3 + $0x3c] sm:$0xff]
      %v271 = vld [vmem:[%s3 + $0x44] sm:$0xf]
      %v272 = vld [vmem:[%s3 + $0x48] sm:$0xff]
      %v273 = vld [vmem:[%s3 + $0x50] sm:$0xf]
      %v274 = vld [vmem:[%s3 + $0x54] sm:$0xff]
      %v275 = vld [vmem:[%s3 + $0x5c] sm:$0xf]
      %v276 = vld [vmem:[%s3 + $0x60] sm:$0xff]
      %v277 = vld [vmem:[%s3 + $0x68] sm:$0xf]
      %v278 = vld [vmem:[%s3 + $0x6c] sm:$0xff]
      %v279 = vld [vmem:[%s3 + $0x74] sm:$0xf]
      %v280 = vld [vmem:[%s3 + $0x78] sm:$0xff]
      %v281 = vld [vmem:[%s3 + $0x80] sm:$0xf]
      %v282 = vld [vmem:[%s3 + $0x84] sm:$0xff]
      %v283 = vld [vmem:[%s3 + $0x8c] sm:$0xf]
      %v284 = vld [vmem:[%s3 + $0x90] sm:$0xff]
      %v285 = vld [vmem:[%s3 + $0x98] sm:$0xf]
      %v286 = vld [vmem:[%s3 + $0x9c] sm:$0xff]
      %v287 = vld [vmem:[%s3 + $0xa4] sm:$0xf]
      %v288 = vld [vmem:[%s3 + $0xa8] sm:$0xff]
      %v289 = vld [vmem:[%s3 + $0xb0] sm:$0xf]
      %v290 = vld [vmem:[%s3 + $0xb4] sm:$0xff]
      %v291 = vld [vmem:[%s3 + $0xbc] sm:$0xf]
      %v292 = vld [vmem:[%s4] sm:$0x7]
      %v294 = vlaneseq
      %v295 = vshrl.u32 %v294, 7
      %v296 = vsub.s32 0, %v295
      %v297 = vrot.slane %v292, %v296
      %v298 = vlaneseq
      %v299 = vshrl.u32 %v298, 7
      %v300 = vsub.s32 1, %v299
      %v301 = vrot.slane %v292, %v300
      %v302 = vlaneseq
      %v303 = vshrl.u32 %v302, 7
      %v304 = vsub.s32 2, %v303
      %v305 = vrot.slane %v292, %v304
      %v309 = vld [vmem:[#allocation2] sm:$0xff]
      %v310 = vld [vmem:[%s239] sm:$0xff]
      %v311 = vld [vmem:[%s239 + $0x8] sm:$0xff]
      %v312 = vld [vmem:[%s239 + $0x10] sm:$0xff]
      %v313 = vld [vmem:[%s245] sm:$0xff]
      %v314 = vpack.c.bf16 %v309, %v309
      %v347 = vunpack.c.l.b16 %v260
      %v348 = vunpack.c.h.b16 %v260
      %v349 = vunpack.c.l.b16 %v261
      %v350 = vunpack.c.l.b16 %v262
      %v351 = vunpack.c.h.b16 %v262
      %v352 = vunpack.c.l.b16 %v263
      %v353 = vunpack.c.l.b16 %v264
      %v354 = vunpack.c.h.b16 %v264
      %v355 = vunpack.c.l.b16 %v265
      %v356 = vunpack.c.l.b16 %v266
      %v357 = vunpack.c.h.b16 %v266
      %v358 = vunpack.c.l.b16 %v267
      %v359 = vunpack.c.l.b16 %v268
      %v360 = vunpack.c.h.b16 %v268
      %v361 = vunpack.c.l.b16 %v269
      %v362 = vunpack.c.l.b16 %v270
      %v363 = vunpack.c.h.b16 %v270
      %v364 = vunpack.c.l.b16 %v271
      %v365 = vunpack.c.l.b16 %v272
      %v366 = vunpack.c.h.b16 %v272
      %v367 = vunpack.c.l.b16 %v273
      %v368 = vunpack.c.l.b16 %v274
      %v369 = vunpack.c.h.b16 %v274
      %v370 = vunpack.c.l.b16 %v275
      %v371 = vunpack.c.l.b16 %v276
      %v372 = vunpack.c.h.b16 %v276
      %v373 = vunpack.c.l.b16 %v277
      %v374 = vunpack.c.l.b16 %v278
      %v375 = vunpack.c.h.b16 %v278
      %v376 = vunpack.c.l.b16 %v279
      %v377 = vunpack.c.l.b16 %v280
      %v378 = vunpack.c.h.b16 %v280
      %v379 = vunpack.c.l.b16 %v281
      %v380 = vunpack.c.l.b16 %v282
      %v381 = vunpack.c.h.b16 %v282
      %v382 = vunpack.c.l.b16 %v283
      %v383 = vunpack.c.l.b16 %v284
      %v384 = vunpack.c.h.b16 %v284
      %v385 = vunpack.c.l.b16 %v285
      %v386 = vunpack.c.l.b16 %v286
      %v387 = vunpack.c.h.b16 %v286
      %v388 = vunpack.c.l.b16 %v287
      %v389 = vunpack.c.l.b16 %v288
      %v390 = vunpack.c.h.b16 %v288
      %v391 = vunpack.c.l.b16 %v289
      %v392 = vunpack.c.l.b16 %v290
      %v393 = vunpack.c.h.b16 %v290
      %v394 = vunpack.c.l.b16 %v291
      %v395 = vpack.c.b16 %v350, %v347
      %v396 = vpack.c.b16 %v351, %v348
      %v397 = vpack.c.b16 %v352, %v349
      %v398 = vpack.c.b16 %v356, %v353
      %v399 = vpack.c.b16 %v357, %v354
      %v400 = vpack.c.b16 %v358, %v355
      %v401 = vpack.c.b16 %v362, %v359
      %v402 = vpack.c.b16 %v363, %v360
      %v403 = vpack.c.b16 %v364, %v361
      %v404 = vpack.c.b16 %v368, %v365
      %v405 = vpack.c.b16 %v369, %v366
      %v406 = vpack.c.b16 %v370, %v367
      %v407 = vpack.c.b16 %v374, %v371
      %v408 = vpack.c.b16 %v375, %v372
      %v409 = vpack.c.b16 %v376, %v373
      %v410 = vpack.c.b16 %v380, %v377
      %v411 = vpack.c.b16 %v381, %v378
      %v412 = vpack.c.b16 %v382, %v379
      %v413 = vpack.c.b16 %v386, %v383
      %v414 = vpack.c.b16 %v387, %v384
      %v415 = vpack.c.b16 %v388, %v385
      %v416 = vpack.c.b16 %v392, %v389
      %v417 = vpack.c.b16 %v393, %v390
      %v418 = vpack.c.b16 %v394, %v391
      %443 = vmatprep.subr.bf16.mxu0 %v417
      %444 = vmatpush1.bf16.msra.mxu0 %v416
      %445 = vmatprep.subr.bf16.mxu0 %v414
      %446 = vmatpush1.bf16.msra.mxu0 %v413
      %447 = vmatprep.subr.bf16.mxu0 %v411
      %448 = vmatpush1.bf16.msra.mxu0 %v410
      %449 = vmatprep.subr.bf16.mxu0 %v408
      %450 = vmatpush1.bf16.msra.mxu0 %v407
      %451 = vmatprep.subr.bf16.mxu0 %v405
      %452 = vmatpush1.bf16.msra.mxu0 %v404
      %453 = vmatprep.subr.bf16.mxu0 %v402
      %454 = vmatpush1.bf16.msra.mxu0 %v401
      %455 = vmatprep.subr.bf16.mxu0 %v399
      %456 = vmatpush1.bf16.msra.mxu0 %v398
      %457 = vmatprep.subr.bf16.mxu0 %v396
      %458 = vmatpush1.bf16.msra.mxu0 %v395
      %459 = vmatprep.subr.bf16.mxu0 0
      %460 = vmatpush2.bf16.msra.mxu0 0
      %461 = vmatprep.subr.bf16.mxu0 0
      %462 = vmatpush2.bf16.msra.mxu0 0
      %463 = vmatprep.subr.bf16.mxu0 0
      %464 = vmatpush2.bf16.msra.mxu0 0
      %465 = vmatprep.subr.bf16.mxu0 0
      %466 = vmatpush2.bf16.msra.mxu0 0
      %467 = vmatprep.subr.bf16.mxu0 0
      %468 = vmatpush2.bf16.msra.mxu0 0
      %469 = vmatprep.subr.bf16.mxu0 0
      %470 = vmatpush2.bf16.msra.mxu0 0
      %471 = vmatprep.subr.bf16.mxu0 0
      %472 = vmatpush2.bf16.msra.mxu0 0
      %473 = vmatprep.subr.bf16.mxu0 0
      %474 = vmatpush2.bf16.msra.mxu0 0
      %475 = vmatprep.mubr.bf16.mxu0 0
      %476 = vmatmul.mubr.bf16.gmra.mxu0 %v314
      %v477 = vpop.f32.mrf.mxu0
      %v478 = vadd.f32 %v297, %v477
      %v479 = vpop.f32.mrf.mxu0
      %v480 = vadd.f32 %v301, %v479
      %v481 = vpop.f32.mrf.mxu0
      %v482 = vpop.f32.mrf.mxu0
      %483 = vdwg.mxu0
      %484 = vmatprep.subr.bf16.mxu0 0
      %485 = vmatpush1.bf16.msra.mxu0 %v418
      %486 = vmatprep.subr.bf16.mxu0 0
      %487 = vmatpush1.bf16.msra.mxu0 %v415
      %488 = vmatprep.subr.bf16.mxu0 0
      %489 = vmatpush1.bf16.msra.mxu0 %v412
      %490 = vmatprep.subr.bf16.mxu0 0
      %491 = vmatpush1.bf16.msra.mxu0 %v409
      %492 = vmatprep.subr.bf16.mxu0 0
      %493 = vmatpush1.bf16.msra.mxu0 %v406
      %494 = vmatprep.subr.bf16.mxu0 0
      %495 = vmatpush1.bf16.msra.mxu0 %v403
      %496 = vmatprep.subr.bf16.mxu0 0
      %497 = vmatpush1.bf16.msra.mxu0 %v400
      %498 = vmatprep.subr.bf16.mxu0 0
      %499 = vmatpush1.bf16.msra.mxu0 %v397
      %500 = vmatprep.subr.bf16.mxu0 0
      %501 = vmatpush2.bf16.msra.mxu0 0
      %502 = vmatprep.subr.bf16.mxu0 0
      %503 = vmatpush2.bf16.msra.mxu0 0
      %504 = vmatprep.subr.bf16.mxu0 0
      %505 = vmatpush2.bf16.msra.mxu0 0
      %506 = vmatprep.subr.bf16.mxu0 0
      %507 = vmatpush2.bf16.msra.mxu0 0
      %508 = vmatprep.subr.bf16.mxu0 0
      %509 = vmatpush2.bf16.msra.mxu0 0
      %510 = vmatprep.subr.bf16.mxu0 0
      %511 = vmatpush2.bf16.msra.mxu0 0
      %512 = vmatprep.subr.bf16.mxu0 0
      %513 = vmatpush2.bf16.msra.mxu0 0
      %514 = vmatprep.subr.bf16.mxu0 0
      %515 = vmatpush2.bf16.msra.mxu0 0
      %516 = vmatprep.mubr.bf16.mxu0 0
      %517 = vmatmul.mubr.bf16.gmra.mxu0 %v314
      %v518 = vpop.f32.mrf.mxu0
      %v519 = vadd.f32 %v305, %v518
      %v520 = vpop.f32.mrf.mxu0
      %v521 = vpop.f32.mrf.mxu0
      %v522 = vpop.f32.mrf.mxu0
      %523 = vdwg.mxu0
      %v524 = vadd.f32 %v310, %v478
      %v525 = vxor.u32 %v524, 2147483648
      %v526 = vmul.f32 %v525, 1.442695
      %v527 = vpow.pop %v526
      %v528 = vadd.f32 %v527, 1.0
      %v529 = vrcp.pop %v528
      %v530 = vmul.f32 1.0, %v529
      %v531 = vadd.f32 %v311, %v480
      %v532 = vxor.u32 %v531, 2147483648
      %v533 = vmul.f32 %v532, 1.442695
      %v534 = vpow.pop %v533
      %v535 = vadd.f32 %v534, 1.0
      %v536 = vrcp.pop %v535
      %v537 = vmul.f32 1.0, %v536
      %v538 = vmul.f32 %v530, %v519
      %v539 = vadd.f32 %v312, %v538
      %v540 = vtanh.pop %v539
      %v541 = vsub.f32 1.0, %v537
      %v542 = vmul.f32 %v541, %v540
      %v543 = vmul.f32 %v537, %v309
      %v544 = vadd.f32 %v542, %v543
      %vm545 = vcmp.gt.f32.partialorder %v313, 0.0
      %v546 = vsel %vm545, 1, 0
      %547 = vset.pattern.permute.xlu0 0
      %548 = vperm.xlu0 %547, %v546
      %v549 = vpop.permute.xlu0 %548
      %vm550 = vcmp.eq.s32.totalorder %v549, 1
      %v551 = vsel %vm550, %v544, %v309
      %553 = vset.pattern.permute.xlu0 0
      %554 = vperm.xlu0 %553, %v313
      %v555 = vpop.permute.xlu0 %554
      %v557 = vmul.f32 %v551, %v555
      %558 = vst [vmem:[%s251] sm:$0xff] %v557
      %s559 = scalar_lea.vmem %s239, 24
      %v560 = vld [vmem:[%s559] sm:$0xff]
      %v561 = vld [vmem:[%s559 + $0x8] sm:$0xff]
      %v562 = vld [vmem:[%s559 + $0x10] sm:$0xff]
      %s563 = scalar_lea.vmem %s245, 8
      %v564 = vld [vmem:[%s563] sm:$0xff]
      %v565 = vpack.c.bf16 %v551, %v551
      %566 = vmatprep.subr.bf16.mxu0 %v417
      %567 = vmatpush1.bf16.msra.mxu0 %v416
      %568 = vmatprep.subr.bf16.mxu0 %v414
      %569 = vmatpush1.bf16.msra.mxu0 %v413
      %570 = vmatprep.subr.bf16.mxu0 %v411
      %571 = vmatpush1.bf16.msra.mxu0 %v410
      %572 = vmatprep.subr.bf16.mxu0 %v408
      %573 = vmatpush1.bf16.msra.mxu0 %v407
      %574 = vmatprep.subr.bf16.mxu0 %v405
      %575 = vmatpush1.bf16.msra.mxu0 %v404
      %576 = vmatprep.subr.bf16.mxu0 %v402
      %577 = vmatpush1.bf16.msra.mxu0 %v401
      %578 = vmatprep.subr.bf16.mxu0 %v399
      %579 = vmatpush1.bf16.msra.mxu0 %v398
      %580 = vmatprep.subr.bf16.mxu0 %v396
      %581 = vmatpush1.bf16.msra.mxu0 %v395
      %582 = vmatprep.subr.bf16.mxu0 0
      %583 = vmatpush2.bf16.msra.mxu0 0
      %584 = vmatprep.subr.bf16.mxu0 0
      %585 = vmatpush2.bf16.msra.mxu0 0
      %586 = vmatprep.subr.bf16.mxu0 0
      %587 = vmatpush2.bf16.msra.mxu0 0
      %588 = vmatprep.subr.bf16.mxu0 0
      %589 = vmatpush2.bf16.msra.mxu0 0
      %590 = vmatprep.subr.bf16.mxu0 0
      %591 = vmatpush2.bf16.msra.mxu0 0
      %592 = vmatprep.subr.bf16.mxu0 0
      %593 = vmatpush2.bf16.msra.mxu0 0
      %594 = vmatprep.subr.bf16.mxu0 0
      %595 = vmatpush2.bf16.msra.mxu0 0
      %596 = vmatprep.subr.bf16.mxu0 0
      %597 = vmatpush2.bf16.msra.mxu0 0
      %598 = vmatprep.mubr.bf16.mxu0 0
      %599 = vmatmul.mubr.bf16.gmra.mxu0 %v565
      %v600 = vpop.f32.mrf.mxu0
      %v601 = vadd.f32 %v297, %v600
      %v602 = vpop.f32.mrf.mxu0
      %v603 = vadd.f32 %v301, %v602
      %v604 = vpop.f32.mrf.mxu0
      %v605 = vpop.f32.mrf.mxu0
      %606 = vdwg.mxu0
      %607 = vmatprep.subr.bf16.mxu0 0
      %608 = vmatpush1.bf16.msra.mxu0 %v418
      %609 = vmatprep.subr.bf16.mxu0 0
      %610 = vmatpush1.bf16.msra.mxu0 %v415
      %611 = vmatprep.subr.bf16.mxu0 0
      %612 = vmatpush1.bf16.msra.mxu0 %v412
      %613 = vmatprep.subr.bf16.mxu0 0
      %614 = vmatpush1.bf16.msra.mxu0 %v409
      %615 = vmatprep.subr.bf16.mxu0 0
      %616 = vmatpush1.bf16.msra.mxu0 %v406
      %617 = vmatprep.subr.bf16.mxu0 0
      %618 = vmatpush1.bf16.msra.mxu0 %v403
      %619 = vmatprep.subr.bf16.mxu0 0
      %620 = vmatpush1.bf16.msra.mxu0 %v400
      %621 = vmatprep.subr.bf16.mxu0 0
      %622 = vmatpush1.bf16.msra.mxu0 %v397
      %623 = vmatprep.subr.bf16.mxu0 0
      %624 = vmatpush2.bf16.msra.mxu0 0
      %625 = vmatprep.subr.bf16.mxu0 0
      %626 = vmatpush2.bf16.msra.mxu0 0
      %627 = vmatprep.subr.bf16.mxu0 0
      %628 = vmatpush2.bf16.msra.mxu0 0
      %629 = vmatprep.subr.bf16.mxu0 0
      %630 = vmatpush2.bf16.msra.mxu0 0
      %631 = vmatprep.subr.bf16.mxu0 0
      %632 = vmatpush2.bf16.msra.mxu0 0
      %633 = vmatprep.subr.bf16.mxu0 0
      %634 = vmatpush2.bf16.msra.mxu0 0
      %635 = vmatprep.subr.bf16.mxu0 0
      %636 = vmatpush2.bf16.msra.mxu0 0
      %637 = vmatprep.subr.bf16.mxu0 0
      %638 = vmatpush2.bf16.msra.mxu0 0
      %639 = vmatprep.mubr.bf16.mxu0 0
      %640 = vmatmul.mubr.bf16.gmra.mxu0 %v565
      %v641 = vpop.f32.mrf.mxu0
      %v642 = vadd.f32 %v305, %v641
      %v643 = vpop.f32.mrf.mxu0
      %v644 = vpop.f32.mrf.mxu0
      %v645 = vpop.f32.mrf.mxu0
      %646 = vdwg.mxu0
      %v647 = vadd.f32 %v560, %v601
      %v648 = vxor.u32 %v647, 2147483648
      %v649 = vmul.f32 %v648, 1.442695
      %v650 = vpow.pop %v649
      %v651 = vadd.f32 %v650, 1.0
      %v652 = vrcp.pop %v651
      %v653 = vmul.f32 1.0, %v652
      %v654 = vadd.f32 %v561, %v603
      %v655 = vxor.u32 %v654, 2147483648
      %v656 = vmul.f32 %v655, 1.442695
      %v657 = vpow.pop %v656
      %v658 = vadd.f32 %v657, 1.0
      %v659 = vrcp.pop %v658
      %v660 = vmul.f32 1.0, %v659
      %v661 = vmul.f32 %v653, %v642
      %v662 = vadd.f32 %v562, %v661
      %v663 = vtanh.pop %v662
      %v664 = vsub.f32 1.0, %v660
      %v665 = vmul.f32 %v664, %v663
      %v666 = vmul.f32 %v660, %v551
      %v667 = vadd.f32 %v665, %v666
      %vm668 = vcmp.gt.f32.partialorder %v564, 0.0
      %v669 = vsel %vm668, 1, 0
      %670 = vset.pattern.permute.xlu0 0
      %671 = vperm.xlu0 %670, %v669
      %v672 = vpop.permute.xlu0 %671
      %vm673 = vcmp.eq.s32.totalorder %v672, 1
      %v674 = vsel %vm673, %v667, %v551
      %676 = vset.pattern.permute.xlu0 0
      %677 = vperm.xlu0 %676, %v564
      %v678 = vpop.permute.xlu0 %677
      %v680 = vmul.f32 %v674, %v678
      %s681 = scalar_lea.vmem %s251, 8
      %682 = vst [vmem:[%s681] sm:$0xff] %v680
      %s683 = scalar_lea.vmem %s239, 48
      %v684 = vld [vmem:[%s683] sm:$0xff]
      %v685 = vld [vmem:[%s683 + $0x8] sm:$0xff]
      %v686 = vld [vmem:[%s683 + $0x10] sm:$0xff]
      %s687 = scalar_lea.vmem %s245, 16
      %v688 = vld [vmem:[%s687] sm:$0xff]
      %v689 = vpack.c.bf16 %v674, %v674
      %690 = vmatprep.subr.bf16.mxu0 %v417
      %691 = vmatpush1.bf16.msra.mxu0 %v416
      %692 = vmatprep.subr.bf16.mxu0 %v414
      %693 = vmatpush1.bf16.msra.mxu0 %v413
      %694 = vmatprep.subr.bf16.mxu0 %v411
      %695 = vmatpush1.bf16.msra.mxu0 %v410
      %696 = vmatprep.subr.bf16.mxu0 %v408
      %697 = vmatpush1.bf16.msra.mxu0 %v407
      %698 = vmatprep.subr.bf16.mxu0 %v405
      %699 = vmatpush1.bf16.msra.mxu0 %v404
      %700 = vmatprep.subr.bf16.mxu0 %v402
      %701 = vmatpush1.bf16.msra.mxu0 %v401
      %702 = vmatprep.subr.bf16.mxu0 %v399
      %703 = vmatpush1.bf16.msra.mxu0 %v398
      %704 = vmatprep.subr.bf16.mxu0 %v396
      %705 = vmatpush1.bf16.msra.mxu0 %v395
      %706 = vmatprep.subr.bf16.mxu0 0
      %707 = vmatpush2.bf16.msra.mxu0 0
      %708 = vmatprep.subr.bf16.mxu0 0
      %709 = vmatpush2.bf16.msra.mxu0 0
      %710 = vmatprep.subr.bf16.mxu0 0
      %711 = vmatpush2.bf16.msra.mxu0 0
      %712 = vmatprep.subr.bf16.mxu0 0
      %713 = vmatpush2.bf16.msra.mxu0 0
      %714 = vmatprep.subr.bf16.mxu0 0
      %715 = vmatpush2.bf16.msra.mxu0 0
      %716 = vmatprep.subr.bf16.mxu0 0
      %717 = vmatpush2.bf16.msra.mxu0 0
      %718 = vmatprep.subr.bf16.mxu0 0
      %719 = vmatpush2.bf16.msra.mxu0 0
      %720 = vmatprep.subr.bf16.mxu0 0
      %721 = vmatpush2.bf16.msra.mxu0 0
      %722 = vmatprep.mubr.bf16.mxu0 0
      %723 = vmatmul.mubr.bf16.gmra.mxu0 %v689
      %v724 = vpop.f32.mrf.mxu0
      %v725 = vadd.f32 %v297, %v724
      %v726 = vpop.f32.mrf.mxu0
      %v727 = vadd.f32 %v301, %v726
      %v728 = vpop.f32.mrf.mxu0
      %v729 = vpop.f32.mrf.mxu0
      %730 = vdwg.mxu0
      %731 = vmatprep.subr.bf16.mxu0 0
      %732 = vmatpush1.bf16.msra.mxu0 %v418
      %733 = vmatprep.subr.bf16.mxu0 0
      %734 = vmatpush1.bf16.msra.mxu0 %v415
      %735 = vmatprep.subr.bf16.mxu0 0
      %736 = vmatpush1.bf16.msra.mxu0 %v412
      %737 = vmatprep.subr.bf16.mxu0 0
      %738 = vmatpush1.bf16.msra.mxu0 %v409
      %739 = vmatprep.subr.bf16.mxu0 0
      %740 = vmatpush1.bf16.msra.mxu0 %v406
      %741 = vmatprep.subr.bf16.mxu0 0
      %742 = vmatpush1.bf16.msra.mxu0 %v403
      %743 = vmatprep.subr.bf16.mxu0 0
      %744 = vmatpush1.bf16.msra.mxu0 %v400
      %745 = vmatprep.subr.bf16.mxu0 0
      %746 = vmatpush1.bf16.msra.mxu0 %v397
      %747 = vmatprep.subr.bf16.mxu0 0
      %748 = vmatpush2.bf16.msra.mxu0 0
      %749 = vmatprep.subr.bf16.mxu0 0
      %750 = vmatpush2.bf16.msra.mxu0 0
      %751 = vmatprep.subr.bf16.mxu0 0
      %752 = vmatpush2.bf16.msra.mxu0 0
      %753 = vmatprep.subr.bf16.mxu0 0
      %754 = vmatpush2.bf16.msra.mxu0 0
      %755 = vmatprep.subr.bf16.mxu0 0
      %756 = vmatpush2.bf16.msra.mxu0 0
      %757 = vmatprep.subr.bf16.mxu0 0
      %758 = vmatpush2.bf16.msra.mxu0 0
      %759 = vmatprep.subr.bf16.mxu0 0
      %760 = vmatpush2.bf16.msra.mxu0 0
      %761 = vmatprep.subr.bf16.mxu0 0
      %762 = vmatpush2.bf16.msra.mxu0 0
      %763 = vmatprep.mubr.bf16.mxu0 0
      %764 = vmatmul.mubr.bf16.gmra.mxu0 %v689
      %v765 = vpop.f32.mrf.mxu0
      %v766 = vadd.f32 %v305, %v765
      %v767 = vpop.f32.mrf.mxu0
      %v768 = vpop.f32.mrf.mxu0
      %v769 = vpop.f32.mrf.mxu0
      %770 = vdwg.mxu0
      %v771 = vadd.f32 %v684, %v725
      %v772 = vxor.u32 %v771, 2147483648
      %v773 = vmul.f32 %v772, 1.442695
      %v774 = vpow.pop %v773
      %v775 = vadd.f32 %v774, 1.0
      %v776 = vrcp.pop %v775
      %v777 = vmul.f32 1.0, %v776
      %v778 = vadd.f32 %v685, %v727
      %v779 = vxor.u32 %v778, 2147483648
      %v780 = vmul.f32 %v779, 1.442695
      %v781 = vpow.pop %v780
      %v782 = vadd.f32 %v781, 1.0
      %v783 = vrcp.pop %v782
      %v784 = vmul.f32 1.0, %v783
      %v785 = vmul.f32 %v777, %v766
      %v786 = vadd.f32 %v686, %v785
      %v787 = vtanh.pop %v786
      %v788 = vsub.f32 1.0, %v784
      %v789 = vmul.f32 %v788, %v787
      %v790 = vmul.f32 %v784, %v674
      %v791 = vadd.f32 %v789, %v790
      %vm792 = vcmp.gt.f32.partialorder %v688, 0.0
      %v793 = vsel %vm792, 1, 0
      %794 = vset.pattern.permute.xlu0 0
      %795 = vperm.xlu0 %794, %v793
      %v796 = vpop.permute.xlu0 %795
      %vm797 = vcmp.eq.s32.totalorder %v796, 1
      %v798 = vsel %vm797, %v791, %v674
      %800 = vset.pattern.permute.xlu0 0
      %801 = vperm.xlu0 %800, %v688
      %v802 = vpop.permute.xlu0 %801
      %v804 = vmul.f32 %v798, %v802
      %s805 = scalar_lea.vmem %s251, 16
      %806 = vst [vmem:[%s805] sm:$0xff] %v804
      %s807 = scalar_lea.vmem %s239, 72
      %v808 = vld [vmem:[%s807] sm:$0xff]
      %v809 = vld [vmem:[%s807 + $0x8] sm:$0xff]
      %v810 = vld [vmem:[%s807 + $0x10] sm:$0xff]
      %s811 = scalar_lea.vmem %s245, 24
      %v812 = vld [vmem:[%s811] sm:$0xff]
      %v813 = vpack.c.bf16 %v798, %v798
      %814 = vmatprep.subr.bf16.mxu0 %v417
      %815 = vmatpush1.bf16.msra.mxu0 %v416
      %816 = vmatprep.subr.bf16.mxu0 %v414
      %817 = vmatpush1.bf16.msra.mxu0 %v413
      %818 = vmatprep.subr.bf16.mxu0 %v411
      %819 = vmatpush1.bf16.msra.mxu0 %v410
      %820 = vmatprep.subr.bf16.mxu0 %v408
      %821 = vmatpush1.bf16.msra.mxu0 %v407
      %822 = vmatprep.subr.bf16.mxu0 %v405
      %823 = vmatpush1.bf16.msra.mxu0 %v404
      %824 = vmatprep.subr.bf16.mxu0 %v402
      %825 = vmatpush1.bf16.msra.mxu0 %v401
      %826 = vmatprep.subr.bf16.mxu0 %v399
      %827 = vmatpush1.bf16.msra.mxu0 %v398
      %828 = vmatprep.subr.bf16.mxu0 %v396
      %829 = vmatpush1.bf16.msra.mxu0 %v395
      %830 = vmatprep.subr.bf16.mxu0 0
      %831 = vmatpush2.bf16.msra.mxu0 0
      %832 = vmatprep.subr.bf16.mxu0 0
      %833 = vmatpush2.bf16.msra.mxu0 0
      %834 = vmatprep.subr.bf16.mxu0 0
      %835 = vmatpush2.bf16.msra.mxu0 0
      %836 = vmatprep.subr.bf16.mxu0 0
      %837 = vmatpush2.bf16.msra.mxu0 0
      %838 = vmatprep.subr.bf16.mxu0 0
      %839 = vmatpush2.bf16.msra.mxu0 0
      %840 = vmatprep.subr.bf16.mxu0 0
      %841 = vmatpush2.bf16.msra.mxu0 0
      %842 = vmatprep.subr.bf16.mxu0 0
      %843 = vmatpush2.bf16.msra.mxu0 0
      %844 = vmatprep.subr.bf16.mxu0 0
      %845 = vmatpush2.bf16.msra.mxu0 0
      %846 = vmatprep.mubr.bf16.mxu0 0
      %847 = vmatmul.mubr.bf16.gmra.mxu0 %v813
      %v848 = vpop.f32.mrf.mxu0
      %v849 = vadd.f32 %v297, %v848
      %v850 = vpop.f32.mrf.mxu0
      %v851 = vadd.f32 %v301, %v850
      %v852 = vpop.f32.mrf.mxu0
      %v853 = vpop.f32.mrf.mxu0
      %854 = vdwg.mxu0
      %855 = vmatprep.subr.bf16.mxu0 0
      %856 = vmatpush1.bf16.msra.mxu0 %v418
      %857 = vmatprep.subr.bf16.mxu0 0
      %858 = vmatpush1.bf16.msra.mxu0 %v415
      %859 = vmatprep.subr.bf16.mxu0 0
      %860 = vmatpush1.bf16.msra.mxu0 %v412
      %861 = vmatprep.subr.bf16.mxu0 0
      %862 = vmatpush1.bf16.msra.mxu0 %v409
      %863 = vmatprep.subr.bf16.mxu0 0
      %864 = vmatpush1.bf16.msra.mxu0 %v406
      %865 = vmatprep.subr.bf16.mxu0 0
      %866 = vmatpush1.bf16.msra.mxu0 %v403
      %867 = vmatprep.subr.bf16.mxu0 0
      %868 = vmatpush1.bf16.msra.mxu0 %v400
      %869 = vmatprep.subr.bf16.mxu0 0
      %870 = vmatpush1.bf16.msra.mxu0 %v397
      %871 = vmatprep.subr.bf16.mxu0 0
      %872 = vmatpush2.bf16.msra.mxu0 0
      %873 = vmatprep.subr.bf16.mxu0 0
      %874 = vmatpush2.bf16.msra.mxu0 0
      %875 = vmatprep.subr.bf16.mxu0 0
      %876 = vmatpush2.bf16.msra.mxu0 0
      %877 = vmatprep.subr.bf16.mxu0 0
      %878 = vmatpush2.bf16.msra.mxu0 0
      %879 = vmatprep.subr.bf16.mxu0 0
      %880 = vmatpush2.bf16.msra.mxu0 0
      %881 = vmatprep.subr.bf16.mxu0 0
      %882 = vmatpush2.bf16.msra.mxu0 0
      %883 = vmatprep.subr.bf16.mxu0 0
      %884 = vmatpush2.bf16.msra.mxu0 0
      %885 = vmatprep.subr.bf16.mxu0 0
      %886 = vmatpush2.bf16.msra.mxu0 0
      %887 = vmatprep.mubr.bf16.mxu0 0
      %888 = vmatmul.mubr.bf16.gmra.mxu0 %v813
      %v889 = vpop.f32.mrf.mxu0
      %v890 = vadd.f32 %v305, %v889
      %v891 = vpop.f32.mrf.mxu0
      %v892 = vpop.f32.mrf.mxu0
      %v893 = vpop.f32.mrf.mxu0
      %894 = vdwg.mxu0
      %v895 = vadd.f32 %v808, %v849
      %v896 = vxor.u32 %v895, 2147483648
      %v897 = vmul.f32 %v896, 1.442695
      %v898 = vpow.pop %v897
      %v899 = vadd.f32 %v898, 1.0
      %v900 = vrcp.pop %v899
      %v901 = vmul.f32 1.0, %v900
      %v902 = vadd.f32 %v809, %v851
      %v903 = vxor.u32 %v902, 2147483648
      %v904 = vmul.f32 %v903, 1.442695
      %v905 = vpow.pop %v904
      %v906 = vadd.f32 %v905, 1.0
      %v907 = vrcp.pop %v906
      %v908 = vmul.f32 1.0, %v907
      %v909 = vmul.f32 %v901, %v890
      %v910 = vadd.f32 %v810, %v909
      %v911 = vtanh.pop %v910
      %v912 = vsub.f32 1.0, %v908
      %v913 = vmul.f32 %v912, %v911
      %v914 = vmul.f32 %v908, %v798
      %v915 = vadd.f32 %v913, %v914
      %vm916 = vcmp.gt.f32.partialorder %v812, 0.0
      %v917 = vsel %vm916, 1, 0
      %918 = vset.pattern.permute.xlu0 0
      %919 = vperm.xlu0 %918, %v917
      %v920 = vpop.permute.xlu0 %919
      %vm921 = vcmp.eq.s32.totalorder %v920, 1
      %v922 = vsel %vm921, %v915, %v798
      %924 = vset.pattern.permute.xlu0 0
      %925 = vperm.xlu0 %924, %v812
      %v926 = vpop.permute.xlu0 %925
      %v928 = vmul.f32 %v922, %v926
      %s929 = scalar_lea.vmem %s251, 24
      %930 = vst [vmem:[%s929] sm:$0xff] %v928
      %931 = vst [vmem:[#allocation2] sm:$0xff] %v922
      %s932 = smul.u32 4, %s16
      %p933 = scmp.lt.s32.totalorder %s932, 7
      %s934 = scalar_select %p933, %s932, 7
      %s935 = smul.addr %s934, 8
      %s936 = scalar_lea.vmem %s5, %s935
      // Predicated region
      $region45: #{rnnvae_forward.8} parent=39 // pred_check
        %p937 = pneg %p149
      $region46: #{rnnvae_forward.8} parent=39 // pred_check_branch
        %939 = sbr.rel (%p937) target = $region48
      $region47: #{rnnvae_forward.8} parent=39 // pred_region
        %s940 = smul.u32 4, %s16
      $region48: #{rnnvae_forward.8} parent=39 // pred_fallthru
        _
    $region40: #{rnnvae_forward.8} parent=5 // pred_fallthru
      _
    %p941 = scmp.le.s32.totalorder 2, %s11
    // Predicated region
    $region49: #{rnnvae_forward.8} parent=5 // pred_check
      %p942 = pneg %p941
    $region50: #{rnnvae_forward.8} parent=5 // pred_check_branch
      %944 = sbr.rel (%p942) target = $region52
    $region51: #{rnnvae_forward.8} parent=5 // pred_region
      %s945 = ssub.s32 %s11, 2
      // Predicated region
      $region53: #{rnnvae_forward.8} parent=51 // pred_check
        %p946 = pneg %p155
      $region54: #{rnnvae_forward.8} parent=51 // pred_check_branch
        %948 = sbr.rel (%p946) target = $region56
      $region55: #{rnnvae_forward.8} parent=51 // pred_region
        %s949 = smul.u32 4, %s17
        %p950 = scmp.lt.s32.totalorder %s949, 7
        %s951 = scalar_select %p950, %s949, 7
        %s952 = smul.addr %s951, 8
        %s953 = scalar_lea.vmem %s5, %s952
      $region56: #{rnnvae_forward.8} parent=51 // pred_fallthru
        _
    $region52: #{rnnvae_forward.8} parent=5 // pred_fallthru
      _
  $region6: #{rnnvae_forward.8} parent=0 // loop_footer
    %s15 = sadd.s32 1, %s11
  $region7: #{rnnvae_forward.8} parent=0 // loop_footer_branch
    %10 = sbr.rel target = $region3
  $region8: #{rnnvae_forward.8} parent=0 // loop_exit
    _

// kernel: rnnvae_forward.9
$region0: #{rnnvae_forward.9}
  #allocation0 [shape = 'u32[]', space=smem, size = 0x4, offset = 0x4, fixed_abs, tag = 'smem constant byte address 0x4 - core index']
  #allocation1 [shape = 'u32[144,128]{1,0:T(1,128)}', space=vmem, size = 0x12000, scoped, tag = 'internal scratch']
  %s0 = inlined_call_operand.vmem [shape: f32[64,128], index: 0, kind: input, shape index: {}]
  %s1 = inlined_call_operand.vmem [shape: s32[64,1], index: 1, kind: input, shape index: {}]
  %s2 = inlined_call_operand.vmem [shape: f32[64,1], index: 2, kind: input, shape index: {}]
  %s3 = inlined_call_operand.vmem [shape: bf16[128,256], index: 3, kind: input, shape index: {}]
  %s4 = inlined_call_operand.vmem [shape: f32[1,256], index: 4, kind: input, shape index: {}]
  %s5 = inlined_call_operand.hbm [shape: f32[1,1], index: 5, kind: output, shape index: {}]
  %s6 = sld [smem:[#allocation0]]
  $region57: #{rnnvae_forward.9} parent=0
    _
  %s8 = ssub.s32 1, %s6
  %s9 = scalar_select 0, %s8, %s6
  $region1: #{rnnvae_forward.9} parent=0
    #allocation2 [shape = 'u8[512]{0}', space=smem, size = 0x200, scoped, tag = 'output window, operand 0, single buffered']
    #allocation3 [shape = 's32[2]{0}', space=sflag, size = 0x8, scoped, tag = 'scoped memory for rnnvae_forward.9']
    %10 = vsyncpa [#allocation3], 0
    loop: start=0, step=1, limit=4
    $region2: #{rnnvae_forward.9} parent=1 // loop_pre_header
      _
    $region3: #{rnnvae_forward.9} parent=1 // loop_header
      %s12 = sphi 0, %s16
      %p13 = scmp.ge.s32.totalorder %s12, 4
      %s22 = sphi 0, %s24
      %s25 = sphi 0, %s22
      %s26 = sphi 0, %s25
      %s42 = sphi 0, %s26
      %s48 = sphi 0, %s50
      %s51 = sphi 0, %s48
      %s52 = sphi 0, %s51
      %s68 = sphi 0, %s52
      %s74 = sphi 0, %s76
      %s77 = sphi 0, %s74
      %s78 = sphi 0, %s77
      %s94 = sphi 0, %s78
      %s98 = sphi 0, %s98
      %s100 = sphi 0, %s98
      %s101 = sphi 0, %s100
      %s115 = sphi 0, %s101
      %s119 = sphi 0, %s119
      %s121 = sphi 0, %s119
      %s122 = sphi 0, %s121
      %s136 = sphi 0, %s122
      %s140 = sphi 0, %s140
      %s142 = sphi 0, %s140
      %s143 = sphi 0, %s142
      %s157 = sphi 0, %s143
    $region4: #{rnnvae_forward.9} parent=1 // loop_header_branch
      %15 = sbr.rel (%p13) target = $region8
    $region5: #{rnnvae_forward.9} parent=1 // loop_body
      %s17 = ssub.s32 %s12, 1
      %s18 = ssub.s32 %s12, 2
      %s19 = sadd.s32 %s12, 1
      %s20 = ssub.s32 %s12, %s19
      %p21 = scmp.eq.s32.totalorder %s20, 0
      %s23 = sadd.s32 %s22, 1
      %s24 = scalar_select %p21, %s22, %s23
      %p27 = pneg %p21
      %p28 = scmp.eq.s32.totalorder %s12, 1
      %p29 = por %p27, %p28
      %p30 = scmp.ne.s32.totalorder %s22, %s25
      %p31 = scmp.eq.s32.totalorder %s12, 0
      %p32 = por %p30, %p31
      %p33 = scmp.ne.s32.totalorder %s22, %s25
      %p34 = scmp.eq.s32.totalorder %s17, 1
      %p35 = por %p33, %p34
      %p36 = scmp.ne.s32.totalorder %s25, %s26
      %p37 = scmp.eq.s32.totalorder %s17, 0
      %p38 = por %p36, %p37
      %p39 = scmp.ne.s32.totalorder %s25, %s26
      %p40 = scmp.eq.s32.totalorder %s18, 1
      %p41 = por %p39, %p40
      %p43 = scmp.ne.s32.totalorder %s26, %s42
      %p44 = scmp.eq.s32.totalorder %s18, 0
      %p45 = por %p43, %p44
      %s46 = ssub.s32 %s12, %s19
      %p47 = scmp.eq.s32.totalorder %s46, 0
      %s49 = sadd.s32 %s48, 1
      %s50 = scalar_select %p47, %s48, %s49
      %p53 = pneg %p47
      %p54 = scmp.eq.s32.totalorder %s12, 1
      %p55 = por %p53, %p54
      %p56 = scmp.ne.s32.totalorder %s48, %s51
      %p57 = scmp.eq.s32.totalorder %s12, 0
      %p58 = por %p56, %p57
      %p59 = scmp.ne.s32.totalorder %s48, %s51
      %p60 = scmp.eq.s32.totalorder %s17, 1
      %p61 = por %p59, %p60
      %p62 = scmp.ne.s32.totalorder %s51, %s52
      %p63 = scmp.eq.s32.totalorder %s17, 0
      %p64 = por %p62, %p63
      %p65 = scmp.ne.s32.totalorder %s51, %s52
      %p66 = scmp.eq.s32.totalorder %s18, 1
      %p67 = por %p65, %p66
      %p69 = scmp.ne.s32.totalorder %s52, %s68
      %p70 = scmp.eq.s32.totalorder %s18, 0
      %p71 = por %p69, %p70
      %s72 = ssub.s32 %s12, %s19
      %p73 = scmp.eq.s32.totalorder %s72, 0
      %s75 = sadd.s32 %s74, 1
      %s76 = scalar_select %p73, %s74, %s75
      %p79 = pneg %p73
      %p80 = scmp.eq.s32.totalorder %s12, 1
      %p81 = por %p79, %p80
      %p82 = scmp.ne.s32.totalorder %s74, %s77
      %p83 = scmp.eq.s32.totalorder %s12, 0
      %p84 = por %p82, %p83
      %p85 = scmp.ne.s32.totalorder %s74, %s77
      %p86 = scmp.eq.s32.totalorder %s17, 1
      %p87 = por %p85, %p86
      %p88 = scmp.ne.s32.totalorder %s77, %s78
      %p89 = scmp.eq.s32.totalorder %s17, 0
      %p90 = por %p88, %p89
      %p91 = scmp.ne.s32.totalorder %s77, %s78
      %p92 = scmp.eq.s32.totalorder %s18, 1
      %p93 = por %p91, %p92
      %p95 = scmp.ne.s32.totalorder %s78, %s94
      %p96 = scmp.eq.s32.totalorder %s18, 0
      %p97 = por %p95, %p96
      %s99 = sadd.s32 %s98, 1
      %p102 = scmp.eq.s32.totalorder %s12, 1
      %p103 = scmp.ne.s32.totalorder %s98, %s100
      %p104 = scmp.eq.s32.totalorder %s12, 0
      %p105 = por %p103, %p104
      %p106 = scmp.ne.s32.totalorder %s98, %s100
      %p107 = scmp.eq.s32.totalorder %s17, 1
      %p108 = por %p106, %p107
      %p109 = scmp.ne.s32.totalorder %s100, %s101
      %p110 = scmp.eq.s32.totalorder %s17, 0
      %p111 = por %p109, %p110
      %p112 = scmp.ne.s32.totalorder %s100, %s101
      %p113 = scmp.eq.s32.totalorder %s18, 1
      %p114 = por %p112, %p113
      %p116 = scmp.ne.s32.totalorder %s101, %s115
      %p117 = scmp.eq.s32.totalorder %s18, 0
      %p118 = por %p116, %p117
      %s120 = sadd.s32 %s119, 1
      %p123 = scmp.eq.s32.totalorder %s12, 1
      %p124 = scmp.ne.s32.totalorder %s119, %s121
      %p125 = scmp.eq.s32.totalorder %s12, 0
      %p126 = por %p124, %p125
      %p127 = scmp.ne.s32.totalorder %s119, %s121
      %p128 = scmp.eq.s32.totalorder %s17, 1
      %p129 = por %p127, %p128
      %p130 = scmp.ne.s32.totalorder %s121, %s122
      %p131 = scmp.eq.s32.totalorder %s17, 0
      %p132 = por %p130, %p131
      %p133 = scmp.ne.s32.totalorder %s121, %s122
      %p134 = scmp.eq.s32.totalorder %s18, 1
      %p135 = por %p133, %p134
      %p137 = scmp.ne.s32.totalorder %s122, %s136
      %p138 = scmp.eq.s32.totalorder %s18, 0
      %p139 = por %p137, %p138
      %s141 = sadd.s32 %s140, 1
      %p144 = scmp.eq.s32.totalorder %s12, 1
      %p145 = scmp.ne.s32.totalorder %s140, %s142
      %p146 = scmp.eq.s32.totalorder %s12, 0
      %p147 = por %p145, %p146
      %p148 = scmp.ne.s32.totalorder %s140, %s142
      %p149 = scmp.eq.s32.totalorder %s17, 1
      %p150 = por %p148, %p149
      %p151 = scmp.ne.s32.totalorder %s142, %s143
      %p152 = scmp.eq.s32.totalorder %s17, 0
      %p153 = por %p151, %p152
      %p154 = scmp.ne.s32.totalorder %s142, %s143
      %p155 = scmp.eq.s32.totalorder %s18, 1
      %p156 = por %p154, %p155
      %p158 = scmp.ne.s32.totalorder %s143, %s157
      %p159 = scmp.eq.s32.totalorder %s18, 0
      %p160 = por %p158, %p159
      %p161 = scmp.le.s32.totalorder 1, %s12
      %p162 = scmp.lt.s32.totalorder %s12, 3
      %p163 = pnand %p161, %p162
      %p164 = pneg %p163
      // Predicated region
      $region9: #{rnnvae_forward.9} parent=5 // pred_check
        _
      $region10: #{rnnvae_forward.9} parent=5 // pred_check_branch
        %166 = sbr.rel (%p163) target = $region12
      $region11: #{rnnvae_forward.9} parent=5 // pred_region
        %s167 = ssub.s32 %s12, 1
        // Predicated region
        $region13: #{rnnvae_forward.9} parent=11 // pred_check
          %p168 = pneg %p111
        $region14: #{rnnvae_forward.9} parent=11 // pred_check_branch
          %170 = sbr.rel (%p168) target = $region16
        $region15: #{rnnvae_forward.9} parent=11 // pred_region
          _
        $region16: #{rnnvae_forward.9} parent=11 // pred_fallthru
          _
        // Predicated region
        $region17: #{rnnvae_forward.9} parent=11 // pred_check
          %p171 = pneg %p132
        $region18: #{rnnvae_forward.9} parent=11 // pred_check_branch
          %173 = sbr.rel (%p171) target = $region20
        $region19: #{rnnvae_forward.9} parent=11 // pred_region
          _
        $region20: #{rnnvae_forward.9} parent=11 // pred_fallthru
          _
      $region12: #{rnnvae_forward.9} parent=5 // pred_fallthru
        _
      %p174 = scmp.lt.s32.totalorder %s12, 2
      // Predicated region
      $region21: #{rnnvae_forward.9} parent=5 // pred_check
        %p175 = pneg %p174
      $region22: #{rnnvae_forward.9} parent=5 // pred_check_branch
        %177 = sbr.rel (%p175) target = $region24
      $region23: #{rnnvae_forward.9} parent=5 // pred_region
        // Predicated region
        $region25: #{rnnvae_forward.9} parent=23 // pred_check
          %p178 = pneg %p32
        $region26: #{rnnvae_forward.9} parent=23 // pred_check_branch
          %180 = sbr.rel (%p178) target = $region28
        $region27: #{rnnvae_forward.9} parent=23 // pred_region
          %s181 = smul.u32 4, %s12
          %p182 = scmp.lt.s32.totalorder %s181, 7
          %s183 = scalar_select %p182, %s181, 7
          %s184 = smul.addr %s183, 8
          %s185 = scalar_lea.vmem %s0, %s184
          %s186 = smul.u32 4, %s12
        $region28: #{rnnvae_forward.9} parent=23 // pred_fallthru
          _
        // Predicated region
        $region29: #{rnnvae_forward.9} parent=23 // pred_check
          %p187 = pneg %p58
        $region30: #{rnnvae_forward.9} parent=23 // pred_check_branch
          %189 = sbr.rel (%p187) target = $region32
        $region31: #{rnnvae_forward.9} parent=23 // pred_region
          %s190 = smul.u32 4, %s12
          %p191 = scmp.lt.s32.totalorder %s190, 7
          %s192 = scalar_select %p191, %s190, 7
          %s193 = smul.addr %s192, 8
          %s194 = scalar_lea.vmem %s1, %s193
          %s195 = smul.u32 4, %s12
        $region32: #{rnnvae_forward.9} parent=23 // pred_fallthru
          _
        // Predicated region
        $region33: #{rnnvae_forward.9} parent=23 // pred_check
          %p196 = pneg %p84
        $region34: #{rnnvae_forward.9} parent=23 // pred_check_branch
          %198 = sbr.rel (%p196) target = $region36
        $region35: #{rnnvae_forward.9} parent=23 // pred_region
          %s199 = smul.u32 4, %s12
          %p200 = scmp.lt.s32.totalorder %s199, 7
          %s201 = scalar_select %p200, %s199, 7
          %s202 = smul.addr %s201, 8
          %s203 = scalar_lea.vmem %s2, %s202
          %s204 = smul.u32 4, %s12
        $region36: #{rnnvae_forward.9} parent=23 // pred_fallthru
          _
      $region24: #{rnnvae_forward.9} parent=5 // pred_fallthru
        _
      %p205 = scmp.le.s32.totalorder 1, %s12
      %p206 = scmp.lt.s32.totalorder %s12, 3
      %p207 = pnand %p205, %p206
      %p208 = pneg %p207
      // Predicated region
      $region37: #{rnnvae_forward.9} parent=5 // pred_check
        _
      $region38: #{rnnvae_forward.9} parent=5 // pred_check_branch
        %210 = sbr.rel (%p207) target = $region40
      $region39: #{rnnvae_forward.9} parent=5 // pred_region
        %s211 = ssub.s32 %s12, 1
        %s212 = smul.u32 4, %s17
        %p213 = scmp.lt.s32.totalorder %s212, 7
        %s214 = scalar_select %p213, %s212, 7
        %s215 = smul.addr %s214, 8
        %s216 = scalar_lea.vmem %s0, %s215
        %p217 = pneg %p38
        %p218 = pneg %p35
        %s219 = smul.u32 4, %s17
        %p220 = scmp.lt.s32.totalorder %s219, 7
        %s221 = scalar_select %p220, %s219, 7
        %s222 = smul.addr %s221, 8
        %s223 = scalar_lea.vmem %s1, %s222
        %p224 = pneg %p64
        %p225 = pneg %p61
        %s226 = smul.u32 4, %s17
        %p227 = scmp.lt.s32.totalorder %s226, 7
        %s228 = scalar_select %p227, %s226, 7
        %s229 = smul.addr %s228, 8
        %s230 = scalar_lea.vmem %s2, %s229
        %p231 = pneg %p90
        %p232 = pneg %p87
        %p233 = pneg %p111
        %p234 = pneg %p108
        %p235 = pneg %p132
        %p236 = pneg %p129
        %p237 = pneg %p153
        %p238 = pneg %p150
        %s239 = smul.u32 4, %s17
        %p240 = scmp.lt.s32.totalorder %s239, 7
        %s241 = scalar_select %p240, %s239, 7
        %s242 = smul.addr %s241, 8
        %s243 = scalar_lea.vmem %s0, %s242
        %s244 = smul.u32 4, %s17
        %s245 = smul.u32 4, %s17
        %p246 = scmp.lt.s32.totalorder %s245, 7
        %s247 = scalar_select %p246, %s245, 7
        %s248 = smul.addr %s247, 8
        %s249 = scalar_lea.vmem %s1, %s248
        %s250 = smul.u32 4, %s17
        %s251 = smul.u32 4, %s17
        %p252 = scmp.lt.s32.totalorder %s251, 7
        %s253 = scalar_select %p252, %s251, 7
        %s254 = smul.addr %s253, 8
        %s255 = scalar_lea.vmem %s2, %s254
        %s256 = smul.u32 4, %s17
        %p258 = scmp.eq.s32.totalorder %s17, 0
        // Predicated region
        $region41: #{rnnvae_forward.9} parent=39 // pred_check
          %p259 = pneg %p258
        $region42: #{rnnvae_forward.9} parent=39 // pred_check_branch
          %261 = sbr.rel (%p259) target = $region44
        $region43: #{rnnvae_forward.9} parent=39 // pred_region
          %s262 = scalar_lea.smem [#allocation2], 0
          %263 = sst [smem:[%s262]] 0.0
        $region44: #{rnnvae_forward.9} parent=39 // pred_fallthru
          _
        %v264 = vld [vmem:[%s243] sm:$0xff]
        %v265 = vld [vmem:[%s243 + $0x8] sm:$0xff]
        %v266 = vld [vmem:[%s243 + $0x10] sm:$0xff]
        %v267 = vld [vmem:[%s243 + $0x18] sm:$0xff]
        %v268 = vpack.c.bf16 %v265, %v264
        %v269 = vpack.c.bf16 %v267, %v266
        %v270 = vld [vmem:[%s3] sm:$0xff]
        %v271 = vld [vmem:[%s3 + $0x8] sm:$0xff]
        %v272 = vld [vmem:[%s3 + $0x10] sm:$0xff]
        %v273 = vld [vmem:[%s3 + $0x18] sm:$0xff]
        %v274 = vld [vmem:[%s3 + $0x20] sm:$0xff]
        %v275 = vld [vmem:[%s3 + $0x28] sm:$0xff]
        %v276 = vld [vmem:[%s3 + $0x30] sm:$0xff]
        %v277 = vld [vmem:[%s3 + $0x38] sm:$0xff]
        %v278 = vld [vmem:[%s3 + $0x40] sm:$0xff]
        %v279 = vld [vmem:[%s3 + $0x48] sm:$0xff]
        %v280 = vld [vmem:[%s3 + $0x50] sm:$0xff]
        %v281 = vld [vmem:[%s3 + $0x58] sm:$0xff]
        %v282 = vld [vmem:[%s3 + $0x60] sm:$0xff]
        %v283 = vld [vmem:[%s3 + $0x68] sm:$0xff]
        %v284 = vld [vmem:[%s3 + $0x70] sm:$0xff]
        %v285 = vld [vmem:[%s3 + $0x78] sm:$0xff]
        %v286 = vld [vmem:[%s4] sm:$0x3]
        %v288 = vlaneseq
        %v289 = vshrl.u32 %v288, 7
        %v290 = vsub.s32 0, %v289
        %v291 = vrot.slane %v286, %v290
        %v292 = vlaneseq
        %v293 = vshrl.u32 %v292, 7
        %v294 = vsub.s32 1, %v293
        %v295 = vrot.slane %v286, %v294
        %v314 = vunpack.c.l.b16 %v270
        %v315 = vunpack.c.h.b16 %v270
        %v316 = vunpack.c.l.b16 %v271
        %v317 = vunpack.c.h.b16 %v271
        %v318 = vunpack.c.l.b16 %v272
        %v319 = vunpack.c.h.b16 %v272
        %v320 = vunpack.c.l.b16 %v273
        %v321 = vunpack.c.h.b16 %v273
        %v322 = vunpack.c.l.b16 %v274
        %v323 = vunpack.c.h.b16 %v274
        %v324 = vunpack.c.l.b16 %v275
        %v325 = vunpack.c.h.b16 %v275
        %v326 = vunpack.c.l.b16 %v276
        %v327 = vunpack.c.h.b16 %v276
        %v328 = vunpack.c.l.b16 %v277
        %v329 = vunpack.c.h.b16 %v277
        %v330 = vunpack.c.l.b16 %v278
        %v331 = vunpack.c.h.b16 %v278
        %v332 = vunpack.c.l.b16 %v279
        %v333 = vunpack.c.h.b16 %v279
        %v334 = vunpack.c.l.b16 %v280
        %v335 = vunpack.c.h.b16 %v280
        %v336 = vunpack.c.l.b16 %v281
        %v337 = vunpack.c.h.b16 %v281
        %v338 = vunpack.c.l.b16 %v282
        %v339 = vunpack.c.h.b16 %v282
        %v340 = vunpack.c.l.b16 %v283
        %v341 = vunpack.c.h.b16 %v283
        %v342 = vunpack.c.l.b16 %v284
        %v343 = vunpack.c.h.b16 %v284
        %v344 = vunpack.c.l.b16 %v285
        %v345 = vunpack.c.h.b16 %v285
        %v346 = vpack.c.b16 %v316, %v314
        %v347 = vpack.c.b16 %v317, %v315
        %v348 = vpack.c.b16 %v320, %v318
        %v349 = vpack.c.b16 %v321, %v319
        %v350 = vpack.c.b16 %v324, %v322
        %v351 = vpack.c.b16 %v325, %v323
        %v352 = vpack.c.b16 %v328, %v326
        %v353 = vpack.c.b16 %v329, %v327
        %v354 = vpack.c.b16 %v332, %v330
        %v355 = vpack.c.b16 %v333, %v331
        %v356 = vpack.c.b16 %v336, %v334
        %v357 = vpack.c.b16 %v337, %v335
        %v358 = vpack.c.b16 %v340, %v338
        %v359 = vpack.c.b16 %v341, %v339
        %v360 = vpack.c.b16 %v344, %v342
        %v361 = vpack.c.b16 %v345, %v343
        %378 = vmatprep.subr.bf16.mxu0 %v361
        %379 = vmatpush1.bf16.msra.mxu0 %v360
        %380 = vmatprep.subr.bf16.mxu0 %v359
        %381 = vmatpush1.bf16.msra.mxu0 %v358
        %382 = vmatprep.subr.bf16.mxu0 %v357
        %383 = vmatpush1.bf16.msra.mxu0 %v356
        %384 = vmatprep.subr.bf16.mxu0 %v355
        %385 = vmatpush1.bf16.msra.mxu0 %v354
        %386 = vmatprep.subr.bf16.mxu0 %v353
        %387 = vmatpush1.bf16.msra.mxu0 %v352
        %388 = vmatprep.subr.bf16.mxu0 %v351
        %389 = vmatpush1.bf16.msra.mxu0 %v350
        %390 = vmatprep.subr.bf16.mxu0 %v349
        %391 = vmatpush1.bf16.msra.mxu0 %v348
        %392 = vmatprep.subr.bf16.mxu0 %v347
        %393 = vmatpush1.bf16.msra.mxu0 %v346
        %394 = vmatprep.subr.bf16.mxu0 0
        %395 = vmatpush2.bf16.msra.mxu0 0
        %396 = vmatprep.subr.bf16.mxu0 0
        %397 = vmatpush2.bf16.msra.mxu0 0
        %398 = vmatprep.subr.bf16.mxu0 0
        %399 = vmatpush2.bf16.msra.mxu0 0
        %400 = vmatprep.subr.bf16.mxu0 0
        %401 = vmatpush2.bf16.msra.mxu0 0
        %402 = vmatprep.subr.bf16.mxu0 0
        %403 = vmatpush2.bf16.msra.mxu0 0
        %404 = vmatprep.subr.bf16.mxu0 0
        %405 = vmatpush2.bf16.msra.mxu0 0
        %406 = vmatprep.subr.bf16.mxu0 0
        %407 = vmatpush2.bf16.msra.mxu0 0
        %408 = vmatprep.subr.bf16.mxu0 0
        %409 = vmatpush2.bf16.msra.mxu0 0
        %410 = vmatprep.mubr.bf16.mxu0 0
        %411 = vmatmul.mubr.bf16.gmra.mxu0 %v268
        %v412 = vpop.f32.mrf.mxu0
        %v413 = vadd.f32 %v291, %v412
        %v414 = vpop.f32.mrf.mxu0
        %v415 = vadd.f32 %v295, %v414
        %v416 = vpop.f32.mrf.mxu0
        %v417 = vadd.f32 %v291, %v416
        %v418 = vpop.f32.mrf.mxu0
        %v419 = vadd.f32 %v295, %v418
        %420 = vmatprep.mubr.bf16.mxu0 0
        %421 = vmatmul.mubr.bf16.gmra.mxu0 %v269
        %v422 = vpop.f32.mrf.mxu0
        %v423 = vadd.f32 %v291, %v422
        %v424 = vpop.f32.mrf.mxu0
        %v425 = vadd.f32 %v295, %v424
        %v426 = vpop.f32.mrf.mxu0
        %v427 = vadd.f32 %v291, %v426
        %v428 = vpop.f32.mrf.mxu0
        %v429 = vadd.f32 %v295, %v428
        %430 = vdwg.mxu0
        %v431 = vmax.f32 %v413, %v415
        %432 = vmax.xlane.f32.xlu0 %v431
        %v433 = vpop.xlane.xlu0 %432
        %v434 = vmax.f32 %v417, %v419
        %435 = vmax.xlane.f32.xlu0 %v434
        %v436 = vpop.xlane.xlu0 %435
        %v437 = vmax.f32 %v423, %v425
        %438 = vmax.xlane.f32.xlu0 %v437
        %v439 = vpop.xlane.xlu0 %438
        %v440 = vmax.f32 %v427, %v429
        %441 = vmax.xlane.f32.xlu0 %v440
        %v442 = vpop.xlane.xlu0 %441
        %v443 = vsub.f32 %v413, %v433
        %v444 = vsub.f32 %v415, %v433
        %v445 = vsub.f32 %v417, %v436
        %v446 = vsub.f32 %v419, %v436
        %v447 = vsub.f32 %v423, %v439
        %v448 = vsub.f32 %v425, %v439
        %v449 = vsub.f32 %v427, %v442
        %v450 = vsub.f32 %v429, %v442
        %v451 = vmul.f32 %v443, 1.442695
        %v452 = vpow.pop %v451
        %v453 = vmul.f32 %v444, 1.442695
        %v454 = vpow.pop %v453
        %v455 = vmul.f32 %v445, 1.442695
        %v456 = vpow.pop %v455
        %v457 = vmul.f32 %v446, 1.442695
        %v458 = vpow.pop %v457
        %v459 = vmul.f32 %v447, 1.442695
        %v460 = vpow.pop %v459
        %v461 = vmul.f32 %v448, 1.442695
        %v462 = vpow.pop %v461
        %v463 = vmul.f32 %v449, 1.442695
        %v464 = vpow.pop %v463
        %v465 = vmul.f32 %v450, 1.442695
        %v466 = vpow.pop %v465
        %v467 = vadd.f32 %v452, %v454
        %468 = vadd.xlane.f32.xlu0 %v467
        %v469 = vpop.xlane.xlu0 %468
        %v470 = vadd.f32 %v456, %v458
        %471 = vadd.xlane.f32.xlu0 %v470
        %v472 = vpop.xlane.xlu0 %471
        %v473 = vadd.f32 %v460, %v462
        %474 = vadd.xlane.f32.xlu0 %v473
        %v475 = vpop.xlane.xlu0 %474
        %v476 = vadd.f32 %v464, %v466
        %477 = vadd.xlane.f32.xlu0 %v476
        %v478 = vpop.xlane.xlu0 %477
        %v479 = vlog2.pop %v469
        %v480 = vmul.f32 %v479, 0.6931472
        %v481 = vlog2.pop %v472
        %v482 = vmul.f32 %v481, 0.6931472
        %v483 = vlog2.pop %v475
        %v484 = vmul.f32 %v483, 0.6931472
        %v485 = vlog2.pop %v478
        %v486 = vmul.f32 %v485, 0.6931472
        %v487 = vadd.f32 %v480, %v433
        %v488 = vadd.f32 %v482, %v436
        %v489 = vadd.f32 %v484, %v439
        %v490 = vadd.f32 %v486, %v442
        %v491 = vlaneseq
        %v492 = vand.u32 %v491, 127
        %v493 = vadd.s32 %v492, 128
        %v494 = vld [vmem:[%s249] sm:$0xff]
        %v495 = vld [vmem:[%s249 + $0x8] sm:$0xff]
        %v496 = vld [vmem:[%s249 + $0x10] sm:$0xff]
        %v497 = vld [vmem:[%s249 + $0x18] sm:$0xff]
        %498 = vset.pattern.permute.xlu0 0
        %499 = vperm.xlu0 %498, %v494
        %v500 = vpop.permute.xlu0 %499
        %501 = vset.pattern.permute.xlu0 0
        %502 = vperm.xlu0 %501, %v495
        %v503 = vpop.permute.xlu0 %502
        %504 = vset.pattern.permute.xlu0 0
        %505 = vperm.xlu0 %504, %v496
        %v506 = vpop.permute.xlu0 %505
        %507 = vset.pattern.permute.xlu0 0
        %508 = vperm.xlu0 %507, %v497
        %v509 = vpop.permute.xlu0 %508
        %vm510 = vcmp.eq.s32.totalorder %v492, %v500
        %vm511 = vcmp.eq.s32.totalorder %v493, %v500
        %vm512 = vcmp.eq.s32.totalorder %v492, %v503
        %vm513 = vcmp.eq.s32.totalorder %v493, %v503
        %vm514 = vcmp.eq.s32.totalorder %v492, %v506
        %vm515 = vcmp.eq.s32.totalorder %v493, %v506
        %vm516 = vcmp.eq.s32.totalorder %v492, %v509
        %vm517 = vcmp.eq.s32.totalorder %v493, %v509
        %v518 = vsel %vm510, %v413, 0.0
        %v519 = vsel %vm511, %v415, 0.0
        %v520 = vsel %vm512, %v417, 0.0
        %v521 = vsel %vm513, %v419, 0.0
        %v522 = vsel %vm514, %v423, 0.0
        %v523 = vsel %vm515, %v425, 0.0
        %v524 = vsel %vm516, %v427, 0.0
        %v525 = vsel %vm517, %v429, 0.0
        %v526 = vadd.f32 %v518, %v519
        %527 = vadd.xlane.f32.xlu0 %v526
        %v528 = vpop.xlane.xlu0 %527
        %v529 = vadd.f32 %v520, %v521
        %530 = vadd.xlane.f32.xlu0 %v529
        %v531 = vpop.xlane.xlu0 %530
        %v532 = vadd.f32 %v522, %v523
        %533 = vadd.xlane.f32.xlu0 %v532
        %v534 = vpop.xlane.xlu0 %533
        %v535 = vadd.f32 %v524, %v525
        %536 = vadd.xlane.f32.xlu0 %v535
        %v537 = vpop.xlane.xlu0 %536
        %v538 = vsub.f32 %v487, %v528
        %v539 = vsub.f32 %v488, %v531
        %v540 = vsub.f32 %v489, %v534
        %v541 = vsub.f32 %v490, %v537
        %s542 = sld [smem:[#allocation2]]
        %v543 = vld [vmem:[%s255] sm:$0xff]
        %v544 = vld [vmem:[%s255 + $0x8] sm:$0xff]
        %v545 = vld [vmem:[%s255 + $0x10] sm:$0xff]
        %v546 = vld [vmem:[%s255 + $0x18] sm:$0xff]
        %v547 = vmul.f32 %v538, %v543
        %v548 = vmul.f32 %v539, %v544
        %v549 = vmul.f32 %v540, %v545
        %v550 = vmul.f32 %v541, %v546
        %vm551 = vcmask 7168
        %v552 = vsel %vm551, %v547, 0.0
        %v553 = vsel %vm551, %v548, 0.0
        %v554 = vadd.f32 %v552, %v553
        %v555 = vsel %vm551, %v549, 0.0
        %v556 = vadd.f32 %v554, %v555
        %v557 = vsel %vm551, %v550, 0.0
        %v558 = vadd.f32 %v556, %v557
        %559 = vadd.xlane.f32.xlu0 %v558
        %v560 = vpop.xlane.xlu0 %559
        %v561 = vrot.slane %v560, 4
        %v562 = vadd.f32 %v560, %v561
        %v563 = vrot.slane %v562, 2
        %v564 = vadd.f32 %v562, %v563
        %v565 = vrot.slane %v564, 1
        %v566 = vadd.f32 %v564, %v565
        %s567 = vtos %v566
        %s568 = sadd.f32 %s542, %s567
        %s569 = scalar_lea.smem [#allocation2], 0
        %570 = sst [smem:[%s569]] %s568
        // Predicated region
        $region45: #{rnnvae_forward.9} parent=39 // pred_check
          %p571 = pneg %p150
        $region46: #{rnnvae_forward.9} parent=39 // pred_check_branch
          %573 = sbr.rel (%p571) target = $region48
        $region47: #{rnnvae_forward.9} parent=39 // pred_region
          %s575 = ssub.s32 16, 16
          %576 = vsyncadd [#allocation3], %s575
          %579 = dma.smem_to_hbm [#allocation2], 16, %s5, [#allocation3]
        $region48: #{rnnvae_forward.9} parent=39 // pred_fallthru
          _
        // Predicated region
        $region49: #{rnnvae_forward.9} parent=39 // pred_check
          %p580 = pneg %p150
        $region50: #{rnnvae_forward.9} parent=39 // pred_check_branch
          %582 = sbr.rel (%p580) target = $region52
        $region51: #{rnnvae_forward.9} parent=39 // pred_region
          %583 = dma.done [#allocation3], 16
        $region52: #{rnnvae_forward.9} parent=39 // pred_fallthru
          _
        %584 = sfence
      $region40: #{rnnvae_forward.9} parent=5 // pred_fallthru
        _
      %p585 = scmp.le.s32.totalorder 2, %s12
      // Predicated region
      $region53: #{rnnvae_forward.9} parent=5 // pred_check
        %p586 = pneg %p585
      $region54: #{rnnvae_forward.9} parent=5 // pred_check_branch
        %588 = sbr.rel (%p586) target = $region56
      $region55: #{rnnvae_forward.9} parent=5 // pred_region
        %s589 = ssub.s32 %s12, 2
      $region56: #{rnnvae_forward.9} parent=5 // pred_fallthru
        _
    $region6: #{rnnvae_forward.9} parent=1 // loop_footer
      %s16 = sadd.s32 1, %s12
    $region7: #{rnnvae_forward.9} parent=1 // loop_footer_branch
      %11 = sbr.rel target = $region3
    $region8: #{rnnvae_forward.9} parent=1 // loop_exit
      _
    %590 = vsyncpa [#allocation3], 1
    %s591 = scalar_lea.sflag [#allocation3], 1
    %592 = vsyncpa %s591, 1

// kernel: rnnvae_forward.7
$region0: #{rnnvae_forward.7}
  #allocation0 [shape = 'u32[]', space=smem, size = 0x4, offset = 0x4, fixed_abs, tag = 'smem constant byte address 0x4 - core index']
  #allocation1 [shape = 'u32[144,128]{1,0:T(1,128)}', space=vmem, size = 0x12000, scoped, tag = 'internal scratch']
  #allocation2 [shape = 'f32[8,128]{1,0:T(8,128)}', space=vmem, size = 0x1000, scoped, tag = 'scratch operand']
  %s0 = inlined_call_operand.vmem [shape: f32[8,8,384], index: 0, kind: input, shape index: {}]
  %s1 = inlined_call_operand.vmem [shape: f32[8,8,1], index: 1, kind: input, shape index: {}]
  %s2 = inlined_call_operand.vmem [shape: bf16[128,384], index: 2, kind: input, shape index: {}]
  %s3 = inlined_call_operand.vmem [shape: f32[1,384], index: 3, kind: input, shape index: {}]
  %s4 = inlined_call_operand.vmem [shape: f32[128,128], index: 4, kind: input, shape index: {}]
  %s5 = inlined_call_operand.vmem [shape: f32[1,128], index: 5, kind: input, shape index: {}]
  %s6 = inlined_call_operand.vmem [shape: f32[8,64], index: 6, kind: input, shape index: {}]
  %s7 = inlined_call_operand.vmem [shape: f32[64,128], index: 7, kind: input, shape index: {}]
  %s8 = inlined_call_operand.vmem [shape: f32[1,128], index: 8, kind: input, shape index: {}]
  %s9 = inlined_call_operand.vmem [shape: f32[8,128], index: 9, kind: output, shape index: {0}]
  %s10 = inlined_call_operand.hbm [shape: f32[1,1], index: 10, kind: output, shape index: {1}]
  %11 = xla_tuple %s9, %s10
  %s12 = sld [smem:[#allocation0]]
  $region85: #{rnnvae_forward.7} parent=0
    _
  %s14 = ssub.s32 1, %s12
  %s15 = scalar_select 0, %s14, %s12
  $region1: #{rnnvae_forward.7} parent=0
    #allocation3 [shape = 'u8[512]{0}', space=smem, size = 0x200, scoped, tag = 'output window, operand 1, single buffered']
    #allocation4 [shape = 's32[2]{0}', space=sflag, size = 0x8, scoped, tag = 'scoped memory for rnnvae_forward.7']
    %16 = vsyncpa [#allocation4], 0
    loop: start=0, step=1, limit=4
    $region2: #{rnnvae_forward.7} parent=1 // loop_pre_header
      _
    $region3: #{rnnvae_forward.7} parent=1 // loop_header
      %s18 = sphi 0, %s22
      %p19 = scmp.ge.s32.totalorder %s18, 4
      %s28 = sphi 0, %s30
      %s31 = sphi 0, %s28
      %s32 = sphi 0, %s31
      %s48 = sphi 0, %s32
      %s54 = sphi 0, %s56
      %s57 = sphi 0, %s54
      %s58 = sphi 0, %s57
      %s74 = sphi 0, %s58
      %s78 = sphi 0, %s78
      %s80 = sphi 0, %s78
      %s81 = sphi 0, %s80
      %s95 = sphi 0, %s81
      %s99 = sphi 0, %s99
      %s101 = sphi 0, %s99
      %s102 = sphi 0, %s101
      %s116 = sphi 0, %s102
      %s120 = sphi 0, %s120
      %s122 = sphi 0, %s120
      %s123 = sphi 0, %s122
      %s137 = sphi 0, %s123
      %s141 = sphi 0, %s141
      %s143 = sphi 0, %s141
      %s144 = sphi 0, %s143
      %s158 = sphi 0, %s144
      %s162 = sphi 0, %s162
      %s164 = sphi 0, %s162
      %s165 = sphi 0, %s164
      %s179 = sphi 0, %s165
      %s183 = sphi 0, %s183
      %s185 = sphi 0, %s183
      %s186 = sphi 0, %s185
      %s200 = sphi 0, %s186
      %s204 = sphi 0, %s204
      %s206 = sphi 0, %s204
      %s207 = sphi 0, %s206
      %s221 = sphi 0, %s207
      %s225 = sphi 0, %s225
      %s227 = sphi 0, %s225
      %s228 = sphi 0, %s227
      %s242 = sphi 0, %s228
      %s246 = sphi 0, %s246
      %s248 = sphi 0, %s246
      %s249 = sphi 0, %s248
      %s263 = sphi 0, %s249
    $region4: #{rnnvae_forward.7} parent=1 // loop_header_branch
      %21 = sbr.rel (%p19) target = $region8
    $region5: #{rnnvae_forward.7} parent=1 // loop_body
      %s23 = ssub.s32 %s18, 1
      %s24 = ssub.s32 %s18, 2
      %s25 = sadd.s32 %s18, 1
      %s26 = ssub.s32 %s18, %s25
      %p27 = scmp.eq.s32.totalorder %s26, 0
      %s29 = sadd.s32 %s28, 1
      %s30 = scalar_select %p27, %s28, %s29
      %p33 = pneg %p27
      %p34 = scmp.eq.s32.totalorder %s18, 1
      %p35 = por %p33, %p34
      %p36 = scmp.ne.s32.totalorder %s28, %s31
      %p37 = scmp.eq.s32.totalorder %s18, 0
      %p38 = por %p36, %p37
      %p39 = scmp.ne.s32.totalorder %s28, %s31
      %p40 = scmp.eq.s32.totalorder %s23, 1
      %p41 = por %p39, %p40
      %p42 = scmp.ne.s32.totalorder %s31, %s32
      %p43 = scmp.eq.s32.totalorder %s23, 0
      %p44 = por %p42, %p43
      %p45 = scmp.ne.s32.totalorder %s31, %s32
      %p46 = scmp.eq.s32.totalorder %s24, 1
      %p47 = por %p45, %p46
      %p49 = scmp.ne.s32.totalorder %s32, %s48
      %p50 = scmp.eq.s32.totalorder %s24, 0
      %p51 = por %p49, %p50
      %s52 = ssub.s32 %s18, %s25
      %p53 = scmp.eq.s32.totalorder %s52, 0
      %s55 = sadd.s32 %s54, 1
      %s56 = scalar_select %p53, %s54, %s55
      %p59 = pneg %p53
      %p60 = scmp.eq.s32.totalorder %s18, 1
      %p61 = por %p59, %p60
      %p62 = scmp.ne.s32.totalorder %s54, %s57
      %p63 = scmp.eq.s32.totalorder %s18, 0
      %p64 = por %p62, %p63
      %p65 = scmp.ne.s32.totalorder %s54, %s57
      %p66 = scmp.eq.s32.totalorder %s23, 1
      %p67 = por %p65, %p66
      %p68 = scmp.ne.s32.totalorder %s57, %s58
      %p69 = scmp.eq.s32.totalorder %s23, 0
      %p70 = por %p68, %p69
      %p71 = scmp.ne.s32.totalorder %s57, %s58
      %p72 = scmp.eq.s32.totalorder %s24, 1
      %p73 = por %p71, %p72
      %p75 = scmp.ne.s32.totalorder %s58, %s74
      %p76 = scmp.eq.s32.totalorder %s24, 0
      %p77 = por %p75, %p76
      %s79 = sadd.s32 %s78, 1
      %p82 = scmp.eq.s32.totalorder %s18, 1
      %p83 = scmp.ne.s32.totalorder %s78, %s80
      %p84 = scmp.eq.s32.totalorder %s18, 0
      %p85 = por %p83, %p84
      %p86 = scmp.ne.s32.totalorder %s78, %s80
      %p87 = scmp.eq.s32.totalorder %s23, 1
      %p88 = por %p86, %p87
      %p89 = scmp.ne.s32.totalorder %s80, %s81
      %p90 = scmp.eq.s32.totalorder %s23, 0
      %p91 = por %p89, %p90
      %p92 = scmp.ne.s32.totalorder %s80, %s81
      %p93 = scmp.eq.s32.totalorder %s24, 1
      %p94 = por %p92, %p93
      %p96 = scmp.ne.s32.totalorder %s81, %s95
      %p97 = scmp.eq.s32.totalorder %s24, 0
      %p98 = por %p96, %p97
      %s100 = sadd.s32 %s99, 1
      %p103 = scmp.eq.s32.totalorder %s18, 1
      %p104 = scmp.ne.s32.totalorder %s99, %s101
      %p105 = scmp.eq.s32.totalorder %s18, 0
      %p106 = por %p104, %p105
      %p107 = scmp.ne.s32.totalorder %s99, %s101
      %p108 = scmp.eq.s32.totalorder %s23, 1
      %p109 = por %p107, %p108
      %p110 = scmp.ne.s32.totalorder %s101, %s102
      %p111 = scmp.eq.s32.totalorder %s23, 0
      %p112 = por %p110, %p111
      %p113 = scmp.ne.s32.totalorder %s101, %s102
      %p114 = scmp.eq.s32.totalorder %s24, 1
      %p115 = por %p113, %p114
      %p117 = scmp.ne.s32.totalorder %s102, %s116
      %p118 = scmp.eq.s32.totalorder %s24, 0
      %p119 = por %p117, %p118
      %s121 = sadd.s32 %s120, 1
      %p124 = scmp.eq.s32.totalorder %s18, 1
      %p125 = scmp.ne.s32.totalorder %s120, %s122
      %p126 = scmp.eq.s32.totalorder %s18, 0
      %p127 = por %p125, %p126
      %p128 = scmp.ne.s32.totalorder %s120, %s122
      %p129 = scmp.eq.s32.totalorder %s23, 1
      %p130 = por %p128, %p129
      %p131 = scmp.ne.s32.totalorder %s122, %s123
      %p132 = scmp.eq.s32.totalorder %s23, 0
      %p133 = por %p131, %p132
      %p134 = scmp.ne.s32.totalorder %s122, %s123
      %p135 = scmp.eq.s32.totalorder %s24, 1
      %p136 = por %p134, %p135
      %p138 = scmp.ne.s32.totalorder %s123, %s137
      %p139 = scmp.eq.s32.totalorder %s24, 0
      %p140 = por %p138, %p139
      %s142 = sadd.s32 %s141, 1
      %p145 = scmp.eq.s32.totalorder %s18, 1
      %p146 = scmp.ne.s32.totalorder %s141, %s143
      %p147 = scmp.eq.s32.totalorder %s18, 0
      %p148 = por %p146, %p147
      %p149 = scmp.ne.s32.totalorder %s141, %s143
      %p150 = scmp.eq.s32.totalorder %s23, 1
      %p151 = por %p149, %p150
      %p152 = scmp.ne.s32.totalorder %s143, %s144
      %p153 = scmp.eq.s32.totalorder %s23, 0
      %p154 = por %p152, %p153
      %p155 = scmp.ne.s32.totalorder %s143, %s144
      %p156 = scmp.eq.s32.totalorder %s24, 1
      %p157 = por %p155, %p156
      %p159 = scmp.ne.s32.totalorder %s144, %s158
      %p160 = scmp.eq.s32.totalorder %s24, 0
      %p161 = por %p159, %p160
      %s163 = sadd.s32 %s162, 1
      %p166 = scmp.eq.s32.totalorder %s18, 1
      %p167 = scmp.ne.s32.totalorder %s162, %s164
      %p168 = scmp.eq.s32.totalorder %s18, 0
      %p169 = por %p167, %p168
      %p170 = scmp.ne.s32.totalorder %s162, %s164
      %p171 = scmp.eq.s32.totalorder %s23, 1
      %p172 = por %p170, %p171
      %p173 = scmp.ne.s32.totalorder %s164, %s165
      %p174 = scmp.eq.s32.totalorder %s23, 0
      %p175 = por %p173, %p174
      %p176 = scmp.ne.s32.totalorder %s164, %s165
      %p177 = scmp.eq.s32.totalorder %s24, 1
      %p178 = por %p176, %p177
      %p180 = scmp.ne.s32.totalorder %s165, %s179
      %p181 = scmp.eq.s32.totalorder %s24, 0
      %p182 = por %p180, %p181
      %s184 = sadd.s32 %s183, 1
      %p187 = scmp.eq.s32.totalorder %s18, 1
      %p188 = scmp.ne.s32.totalorder %s183, %s185
      %p189 = scmp.eq.s32.totalorder %s18, 0
      %p190 = por %p188, %p189
      %p191 = scmp.ne.s32.totalorder %s183, %s185
      %p192 = scmp.eq.s32.totalorder %s23, 1
      %p193 = por %p191, %p192
      %p194 = scmp.ne.s32.totalorder %s185, %s186
      %p195 = scmp.eq.s32.totalorder %s23, 0
      %p196 = por %p194, %p195
      %p197 = scmp.ne.s32.totalorder %s185, %s186
      %p198 = scmp.eq.s32.totalorder %s24, 1
      %p199 = por %p197, %p198
      %p201 = scmp.ne.s32.totalorder %s186, %s200
      %p202 = scmp.eq.s32.totalorder %s24, 0
      %p203 = por %p201, %p202
      %s205 = sadd.s32 %s204, 1
      %p208 = scmp.eq.s32.totalorder %s18, 1
      %p209 = scmp.ne.s32.totalorder %s204, %s206
      %p210 = scmp.eq.s32.totalorder %s18, 0
      %p211 = por %p209, %p210
      %p212 = scmp.ne.s32.totalorder %s204, %s206
      %p213 = scmp.eq.s32.totalorder %s23, 1
      %p214 = por %p212, %p213
      %p215 = scmp.ne.s32.totalorder %s206, %s207
      %p216 = scmp.eq.s32.totalorder %s23, 0
      %p217 = por %p215, %p216
      %p218 = scmp.ne.s32.totalorder %s206, %s207
      %p219 = scmp.eq.s32.totalorder %s24, 1
      %p220 = por %p218, %p219
      %p222 = scmp.ne.s32.totalorder %s207, %s221
      %p223 = scmp.eq.s32.totalorder %s24, 0
      %p224 = por %p222, %p223
      %s226 = sadd.s32 %s225, 1
      %p229 = scmp.eq.s32.totalorder %s18, 1
      %p230 = scmp.ne.s32.totalorder %s225, %s227
      %p231 = scmp.eq.s32.totalorder %s18, 0
      %p232 = por %p230, %p231
      %p233 = scmp.ne.s32.totalorder %s225, %s227
      %p234 = scmp.eq.s32.totalorder %s23, 1
      %p235 = por %p233, %p234
      %p236 = scmp.ne.s32.totalorder %s227, %s228
      %p237 = scmp.eq.s32.totalorder %s23, 0
      %p238 = por %p236, %p237
      %p239 = scmp.ne.s32.totalorder %s227, %s228
      %p240 = scmp.eq.s32.totalorder %s24, 1
      %p241 = por %p239, %p240
      %p243 = scmp.ne.s32.totalorder %s228, %s242
      %p244 = scmp.eq.s32.totalorder %s24, 0
      %p245 = por %p243, %p244
      %s247 = sadd.s32 %s246, 1
      %p250 = scmp.eq.s32.totalorder %s18, 1
      %p251 = scmp.ne.s32.totalorder %s246, %s248
      %p252 = scmp.eq.s32.totalorder %s18, 0
      %p253 = por %p251, %p252
      %p254 = scmp.ne.s32.totalorder %s246, %s248
      %p255 = scmp.eq.s32.totalorder %s23, 1
      %p256 = por %p254, %p255
      %p257 = scmp.ne.s32.totalorder %s248, %s249
      %p258 = scmp.eq.s32.totalorder %s23, 0
      %p259 = por %p257, %p258
      %p260 = scmp.ne.s32.totalorder %s248, %s249
      %p261 = scmp.eq.s32.totalorder %s24, 1
      %p262 = por %p260, %p261
      %p264 = scmp.ne.s32.totalorder %s249, %s263
      %p265 = scmp.eq.s32.totalorder %s24, 0
      %p266 = por %p264, %p265
      %p267 = scmp.le.s32.totalorder 1, %s18
      %p268 = scmp.lt.s32.totalorder %s18, 3
      %p269 = pnand %p267, %p268
      %p270 = pneg %p269
      // Predicated region
      $region9: #{rnnvae_forward.7} parent=5 // pred_check
        _
      $region10: #{rnnvae_forward.7} parent=5 // pred_check_branch
        %272 = sbr.rel (%p269) target = $region12
      $region11: #{rnnvae_forward.7} parent=5 // pred_region
        %s273 = ssub.s32 %s18, 1
        // Predicated region
        $region13: #{rnnvae_forward.7} parent=11 // pred_check
          %p274 = pneg %p91
        $region14: #{rnnvae_forward.7} parent=11 // pred_check_branch
          %276 = sbr.rel (%p274) target = $region16
        $region15: #{rnnvae_forward.7} parent=11 // pred_region
          _
        $region16: #{rnnvae_forward.7} parent=11 // pred_fallthru
          _
        // Predicated region
        $region17: #{rnnvae_forward.7} parent=11 // pred_check
          %p277 = pneg %p112
        $region18: #{rnnvae_forward.7} parent=11 // pred_check_branch
          %279 = sbr.rel (%p277) target = $region20
        $region19: #{rnnvae_forward.7} parent=11 // pred_region
          _
        $region20: #{rnnvae_forward.7} parent=11 // pred_fallthru
          _
        // Predicated region
        $region21: #{rnnvae_forward.7} parent=11 // pred_check
          %p280 = pneg %p133
        $region22: #{rnnvae_forward.7} parent=11 // pred_check_branch
          %282 = sbr.rel (%p280) target = $region24
        $region23: #{rnnvae_forward.7} parent=11 // pred_region
          _
        $region24: #{rnnvae_forward.7} parent=11 // pred_fallthru
          _
        // Predicated region
        $region25: #{rnnvae_forward.7} parent=11 // pred_check
          %p283 = pneg %p154
        $region26: #{rnnvae_forward.7} parent=11 // pred_check_branch
          %285 = sbr.rel (%p283) target = $region28
        $region27: #{rnnvae_forward.7} parent=11 // pred_region
          _
        $region28: #{rnnvae_forward.7} parent=11 // pred_fallthru
          _
        // Predicated region
        $region29: #{rnnvae_forward.7} parent=11 // pred_check
          %p286 = pneg %p175
        $region30: #{rnnvae_forward.7} parent=11 // pred_check_branch
          %288 = sbr.rel (%p286) target = $region32
        $region31: #{rnnvae_forward.7} parent=11 // pred_region
          _
        $region32: #{rnnvae_forward.7} parent=11 // pred_fallthru
          _
        // Predicated region
        $region33: #{rnnvae_forward.7} parent=11 // pred_check
          %p289 = pneg %p196
        $region34: #{rnnvae_forward.7} parent=11 // pred_check_branch
          %291 = sbr.rel (%p289) target = $region36
        $region35: #{rnnvae_forward.7} parent=11 // pred_region
          _
        $region36: #{rnnvae_forward.7} parent=11 // pred_fallthru
          _
        // Predicated region
        $region37: #{rnnvae_forward.7} parent=11 // pred_check
          %p292 = pneg %p217
        $region38: #{rnnvae_forward.7} parent=11 // pred_check_branch
          %294 = sbr.rel (%p292) target = $region40
        $region39: #{rnnvae_forward.7} parent=11 // pred_region
          _
        $region40: #{rnnvae_forward.7} parent=11 // pred_fallthru
          _
      $region12: #{rnnvae_forward.7} parent=5 // pred_fallthru
        _
      %p295 = scmp.lt.s32.totalorder %s18, 2
      // Predicated region
      $region41: #{rnnvae_forward.7} parent=5 // pred_check
        %p296 = pneg %p295
      $region42: #{rnnvae_forward.7} parent=5 // pred_check_branch
        %298 = sbr.rel (%p296) target = $region44
      $region43: #{rnnvae_forward.7} parent=5 // pred_region
        // Predicated region
        $region45: #{rnnvae_forward.7} parent=43 // pred_check
          %p299 = pneg %p38
        $region46: #{rnnvae_forward.7} parent=43 // pred_check_branch
          %301 = sbr.rel (%p299) target = $region48
        $region47: #{rnnvae_forward.7} parent=43 // pred_region
          %s302 = smul.u32 4, %s18
          %p303 = scmp.lt.s32.totalorder %s302, 7
          %s304 = scalar_select %p303, %s302, 7
          %s305 = smul.addr %s304, 3
          %s306 = smul.addr %s305, 8
          %s307 = scalar_lea.vmem %s0, %s306
          %s308 = smul.u32 4, %s18
        $region48: #{rnnvae_forward.7} parent=43 // pred_fallthru
          _
        // Predicated region
        $region49: #{rnnvae_forward.7} parent=43 // pred_check
          %p309 = pneg %p64
        $region50: #{rnnvae_forward.7} parent=43 // pred_check_branch
          %311 = sbr.rel (%p309) target = $region52
        $region51: #{rnnvae_forward.7} parent=43 // pred_region
          %s312 = smul.u32 4, %s18
          %p313 = scmp.lt.s32.totalorder %s312, 7
          %s314 = scalar_select %p313, %s312, 7
          %s315 = smul.addr %s314, 8
          %s316 = scalar_lea.vmem %s1, %s315
          %s317 = smul.u32 4, %s18
        $region52: #{rnnvae_forward.7} parent=43 // pred_fallthru
          _
      $region44: #{rnnvae_forward.7} parent=5 // pred_fallthru
        _
      %p318 = scmp.le.s32.totalorder 1, %s18
      %p319 = scmp.lt.s32.totalorder %s18, 3
      %p320 = pnand %p318, %p319
      %p321 = pneg %p320
      // Predicated region
      $region53: #{rnnvae_forward.7} parent=5 // pred_check
        _
      $region54: #{rnnvae_forward.7} parent=5 // pred_check_branch
        %323 = sbr.rel (%p320) target = $region56
      $region55: #{rnnvae_forward.7} parent=5 // pred_region
        %s324 = ssub.s32 %s18, 1
        %s325 = smul.u32 4, %s23
        %p326 = scmp.lt.s32.totalorder %s325, 7
        %s327 = scalar_select %p326, %s325, 7
        %s328 = smul.addr %s327, 3
        %s329 = smul.addr %s328, 8
        %s330 = scalar_lea.vmem %s0, %s329
        %p331 = pneg %p44
        %p332 = pneg %p41
        %s333 = smul.u32 4, %s23
        %p334 = scmp.lt.s32.totalorder %s333, 7
        %s335 = scalar_select %p334, %s333, 7
        %s336 = smul.addr %s335, 8
        %s337 = scalar_lea.vmem %s1, %s336
        %p338 = pneg %p70
        %p339 = pneg %p67
        %p340 = pneg %p91
        %p341 = pneg %p88
        %p342 = pneg %p112
        %p343 = pneg %p109
        %p344 = pneg %p133
        %p345 = pneg %p130
        %p346 = pneg %p154
        %p347 = pneg %p151
        %p348 = pneg %p175
        %p349 = pneg %p172
        %p350 = pneg %p196
        %p351 = pneg %p193
        %p352 = pneg %p217
        %p353 = pneg %p214
        %p354 = pneg %p238
        %p355 = pneg %p235
        %p356 = pneg %p259
        %p357 = pneg %p256
        %s358 = smul.u32 4, %s23
        %p359 = scmp.lt.s32.totalorder %s358, 7
        %s360 = scalar_select %p359, %s358, 7
        %s361 = smul.addr %s360, 3
        %s362 = smul.addr %s361, 8
        %s363 = scalar_lea.vmem %s0, %s362
        %s364 = smul.u32 4, %s23
        %s365 = smul.u32 4, %s23
        %p366 = scmp.lt.s32.totalorder %s365, 7
        %s367 = scalar_select %p366, %s365, 7
        %s368 = smul.addr %s367, 8
        %s369 = scalar_lea.vmem %s1, %s368
        %s370 = smul.u32 4, %s23
        %p372 = scmp.eq.s32.totalorder %s23, 0
        // Predicated region
        $region57: #{rnnvae_forward.7} parent=55 // pred_check
          %p373 = pneg %p372
        $region58: #{rnnvae_forward.7} parent=55 // pred_check_branch
          %375 = sbr.rel (%p373) target = $region60
        $region59: #{rnnvae_forward.7} parent=55 // pred_region
          %376 = vst [vmem:[#allocation2] sm:$0xff] 0.0
        $region60: #{rnnvae_forward.7} parent=55 // pred_fallthru
          _
        %v377 = vld [vmem:[%s2] sm:$0xff]
        %v378 = vld [vmem:[%s2 + $0x8] sm:$0xf]
        %v379 = vld [vmem:[%s2 + $0xc] sm:$0xff]
        %v380 = vld [vmem:[%s2 + $0x14] sm:$0xf]
        %v381 = vld [vmem:[%s2 + $0x18] sm:$0xff]
        %v382 = vld [vmem:[%s2 + $0x20] sm:$0xf]
        %v383 = vld [vmem:[%s2 + $0x24] sm:$0xff]
        %v384 = vld [vmem:[%s2 + $0x2c] sm:$0xf]
        %v385 = vld [vmem:[%s2 + $0x30] sm:$0xff]
        %v386 = vld [vmem:[%s2 + $0x38] sm:$0xf]
        %v387 = vld [vmem:[%s2 + $0x3c] sm:$0xff]
        %v388 = vld [vmem:[%s2 + $0x44] sm:$0xf]
        %v389 = vld [vmem:[%s2 + $0x48] sm:$0xff]
        %v390 = vld [vmem:[%s2 + $0x50] sm:$0xf]
        %v391 = vld [vmem:[%s2 + $0x54] sm:$0xff]
        %v392 = vld [vmem:[%s2 + $0x5c] sm:$0xf]
        %v393 = vld [vmem:[%s2 + $0x60] sm:$0xff]
        %v394 = vld [vmem:[%s2 + $0x68] sm:$0xf]
        %v395 = vld [vmem:[%s2 + $0x6c] sm:$0xff]
        %v396 = vld [vmem:[%s2 + $0x74] sm:$0xf]
        %v397 = vld [vmem:[%s2 + $0x78] sm:$0xff]
        %v398 = vld [vmem:[%s2 + $0x80] sm:$0xf]
        %v399 = vld [vmem:[%s2 + $0x84] sm:$0xff]
        %v400 = vld [vmem:[%s2 + $0x8c] sm:$0xf]
        %v401 = vld [vmem:[%s2 + $0x90] sm:$0xff]
        %v402 = vld [vmem:[%s2 + $0x98] sm:$0xf]
        %v403 = vld [vmem:[%s2 + $0x9c] sm:$0xff]
        %v404 = vld [vmem:[%s2 + $0xa4] sm:$0xf]
        %v405 = vld [vmem:[%s2 + $0xa8] sm:$0xff]
        %v406 = vld [vmem:[%s2 + $0xb0] sm:$0xf]
        %v407 = vld [vmem:[%s2 + $0xb4] sm:$0xff]
        %v408 = vld [vmem:[%s2 + $0xbc] sm:$0xf]
        %v409 = vld [vmem:[%s3] sm:$0x7]
        %v411 = vlaneseq
        %v412 = vshrl.u32 %v411, 7
        %v413 = vsub.s32 0, %v412
        %v414 = vrot.slane %v409, %v413
        %v415 = vlaneseq
        %v416 = vshrl.u32 %v415, 7
        %v417 = vsub.s32 1, %v416
        %v418 = vrot.slane %v409, %v417
        %v419 = vlaneseq
        %v420 = vshrl.u32 %v419, 7
        %v421 = vsub.s32 2, %v420
        %v422 = vrot.slane %v409, %v421
        %v426 = vld [vmem:[#allocation2] sm:$0xff]
        %v427 = vld [vmem:[%s363] sm:$0xff]
        %v428 = vld [vmem:[%s363 + $0x8] sm:$0xff]
        %v429 = vld [vmem:[%s363 + $0x10] sm:$0xff]
        %v430 = vld [vmem:[%s369] sm:$0xff]
        %v431 = vpack.c.bf16 %v426, %v426
        %v464 = vunpack.c.l.b16 %v377
        %v465 = vunpack.c.h.b16 %v377
        %v466 = vunpack.c.l.b16 %v378
        %v467 = vunpack.c.l.b16 %v379
        %v468 = vunpack.c.h.b16 %v379
        %v469 = vunpack.c.l.b16 %v380
        %v470 = vunpack.c.l.b16 %v381
        %v471 = vunpack.c.h.b16 %v381
        %v472 = vunpack.c.l.b16 %v382
        %v473 = vunpack.c.l.b16 %v383
        %v474 = vunpack.c.h.b16 %v383
        %v475 = vunpack.c.l.b16 %v384
        %v476 = vunpack.c.l.b16 %v385
        %v477 = vunpack.c.h.b16 %v385
        %v478 = vunpack.c.l.b16 %v386
        %v479 = vunpack.c.l.b16 %v387
        %v480 = vunpack.c.h.b16 %v387
        %v481 = vunpack.c.l.b16 %v388
        %v482 = vunpack.c.l.b16 %v389
        %v483 = vunpack.c.h.b16 %v389
        %v484 = vunpack.c.l.b16 %v390
        %v485 = vunpack.c.l.b16 %v391
        %v486 = vunpack.c.h.b16 %v391
        %v487 = vunpack.c.l.b16 %v392
        %v488 = vunpack.c.l.b16 %v393
        %v489 = vunpack.c.h.b16 %v393
        %v490 = vunpack.c.l.b16 %v394
        %v491 = vunpack.c.l.b16 %v395
        %v492 = vunpack.c.h.b16 %v395
        %v493 = vunpack.c.l.b16 %v396
        %v494 = vunpack.c.l.b16 %v397
        %v495 = vunpack.c.h.b16 %v397
        %v496 = vunpack.c.l.b16 %v398
        %v497 = vunpack.c.l.b16 %v399
        %v498 = vunpack.c.h.b16 %v399
        %v499 = vunpack.c.l.b16 %v400
        %v500 = vunpack.c.l.b16 %v401
        %v501 = vunpack.c.h.b16 %v401
        %v502 = vunpack.c.l.b16 %v402
        %v503 = vunpack.c.l.b16 %v403
        %v504 = vunpack.c.h.b16 %v403
        %v505 = vunpack.c.l.b16 %v404
        %v506 = vunpack.c.l.b16 %v405
        %v507 = vunpack.c.h.b16 %v405
        %v508 = vunpack.c.l.b16 %v406
        %v509 = vunpack.c.l.b16 %v407
        %v510 = vunpack.c.h.b16 %v407
        %v511 = vunpack.c.l.b16 %v408
        %v512 = vpack.c.b16 %v467, %v464
        %v513 = vpack.c.b16 %v468, %v465
        %v514 = vpack.c.b16 %v469, %v466
        %v515 = vpack.c.b16 %v473, %v470
        %v516 = vpack.c.b16 %v474, %v471
        %v517 = vpack.c.b16 %v475, %v472
        %v518 = vpack.c.b16 %v479, %v476
        %v519 = vpack.c.b16 %v480, %v477
        %v520 = vpack.c.b16 %v481, %v478
        %v521 = vpack.c.b16 %v485, %v482
        %v522 = vpack.c.b16 %v486, %v483
        %v523 = vpack.c.b16 %v487, %v484
        %v524 = vpack.c.b16 %v491, %v488
        %v525 = vpack.c.b16 %v492, %v489
        %v526 = vpack.c.b16 %v493, %v490
        %v527 = vpack.c.b16 %v497, %v494
        %v528 = vpack.c.b16 %v498, %v495
        %v529 = vpack.c.b16 %v499, %v496
        %v530 = vpack.c.b16 %v503, %v500
        %v531 = vpack.c.b16 %v504, %v501
        %v532 = vpack.c.b16 %v505, %v502
        %v533 = vpack.c.b16 %v509, %v506
        %v534 = vpack.c.b16 %v510, %v507
        %v535 = vpack.c.b16 %v511, %v508
        %560 = vmatprep.subr.bf16.mxu0 %v534
        %561 = vmatpush1.bf16.msra.mxu0 %v533
        %562 = vmatprep.subr.bf16.mxu0 %v531
        %563 = vmatpush1.bf16.msra.mxu0 %v530
        %564 = vmatprep.subr.bf16.mxu0 %v528
        %565 = vmatpush1.bf16.msra.mxu0 %v527
        %566 = vmatprep.subr.bf16.mxu0 %v525
        %567 = vmatpush1.bf16.msra.mxu0 %v524
        %568 = vmatprep.subr.bf16.mxu0 %v522
        %569 = vmatpush1.bf16.msra.mxu0 %v521
        %570 = vmatprep.subr.bf16.mxu0 %v519
        %571 = vmatpush1.bf16.msra.mxu0 %v518
        %572 = vmatprep.subr.bf16.mxu0 %v516
        %573 = vmatpush1.bf16.msra.mxu0 %v515
        %574 = vmatprep.subr.bf16.mxu0 %v513
        %575 = vmatpush1.bf16.msra.mxu0 %v512
        %576 = vmatprep.subr.bf16.mxu0 0
        %577 = vmatpush2.bf16.msra.mxu0 0
        %578 = vmatprep.subr.bf16.mxu0 0
        %579 = vmatpush2.bf16.msra.mxu0 0
        %580 = vmatprep.subr.bf16.mxu0 0
        %581 = vmatpush2.bf16.msra.mxu0 0
        %582 = vmatprep.subr.bf16.mxu0 0
        %583 = vmatpush2.bf16.msra.mxu0 0
        %584 = vmatprep.subr.bf16.mxu0 0
        %585 = vmatpush2.bf16.msra.mxu0 0
        %586 = vmatprep.subr.bf16.mxu0 0
        %587 = vmatpush2.bf16.msra.mxu0 0
        %588 = vmatprep.subr.bf16.mxu0 0
        %589 = vmatpush2.bf16.msra.mxu0 0
        %590 = vmatprep.subr.bf16.mxu0 0
        %591 = vmatpush2.bf16.msra.mxu0 0
        %592 = vmatprep.mubr.bf16.mxu0 0
        %593 = vmatmul.mubr.bf16.gmra.mxu0 %v431
        %v594 = vpop.f32.mrf.mxu0
        %v595 = vadd.f32 %v414, %v594
        %v596 = vpop.f32.mrf.mxu0
        %v597 = vadd.f32 %v418, %v596
        %v598 = vpop.f32.mrf.mxu0
        %v599 = vpop.f32.mrf.mxu0
        %600 = vdwg.mxu0
        %601 = vmatprep.subr.bf16.mxu0 0
        %602 = vmatpush1.bf16.msra.mxu0 %v535
        %603 = vmatprep.subr.bf16.mxu0 0
        %604 = vmatpush1.bf16.msra.mxu0 %v532
        %605 = vmatprep.subr.bf16.mxu0 0
        %606 = vmatpush1.bf16.msra.mxu0 %v529
        %607 = vmatprep.subr.bf16.mxu0 0
        %608 = vmatpush1.bf16.msra.mxu0 %v526
        %609 = vmatprep.subr.bf16.mxu0 0
        %610 = vmatpush1.bf16.msra.mxu0 %v523
        %611 = vmatprep.subr.bf16.mxu0 0
        %612 = vmatpush1.bf16.msra.mxu0 %v520
        %613 = vmatprep.subr.bf16.mxu0 0
        %614 = vmatpush1.bf16.msra.mxu0 %v517
        %615 = vmatprep.subr.bf16.mxu0 0
        %616 = vmatpush1.bf16.msra.mxu0 %v514
        %617 = vmatprep.subr.bf16.mxu0 0
        %618 = vmatpush2.bf16.msra.mxu0 0
        %619 = vmatprep.subr.bf16.mxu0 0
        %620 = vmatpush2.bf16.msra.mxu0 0
        %621 = vmatprep.subr.bf16.mxu0 0
        %622 = vmatpush2.bf16.msra.mxu0 0
        %623 = vmatprep.subr.bf16.mxu0 0
        %624 = vmatpush2.bf16.msra.mxu0 0
        %625 = vmatprep.subr.bf16.mxu0 0
        %626 = vmatpush2.bf16.msra.mxu0 0
        %627 = vmatprep.subr.bf16.mxu0 0
        %628 = vmatpush2.bf16.msra.mxu0 0
        %629 = vmatprep.subr.bf16.mxu0 0
        %630 = vmatpush2.bf16.msra.mxu0 0
        %631 = vmatprep.subr.bf16.mxu0 0
        %632 = vmatpush2.bf16.msra.mxu0 0
        %633 = vmatprep.mubr.bf16.mxu0 0
        %634 = vmatmul.mubr.bf16.gmra.mxu0 %v431
        %v635 = vpop.f32.mrf.mxu0
        %v636 = vadd.f32 %v422, %v635
        %v637 = vpop.f32.mrf.mxu0
        %v638 = vpop.f32.mrf.mxu0
        %v639 = vpop.f32.mrf.mxu0
        %640 = vdwg.mxu0
        %v641 = vadd.f32 %v427, %v595
        %v642 = vxor.u32 %v641, 2147483648
        %v643 = vmul.f32 %v642, 1.442695
        %v644 = vpow.pop %v643
        %v645 = vadd.f32 %v644, 1.0
        %v646 = vrcp.pop %v645
        %v647 = vmul.f32 1.0, %v646
        %v648 = vadd.f32 %v428, %v597
        %v649 = vxor.u32 %v648, 2147483648
        %v650 = vmul.f32 %v649, 1.442695
        %v651 = vpow.pop %v650
        %v652 = vadd.f32 %v651, 1.0
        %v653 = vrcp.pop %v652
        %v654 = vmul.f32 1.0, %v653
        %v655 = vmul.f32 %v647, %v636
        %v656 = vadd.f32 %v429, %v655
        %v657 = vtanh.pop %v656
        %v658 = vsub.f32 1.0, %v654
        %v659 = vmul.f32 %v658, %v657
        %v660 = vmul.f32 %v654, %v426
        %v661 = vadd.f32 %v659, %v660
        %vm662 = vcmp.gt.f32.partialorder %v430, 0.0
        %v663 = vsel %vm662, 1, 0
        %664 = vset.pattern.permute.xlu0 0
        %665 = vperm.xlu0 %664, %v663
        %v666 = vpop.permute.xlu0 %665
        %vm667 = vcmp.eq.s32.totalorder %v666, 1
        %v668 = vsel %vm667, %v661, %v426
        %s669 = scalar_lea.vmem %s363, 24
        %v670 = vld [vmem:[%s669] sm:$0xff]
        %v671 = vld [vmem:[%s669 + $0x8] sm:$0xff]
        %v672 = vld [vmem:[%s669 + $0x10] sm:$0xff]
        %s673 = scalar_lea.vmem %s369, 8
        %v674 = vld [vmem:[%s673] sm:$0xff]
        %v675 = vpack.c.bf16 %v668, %v668
        %676 = vmatprep.subr.bf16.mxu0 %v534
        %677 = vmatpush1.bf16.msra.mxu0 %v533
        %678 = vmatprep.subr.bf16.mxu0 %v531
        %679 = vmatpush1.bf16.msra.mxu0 %v530
        %680 = vmatprep.subr.bf16.mxu0 %v528
        %681 = vmatpush1.bf16.msra.mxu0 %v527
        %682 = vmatprep.subr.bf16.mxu0 %v525
        %683 = vmatpush1.bf16.msra.mxu0 %v524
        %684 = vmatprep.subr.bf16.mxu0 %v522
        %685 = vmatpush1.bf16.msra.mxu0 %v521
        %686 = vmatprep.subr.bf16.mxu0 %v519
        %687 = vmatpush1.bf16.msra.mxu0 %v518
        %688 = vmatprep.subr.bf16.mxu0 %v516
        %689 = vmatpush1.bf16.msra.mxu0 %v515
        %690 = vmatprep.subr.bf16.mxu0 %v513
        %691 = vmatpush1.bf16.msra.mxu0 %v512
        %692 = vmatprep.subr.bf16.mxu0 0
        %693 = vmatpush2.bf16.msra.mxu0 0
        %694 = vmatprep.subr.bf16.mxu0 0
        %695 = vmatpush2.bf16.msra.mxu0 0
        %696 = vmatprep.subr.bf16.mxu0 0
        %697 = vmatpush2.bf16.msra.mxu0 0
        %698 = vmatprep.subr.bf16.mxu0 0
        %699 = vmatpush2.bf16.msra.mxu0 0
        %700 = vmatprep.subr.bf16.mxu0 0
        %701 = vmatpush2.bf16.msra.mxu0 0
        %702 = vmatprep.subr.bf16.mxu0 0
        %703 = vmatpush2.bf16.msra.mxu0 0
        %704 = vmatprep.subr.bf16.mxu0 0
        %705 = vmatpush2.bf16.msra.mxu0 0
        %706 = vmatprep.subr.bf16.mxu0 0
        %707 = vmatpush2.bf16.msra.mxu0 0
        %708 = vmatprep.mubr.bf16.mxu0 0
        %709 = vmatmul.mubr.bf16.gmra.mxu0 %v675
        %v710 = vpop.f32.mrf.mxu0
        %v711 = vadd.f32 %v414, %v710
        %v712 = vpop.f32.mrf.mxu0
        %v713 = vadd.f32 %v418, %v712
        %v714 = vpop.f32.mrf.mxu0
        %v715 = vpop.f32.mrf.mxu0
        %716 = vdwg.mxu0
        %717 = vmatprep.subr.bf16.mxu0 0
        %718 = vmatpush1.bf16.msra.mxu0 %v535
        %719 = vmatprep.subr.bf16.mxu0 0
        %720 = vmatpush1.bf16.msra.mxu0 %v532
        %721 = vmatprep.subr.bf16.mxu0 0
        %722 = vmatpush1.bf16.msra.mxu0 %v529
        %723 = vmatprep.subr.bf16.mxu0 0
        %724 = vmatpush1.bf16.msra.mxu0 %v526
        %725 = vmatprep.subr.bf16.mxu0 0
        %726 = vmatpush1.bf16.msra.mxu0 %v523
        %727 = vmatprep.subr.bf16.mxu0 0
        %728 = vmatpush1.bf16.msra.mxu0 %v520
        %729 = vmatprep.subr.bf16.mxu0 0
        %730 = vmatpush1.bf16.msra.mxu0 %v517
        %731 = vmatprep.subr.bf16.mxu0 0
        %732 = vmatpush1.bf16.msra.mxu0 %v514
        %733 = vmatprep.subr.bf16.mxu0 0
        %734 = vmatpush2.bf16.msra.mxu0 0
        %735 = vmatprep.subr.bf16.mxu0 0
        %736 = vmatpush2.bf16.msra.mxu0 0
        %737 = vmatprep.subr.bf16.mxu0 0
        %738 = vmatpush2.bf16.msra.mxu0 0
        %739 = vmatprep.subr.bf16.mxu0 0
        %740 = vmatpush2.bf16.msra.mxu0 0
        %741 = vmatprep.subr.bf16.mxu0 0
        %742 = vmatpush2.bf16.msra.mxu0 0
        %743 = vmatprep.subr.bf16.mxu0 0
        %744 = vmatpush2.bf16.msra.mxu0 0
        %745 = vmatprep.subr.bf16.mxu0 0
        %746 = vmatpush2.bf16.msra.mxu0 0
        %747 = vmatprep.subr.bf16.mxu0 0
        %748 = vmatpush2.bf16.msra.mxu0 0
        %749 = vmatprep.mubr.bf16.mxu0 0
        %750 = vmatmul.mubr.bf16.gmra.mxu0 %v675
        %v751 = vpop.f32.mrf.mxu0
        %v752 = vadd.f32 %v422, %v751
        %v753 = vpop.f32.mrf.mxu0
        %v754 = vpop.f32.mrf.mxu0
        %v755 = vpop.f32.mrf.mxu0
        %756 = vdwg.mxu0
        %v757 = vadd.f32 %v670, %v711
        %v758 = vxor.u32 %v757, 2147483648
        %v759 = vmul.f32 %v758, 1.442695
        %v760 = vpow.pop %v759
        %v761 = vadd.f32 %v760, 1.0
        %v762 = vrcp.pop %v761
        %v763 = vmul.f32 1.0, %v762
        %v764 = vadd.f32 %v671, %v713
        %v765 = vxor.u32 %v764, 2147483648
        %v766 = vmul.f32 %v765, 1.442695
        %v767 = vpow.pop %v766
        %v768 = vadd.f32 %v767, 1.0
        %v769 = vrcp.pop %v768
        %v770 = vmul.f32 1.0, %v769
        %v771 = vmul.f32 %v763, %v752
        %v772 = vadd.f32 %v672, %v771
        %v773 = vtanh.pop %v772
        %v774 = vsub.f32 1.0, %v770
        %v775 = vmul.f32 %v774, %v773
        %v776 = vmul.f32 %v770, %v668
        %v777 = vadd.f32 %v775, %v776
        %vm778 = vcmp.gt.f32.partialorder %v674, 0.0
        %v779 = vsel %vm778, 1, 0
        %780 = vset.pattern.permute.xlu0 0
        %781 = vperm.xlu0 %780, %v779
        %v782 = vpop.permute.xlu0 %781
        %vm783 = vcmp.eq.s32.totalorder %v782, 1
        %v784 = vsel %vm783, %v777, %v668
        %s785 = scalar_lea.vmem %s363, 48
        %v786 = vld [vmem:[%s785] sm:$0xff]
        %v787 = vld [vmem:[%s785 + $0x8] sm:$0xff]
        %v788 = vld [vmem:[%s785 + $0x10] sm:$0xff]
        %s789 = scalar_lea.vmem %s369, 16
        %v790 = vld [vmem:[%s789] sm:$0xff]
        %v791 = vpack.c.bf16 %v784, %v784
        %792 = vmatprep.subr.bf16.mxu0 %v534
        %793 = vmatpush1.bf16.msra.mxu0 %v533
        %794 = vmatprep.subr.bf16.mxu0 %v531
        %795 = vmatpush1.bf16.msra.mxu0 %v530
        %796 = vmatprep.subr.bf16.mxu0 %v528
        %797 = vmatpush1.bf16.msra.mxu0 %v527
        %798 = vmatprep.subr.bf16.mxu0 %v525
        %799 = vmatpush1.bf16.msra.mxu0 %v524
        %800 = vmatprep.subr.bf16.mxu0 %v522
        %801 = vmatpush1.bf16.msra.mxu0 %v521
        %802 = vmatprep.subr.bf16.mxu0 %v519
        %803 = vmatpush1.bf16.msra.mxu0 %v518
        %804 = vmatprep.subr.bf16.mxu0 %v516
        %805 = vmatpush1.bf16.msra.mxu0 %v515
        %806 = vmatprep.subr.bf16.mxu0 %v513
        %807 = vmatpush1.bf16.msra.mxu0 %v512
        %808 = vmatprep.subr.bf16.mxu0 0
        %809 = vmatpush2.bf16.msra.mxu0 0
        %810 = vmatprep.subr.bf16.mxu0 0
        %811 = vmatpush2.bf16.msra.mxu0 0
        %812 = vmatprep.subr.bf16.mxu0 0
        %813 = vmatpush2.bf16.msra.mxu0 0
        %814 = vmatprep.subr.bf16.mxu0 0
        %815 = vmatpush2.bf16.msra.mxu0 0
        %816 = vmatprep.subr.bf16.mxu0 0
        %817 = vmatpush2.bf16.msra.mxu0 0
        %818 = vmatprep.subr.bf16.mxu0 0
        %819 = vmatpush2.bf16.msra.mxu0 0
        %820 = vmatprep.subr.bf16.mxu0 0
        %821 = vmatpush2.bf16.msra.mxu0 0
        %822 = vmatprep.subr.bf16.mxu0 0
        %823 = vmatpush2.bf16.msra.mxu0 0
        %824 = vmatprep.mubr.bf16.mxu0 0
        %825 = vmatmul.mubr.bf16.gmra.mxu0 %v791
        %v826 = vpop.f32.mrf.mxu0
        %v827 = vadd.f32 %v414, %v826
        %v828 = vpop.f32.mrf.mxu0
        %v829 = vadd.f32 %v418, %v828
        %v830 = vpop.f32.mrf.mxu0
        %v831 = vpop.f32.mrf.mxu0
        %832 = vdwg.mxu0
        %833 = vmatprep.subr.bf16.mxu0 0
        %834 = vmatpush1.bf16.msra.mxu0 %v535
        %835 = vmatprep.subr.bf16.mxu0 0
        %836 = vmatpush1.bf16.msra.mxu0 %v532
        %837 = vmatprep.subr.bf16.mxu0 0
        %838 = vmatpush1.bf16.msra.mxu0 %v529
        %839 = vmatprep.subr.bf16.mxu0 0
        %840 = vmatpush1.bf16.msra.mxu0 %v526
        %841 = vmatprep.subr.bf16.mxu0 0
        %842 = vmatpush1.bf16.msra.mxu0 %v523
        %843 = vmatprep.subr.bf16.mxu0 0
        %844 = vmatpush1.bf16.msra.mxu0 %v520
        %845 = vmatprep.subr.bf16.mxu0 0
        %846 = vmatpush1.bf16.msra.mxu0 %v517
        %847 = vmatprep.subr.bf16.mxu0 0
        %848 = vmatpush1.bf16.msra.mxu0 %v514
        %849 = vmatprep.subr.bf16.mxu0 0
        %850 = vmatpush2.bf16.msra.mxu0 0
        %851 = vmatprep.subr.bf16.mxu0 0
        %852 = vmatpush2.bf16.msra.mxu0 0
        %853 = vmatprep.subr.bf16.mxu0 0
        %854 = vmatpush2.bf16.msra.mxu0 0
        %855 = vmatprep.subr.bf16.mxu0 0
        %856 = vmatpush2.bf16.msra.mxu0 0
        %857 = vmatprep.subr.bf16.mxu0 0
        %858 = vmatpush2.bf16.msra.mxu0 0
        %859 = vmatprep.subr.bf16.mxu0 0
        %860 = vmatpush2.bf16.msra.mxu0 0
        %861 = vmatprep.subr.bf16.mxu0 0
        %862 = vmatpush2.bf16.msra.mxu0 0
        %863 = vmatprep.subr.bf16.mxu0 0
        %864 = vmatpush2.bf16.msra.mxu0 0
        %865 = vmatprep.mubr.bf16.mxu0 0
        %866 = vmatmul.mubr.bf16.gmra.mxu0 %v791
        %v867 = vpop.f32.mrf.mxu0
        %v868 = vadd.f32 %v422, %v867
        %v869 = vpop.f32.mrf.mxu0
        %v870 = vpop.f32.mrf.mxu0
        %v871 = vpop.f32.mrf.mxu0
        %872 = vdwg.mxu0
        %v873 = vadd.f32 %v786, %v827
        %v874 = vxor.u32 %v873, 2147483648
        %v875 = vmul.f32 %v874, 1.442695
        %v876 = vpow.pop %v875
        %v877 = vadd.f32 %v876, 1.0
        %v878 = vrcp.pop %v877
        %v879 = vmul.f32 1.0, %v878
        %v880 = vadd.f32 %v787, %v829
        %v881 = vxor.u32 %v880, 2147483648
        %v882 = vmul.f32 %v881, 1.442695
        %v883 = vpow.pop %v882
        %v884 = vadd.f32 %v883, 1.0
        %v885 = vrcp.pop %v884
        %v886 = vmul.f32 1.0, %v885
        %v887 = vmul.f32 %v879, %v868
        %v888 = vadd.f32 %v788, %v887
        %v889 = vtanh.pop %v888
        %v890 = vsub.f32 1.0, %v886
        %v891 = vmul.f32 %v890, %v889
        %v892 = vmul.f32 %v886, %v784
        %v893 = vadd.f32 %v891, %v892
        %vm894 = vcmp.gt.f32.partialorder %v790, 0.0
        %v895 = vsel %vm894, 1, 0
        %896 = vset.pattern.permute.xlu0 0
        %897 = vperm.xlu0 %896, %v895
        %v898 = vpop.permute.xlu0 %897
        %vm899 = vcmp.eq.s32.totalorder %v898, 1
        %v900 = vsel %vm899, %v893, %v784
        %s901 = scalar_lea.vmem %s363, 72
        %v902 = vld [vmem:[%s901] sm:$0xff]
        %v903 = vld [vmem:[%s901 + $0x8] sm:$0xff]
        %v904 = vld [vmem:[%s901 + $0x10] sm:$0xff]
        %s905 = scalar_lea.vmem %s369, 24
        %v906 = vld [vmem:[%s905] sm:$0xff]
        %v907 = vpack.c.bf16 %v900, %v900
        %908 = vmatprep.subr.bf16.mxu0 %v534
        %909 = vmatpush1.bf16.msra.mxu0 %v533
        %910 = vmatprep.subr.bf16.mxu0 %v531
        %911 = vmatpush1.bf16.msra.mxu0 %v530
        %912 = vmatprep.subr.bf16.mxu0 %v528
        %913 = vmatpush1.bf16.msra.mxu0 %v527
        %914 = vmatprep.subr.bf16.mxu0 %v525
        %915 = vmatpush1.bf16.msra.mxu0 %v524
        %916 = vmatprep.subr.bf16.mxu0 %v522
        %917 = vmatpush1.bf16.msra.mxu0 %v521
        %918 = vmatprep.subr.bf16.mxu0 %v519
        %919 = vmatpush1.bf16.msra.mxu0 %v518
        %920 = vmatprep.subr.bf16.mxu0 %v516
        %921 = vmatpush1.bf16.msra.mxu0 %v515
        %922 = vmatprep.subr.bf16.mxu0 %v513
        %923 = vmatpush1.bf16.msra.mxu0 %v512
        %924 = vmatprep.subr.bf16.mxu0 0
        %925 = vmatpush2.bf16.msra.mxu0 0
        %926 = vmatprep.subr.bf16.mxu0 0
        %927 = vmatpush2.bf16.msra.mxu0 0
        %928 = vmatprep.subr.bf16.mxu0 0
        %929 = vmatpush2.bf16.msra.mxu0 0
        %930 = vmatprep.subr.bf16.mxu0 0
        %931 = vmatpush2.bf16.msra.mxu0 0
        %932 = vmatprep.subr.bf16.mxu0 0
        %933 = vmatpush2.bf16.msra.mxu0 0
        %934 = vmatprep.subr.bf16.mxu0 0
        %935 = vmatpush2.bf16.msra.mxu0 0
        %936 = vmatprep.subr.bf16.mxu0 0
        %937 = vmatpush2.bf16.msra.mxu0 0
        %938 = vmatprep.subr.bf16.mxu0 0
        %939 = vmatpush2.bf16.msra.mxu0 0
        %940 = vmatprep.mubr.bf16.mxu0 0
        %941 = vmatmul.mubr.bf16.gmra.mxu0 %v907
        %v942 = vpop.f32.mrf.mxu0
        %v943 = vadd.f32 %v414, %v942
        %v944 = vpop.f32.mrf.mxu0
        %v945 = vadd.f32 %v418, %v944
        %v946 = vpop.f32.mrf.mxu0
        %v947 = vpop.f32.mrf.mxu0
        %948 = vdwg.mxu0
        %949 = vmatprep.subr.bf16.mxu0 0
        %950 = vmatpush1.bf16.msra.mxu0 %v535
        %951 = vmatprep.subr.bf16.mxu0 0
        %952 = vmatpush1.bf16.msra.mxu0 %v532
        %953 = vmatprep.subr.bf16.mxu0 0
        %954 = vmatpush1.bf16.msra.mxu0 %v529
        %955 = vmatprep.subr.bf16.mxu0 0
        %956 = vmatpush1.bf16.msra.mxu0 %v526
        %957 = vmatprep.subr.bf16.mxu0 0
        %958 = vmatpush1.bf16.msra.mxu0 %v523
        %959 = vmatprep.subr.bf16.mxu0 0
        %960 = vmatpush1.bf16.msra.mxu0 %v520
        %961 = vmatprep.subr.bf16.mxu0 0
        %962 = vmatpush1.bf16.msra.mxu0 %v517
        %963 = vmatprep.subr.bf16.mxu0 0
        %964 = vmatpush1.bf16.msra.mxu0 %v514
        %965 = vmatprep.subr.bf16.mxu0 0
        %966 = vmatpush2.bf16.msra.mxu0 0
        %967 = vmatprep.subr.bf16.mxu0 0
        %968 = vmatpush2.bf16.msra.mxu0 0
        %969 = vmatprep.subr.bf16.mxu0 0
        %970 = vmatpush2.bf16.msra.mxu0 0
        %971 = vmatprep.subr.bf16.mxu0 0
        %972 = vmatpush2.bf16.msra.mxu0 0
        %973 = vmatprep.subr.bf16.mxu0 0
        %974 = vmatpush2.bf16.msra.mxu0 0
        %975 = vmatprep.subr.bf16.mxu0 0
        %976 = vmatpush2.bf16.msra.mxu0 0
        %977 = vmatprep.subr.bf16.mxu0 0
        %978 = vmatpush2.bf16.msra.mxu0 0
        %979 = vmatprep.subr.bf16.mxu0 0
        %980 = vmatpush2.bf16.msra.mxu0 0
        %981 = vmatprep.mubr.bf16.mxu0 0
        %982 = vmatmul.mubr.bf16.gmra.mxu0 %v907
        %v983 = vpop.f32.mrf.mxu0
        %v984 = vadd.f32 %v422, %v983
        %v985 = vpop.f32.mrf.mxu0
        %v986 = vpop.f32.mrf.mxu0
        %v987 = vpop.f32.mrf.mxu0
        %988 = vdwg.mxu0
        %v989 = vadd.f32 %v902, %v943
        %v990 = vxor.u32 %v989, 2147483648
        %v991 = vmul.f32 %v990, 1.442695
        %v992 = vpow.pop %v991
        %v993 = vadd.f32 %v992, 1.0
        %v994 = vrcp.pop %v993
        %v995 = vmul.f32 1.0, %v994
        %v996 = vadd.f32 %v903, %v945
        %v997 = vxor.u32 %v996, 2147483648
        %v998 = vmul.f32 %v997, 1.442695
        %v999 = vpow.pop %v998
        %v1000 = vadd.f32 %v999, 1.0
        %v1001 = vrcp.pop %v1000
        %v1002 = vmul.f32 1.0, %v1001
        %v1003 = vmul.f32 %v995, %v984
        %v1004 = vadd.f32 %v904, %v1003
        %v1005 = vtanh.pop %v1004
        %v1006 = vsub.f32 1.0, %v1002
        %v1007 = vmul.f32 %v1006, %v1005
        %v1008 = vmul.f32 %v1002, %v900
        %v1009 = vadd.f32 %v1007, %v1008
        %vm1010 = vcmp.gt.f32.partialorder %v906, 0.0
        %v1011 = vsel %vm1010, 1, 0
        %1012 = vset.pattern.permute.xlu0 0
        %1013 = vperm.xlu0 %1012, %v1011
        %v1014 = vpop.permute.xlu0 %1013
        %vm1015 = vcmp.eq.s32.totalorder %v1014, 1
        %v1016 = vsel %vm1015, %v1009, %v900
        %1017 = vst [vmem:[#allocation2] sm:$0xff] %v1016
        %p1018 = scmp.eq.s32.totalorder %s23, 1
        // Predicated region
        $region61: #{rnnvae_forward.7} parent=55 // pred_check
          %p1019 = pneg %p1018
        $region62: #{rnnvae_forward.7} parent=55 // pred_check_branch
          %1021 = sbr.rel (%p1019) target = $region64
        $region63: #{rnnvae_forward.7} parent=55 // pred_region
          %v1022 = vld [vmem:[#allocation2] sm:$0xff]
          %v1023 = vld [vmem:[%s4] sm:$0xff]
          %v1024 = vld [vmem:[%s4 + $0x8] sm:$0xff]
          %v1025 = vld [vmem:[%s4 + $0x10] sm:$0xff]
          %v1026 = vld [vmem:[%s4 + $0x18] sm:$0xff]
          %v1027 = vld [vmem:[%s4 + $0x20] sm:$0xff]
          %v1028 = vld [vmem:[%s4 + $0x28] sm:$0xff]
          %v1029 = vld [vmem:[%s4 + $0x30] sm:$0xff]
          %v1030 = vld [vmem:[%s4 + $0x38] sm:$0xff]
          %v1031 = vld [vmem:[%s4 + $0x40] sm:$0xff]
          %v1032 = vld [vmem:[%s4 + $0x48] sm:$0xff]
          %v1033 = vld [vmem:[%s4 + $0x50] sm:$0xff]
          %v1034 = vld [vmem:[%s4 + $0x58] sm:$0xff]
          %v1035 = vld [vmem:[%s4 + $0x60] sm:$0xff]
          %v1036 = vld [vmem:[%s4 + $0x68] sm:$0xff]
          %v1037 = vld [vmem:[%s4 + $0x70] sm:$0xff]
          %v1038 = vld [vmem:[%s4 + $0x78] sm:$0xff]
          %v1039 = vld [vmem:[%s5] sm:$0x1]
          %v1041 = vlaneseq
          %v1042 = vshrl.u32 %v1041, 7
          %v1043 = vsub.s32 0, %v1042
          %v1044 = vrot.slane %v1039, %v1043
          %1046 = vmatprep.subr.mxu0 0.0
          %1047 = vmatpush1.msra.mxu0 %v1038
          %1048 = vmatprep.subr.mxu0 0.0
          %1049 = vmatpush1.msra.mxu0 %v1037
          %1050 = vmatprep.subr.mxu0 0.0
          %1051 = vmatpush1.msra.mxu0 %v1036
          %1052 = vmatprep.subr.mxu0 0.0
          %1053 = vmatpush1.msra.mxu0 %v1035
          %1054 = vmatprep.subr.mxu0 0.0
          %1055 = vmatpush1.msra.mxu0 %v1034
          %1056 = vmatprep.subr.mxu0 0.0
          %1057 = vmatpush1.msra.mxu0 %v1033
          %1058 = vmatprep.subr.mxu0 0.0
          %1059 = vmatpush1.msra.mxu0 %v1032
          %1060 = vmatprep.subr.mxu0 0.0
          %1061 = vmatpush1.msra.mxu0 %v1031
          %1062 = vmatprep.subr.mxu0 0.0
          %1063 = vmatpush1.msra.mxu0 %v1030
          %1064 = vmatprep.subr.mxu0 0.0
          %1065 = vmatpush1.msra.mxu0 %v1029
          %1066 = vmatprep.subr.mxu0 0.0
          %1067 = vmatpush1.msra.mxu0 %v1028
          %1068 = vmatprep.subr.mxu0 0.0
          %1069 = vmatpush1.msra.mxu0 %v1027
          %1070 = vmatprep.subr.mxu0 0.0
          %1071 = vmatpush1.msra.mxu0 %v1026
          %1072 = vmatprep.subr.mxu0 0.0
          %1073 = vmatpush1.msra.mxu0 %v1025
          %1074 = vmatprep.subr.mxu0 0.0
          %1075 = vmatpush1.msra.mxu0 %v1024
          %1076 = vmatprep.subr.mxu0 0.0
          %1077 = vmatpush1.msra.mxu0 %v1023
          %1078 = vmatprep.subr.mxu0 0.0
          %1079 = vmatpush2.msra.mxu0 0.0
          %1080 = vmatprep.subr.mxu0 0.0
          %1081 = vmatpush2.msra.mxu0 0.0
          %1082 = vmatprep.subr.mxu0 0.0
          %1083 = vmatpush2.msra.mxu0 0.0
          %1084 = vmatprep.subr.mxu0 0.0
          %1085 = vmatpush2.msra.mxu0 0.0
          %1086 = vmatprep.subr.mxu0 0.0
          %1087 = vmatpush2.msra.mxu0 0.0
          %1088 = vmatprep.subr.mxu0 0.0
          %1089 = vmatpush2.msra.mxu0 0.0
          %1090 = vmatprep.subr.mxu0 0.0
          %1091 = vmatpush2.msra.mxu0 0.0
          %1092 = vmatprep.subr.mxu0 0.0
          %1093 = vmatpush2.msra.mxu0 0.0
          %1094 = vmatprep.subr.mxu0 0.0
          %1095 = vmatpush2.msra.mxu0 0.0
          %1096 = vmatprep.subr.mxu0 0.0
          %1097 = vmatpush2.msra.mxu0 0.0
          %1098 = vmatprep.subr.mxu0 0.0
          %1099 = vmatpush2.msra.mxu0 0.0
          %1100 = vmatprep.subr.mxu0 0.0
          %1101 = vmatpush2.msra.mxu0 0.0
          %1102 = vmatprep.subr.mxu0 0.0
          %1103 = vmatpush2.msra.mxu0 0.0
          %1104 = vmatprep.subr.mxu0 0.0
          %1105 = vmatpush2.msra.mxu0 0.0
          %1106 = vmatprep.subr.mxu0 0.0
          %1107 = vmatpush2.msra.mxu0 0.0
          %1108 = vmatprep.subr.mxu0 0.0
          %1109 = vmatpush2.msra.mxu0 0.0
          %1110 = vmatprep.mubr.f32.mxu0 0.0
          %1111 = vmatmul.mubr.f32.gmra.mxu0 %v1022
          %v1112 = vpop.f32.mrf.mxu0
          %v1113 = vadd.f32 %v1044, %v1112
          %v1114 = vpop.f32.mrf.mxu0
          %1115 = vdwg.mxu0
          %v1116 = vmul.f32 %v1113, 0.5
          %v1117 = vmul.f32 %v1116, 1.442695
          %v1118 = vpow.pop %v1117
          %v1119 = vld [vmem:[%s6] sm:$0xff]
          %1121 = vrot.lane.b32.xlu0 %v1119, 64
          %v1122 = vpop.permute.xlu0 %1121
          %v1124 = vmul.f32 %v1118, %v1122
          %1126 = vrot.lane.b32.xlu0 %v1124, 64
          %v1127 = vpop.permute.xlu0 %1126
          %v1129 = vadd.f32 %v1113, %v1127
          %v1130 = vld [vmem:[%s7] sm:$0xff]
          %v1131 = vld [vmem:[%s7 + $0x8] sm:$0xff]
          %v1132 = vld [vmem:[%s7 + $0x10] sm:$0xff]
          %v1133 = vld [vmem:[%s7 + $0x18] sm:$0xff]
          %v1134 = vld [vmem:[%s7 + $0x20] sm:$0xff]
          %v1135 = vld [vmem:[%s7 + $0x28] sm:$0xff]
          %v1136 = vld [vmem:[%s7 + $0x30] sm:$0xff]
          %v1137 = vld [vmem:[%s7 + $0x38] sm:$0xff]
          %v1138 = vld [vmem:[%s8] sm:$0x1]
          %v1140 = vlaneseq
          %v1141 = vshrl.u32 %v1140, 7
          %v1142 = vsub.s32 0, %v1141
          %v1143 = vrot.slane %v1138, %v1142
          %vm1145 = vcmask 523264
          %v1147 = vsel %vm1145, %v1129, 0
          %1149 = vmatprep.subr.mxu0 0.0
          %1150 = vmatpush1.msra.mxu0 0.0
          %1151 = vmatprep.subr.mxu0 0.0
          %1152 = vmatpush1.msra.mxu0 0.0
          %1153 = vmatprep.subr.mxu0 0.0
          %1154 = vmatpush1.msra.mxu0 0.0
          %1155 = vmatprep.subr.mxu0 0.0
          %1156 = vmatpush1.msra.mxu0 0.0
          %1157 = vmatprep.subr.mxu0 0.0
          %1158 = vmatpush1.msra.mxu0 0.0
          %1159 = vmatprep.subr.mxu0 0.0
          %1160 = vmatpush1.msra.mxu0 0.0
          %1161 = vmatprep.subr.mxu0 0.0
          %1162 = vmatpush1.msra.mxu0 0.0
          %1163 = vmatprep.subr.mxu0 0.0
          %1164 = vmatpush1.msra.mxu0 0.0
          %1165 = vmatprep.subr.mxu0 0.0
          %1166 = vmatpush1.msra.mxu0 %v1137
          %1167 = vmatprep.subr.mxu0 0.0
          %1168 = vmatpush1.msra.mxu0 %v1136
          %1169 = vmatprep.subr.mxu0 0.0
          %1170 = vmatpush1.msra.mxu0 %v1135
          %1171 = vmatprep.subr.mxu0 0.0
          %1172 = vmatpush1.msra.mxu0 %v1134
          %1173 = vmatprep.subr.mxu0 0.0
          %1174 = vmatpush1.msra.mxu0 %v1133
          %1175 = vmatprep.subr.mxu0 0.0
          %1176 = vmatpush1.msra.mxu0 %v1132
          %1177 = vmatprep.subr.mxu0 0.0
          %1178 = vmatpush1.msra.mxu0 %v1131
          %1179 = vmatprep.subr.mxu0 0.0
          %1180 = vmatpush1.msra.mxu0 %v1130
          %1181 = vmatprep.subr.mxu0 0.0
          %1182 = vmatpush2.msra.mxu0 0.0
          %1183 = vmatprep.subr.mxu0 0.0
          %1184 = vmatpush2.msra.mxu0 0.0
          %1185 = vmatprep.subr.mxu0 0.0
          %1186 = vmatpush2.msra.mxu0 0.0
          %1187 = vmatprep.subr.mxu0 0.0
          %1188 = vmatpush2.msra.mxu0 0.0
          %1189 = vmatprep.subr.mxu0 0.0
          %1190 = vmatpush2.msra.mxu0 0.0
          %1191 = vmatprep.subr.mxu0 0.0
          %1192 = vmatpush2.msra.mxu0 0.0
          %1193 = vmatprep.subr.mxu0 0.0
          %1194 = vmatpush2.msra.mxu0 0.0
          %1195 = vmatprep.subr.mxu0 0.0
          %1196 = vmatpush2.msra.mxu0 0.0
          %1197 = vmatprep.subr.mxu0 0.0
          %1198 = vmatpush2.msra.mxu0 0.0
          %1199 = vmatprep.subr.mxu0 0.0
          %1200 = vmatpush2.msra.mxu0 0.0
          %1201 = vmatprep.subr.mxu0 0.0
          %1202 = vmatpush2.msra.mxu0 0.0
          %1203 = vmatprep.subr.mxu0 0.0
          %1204 = vmatpush2.msra.mxu0 0.0
          %1205 = vmatprep.subr.mxu0 0.0
          %1206 = vmatpush2.msra.mxu0 0.0
          %1207 = vmatprep.subr.mxu0 0.0
          %1208 = vmatpush2.msra.mxu0 0.0
          %1209 = vmatprep.subr.mxu0 0.0
          %1210 = vmatpush2.msra.mxu0 0.0
          %1211 = vmatprep.subr.mxu0 0.0
          %1212 = vmatpush2.msra.mxu0 0.0
          %1213 = vmatprep.mubr.f32.mxu0 0.0
          %1214 = vmatmul.mubr.f32.gmra.mxu0 %v1147
          %v1215 = vpop.f32.mrf.mxu0
          %v1216 = vadd.f32 %v1143, %v1215
          %v1217 = vpop.f32.mrf.mxu0
          %1218 = vdwg.mxu0
          %1219 = vst [vmem:[%s9] sm:$0xff] %v1216
          %v1220 = vmul.f32 %v1113, 1.442695
          %v1221 = vpow.pop %v1220
          %v1222 = vmul.f32 %v1113, %v1113
          %1224 = vrot.lane.b32.xlu0 %v1222, 64
          %v1225 = vpop.permute.xlu0 %1224
          %v1227 = vadd.f32 %v1221, %v1225
          %v1228 = vsub.f32 %v1227, 1.0
          %v1229 = vsub.f32 %v1228, %v1113
          %1231 = vrot.lane.b32.xlu0 %v1229, 64
          %v1232 = vpop.permute.xlu0 %1231
          %v1234 = vsel %vm1145, %v1232, 0.0
          %1235 = vadd.xlane.f32.xlu0 %v1234
          %v1236 = vpop.xlane.xlu0 %1235
          %v1237 = vmul.f32 %v1236, 0.5
          %vm1238 = vcmask 7168
          %v1239 = vsel %vm1238, %v1237, 0.0
          %1240 = vadd.xlane.f32.xlu0 %v1239
          %v1241 = vpop.xlane.xlu0 %1240
          %v1242 = vrot.slane %v1241, 4
          %v1243 = vadd.f32 %v1241, %v1242
          %v1244 = vrot.slane %v1243, 2
          %v1245 = vadd.f32 %v1243, %v1244
          %v1246 = vrot.slane %v1245, 1
          %v1247 = vadd.f32 %v1245, %v1246
          %s1248 = vtos %v1247
          %v1249 = vrcp.pop 8.0
          %s1250 = vtos %v1249
          %s1251 = smul.f32 %s1248, %s1250
          %s1252 = scalar_lea.smem [#allocation3], 0
          %1253 = sst [smem:[%s1252]] %s1251
        $region64: #{rnnvae_forward.7} parent=55 // pred_fallthru
          _
        // Predicated region
        $region65: #{rnnvae_forward.7} parent=55 // pred_check
          %p1254 = pneg %p235
        $region66: #{rnnvae_forward.7} parent=55 // pred_check_branch
          %1256 = sbr.rel (%p1254) target = $region68
        $region67: #{rnnvae_forward.7} parent=55 // pred_region
          _
        $region68: #{rnnvae_forward.7} parent=55 // pred_fallthru
          _
        // Predicated region
        $region69: #{rnnvae_forward.7} parent=55 // pred_check
          %p1257 = pneg %p256
        $region70: #{rnnvae_forward.7} parent=55 // pred_check_branch
          %1259 = sbr.rel (%p1257) target = $region72
        $region71: #{rnnvae_forward.7} parent=55 // pred_region
          %s1261 = ssub.s32 16, 16
          %1262 = vsyncadd [#allocation4], %s1261
          %1265 = dma.smem_to_hbm [#allocation3], 16, %s10, [#allocation4]
        $region72: #{rnnvae_forward.7} parent=55 // pred_fallthru
          _
        // Predicated region
        $region73: #{rnnvae_forward.7} parent=55 // pred_check
          %p1266 = pneg %p235
        $region74: #{rnnvae_forward.7} parent=55 // pred_check_branch
          %1268 = sbr.rel (%p1266) target = $region76
        $region75: #{rnnvae_forward.7} parent=55 // pred_region
          _
        $region76: #{rnnvae_forward.7} parent=55 // pred_fallthru
          _
        // Predicated region
        $region77: #{rnnvae_forward.7} parent=55 // pred_check
          %p1269 = pneg %p256
        $region78: #{rnnvae_forward.7} parent=55 // pred_check_branch
          %1271 = sbr.rel (%p1269) target = $region80
        $region79: #{rnnvae_forward.7} parent=55 // pred_region
          %1272 = dma.done [#allocation4], 16
        $region80: #{rnnvae_forward.7} parent=55 // pred_fallthru
          _
        %1273 = sfence
      $region56: #{rnnvae_forward.7} parent=5 // pred_fallthru
        _
      %p1274 = scmp.le.s32.totalorder 2, %s18
      // Predicated region
      $region81: #{rnnvae_forward.7} parent=5 // pred_check
        %p1275 = pneg %p1274
      $region82: #{rnnvae_forward.7} parent=5 // pred_check_branch
        %1277 = sbr.rel (%p1275) target = $region84
      $region83: #{rnnvae_forward.7} parent=5 // pred_region
        %s1278 = ssub.s32 %s18, 2
      $region84: #{rnnvae_forward.7} parent=5 // pred_fallthru
        _
    $region6: #{rnnvae_forward.7} parent=1 // loop_footer
      %s22 = sadd.s32 1, %s18
    $region7: #{rnnvae_forward.7} parent=1 // loop_footer_branch
      %17 = sbr.rel target = $region3
    $region8: #{rnnvae_forward.7} parent=1 // loop_exit
      _
    %1279 = vsyncpa [#allocation4], 1
    %s1280 = scalar_lea.sflag [#allocation4], 1
    %1281 = vsyncpa %s1280, 1

</llo_original>
